<compile_context>
chip_gen: v5e
topology: v5e:2x2
jax: 0.10.0
libtpu: 0.0.40
codegen_flags: <defaults>
</compile_context>

<pallas_src>
import jax
import jax.numpy as jnp
from jax import lax
from jax.experimental import pallas as pl
from jax.experimental.pallas import tpu as pltpu

# ----------------------------- configuration -------------------------------
L = 2            # num_layers
B = 2            # batch
N = 8            # decoder / query sequence length
M = 8            # encoder (memory) sequence length
D = 32           # hidden_dim (embed_dim)
H = 4            # nhead
DH = D // H      # head_dim
F = 64           # dim_feedforward
EPS = 1e-5       # nn.LayerNorm default eps
SCALE = DH ** (-0.5)
BN = B * N
BM = B * M

# Row layout of the packed bias/LayerNorm slab, shape (L, 16, F).
# Rows 0..14 hold D-wide vectors in lanes [0:D]; row 15 holds the F-wide b1.
_BQ1, _BK1, _BV1, _BO1 = 0, 1, 2, 3
_BQ2, _BK2, _BV2, _BO2 = 4, 5, 6, 7
_B2 = 8
_G1, _BE1, _G2, _BE2, _G3, _BE3 = 9, 10, 11, 12, 13, 14
_B1 = 15
R_SLAB = 16


# ------------------------------- kernel ------------------------------------
def decoder_kernel(
    feats_ref,    # (L, B*N, D)   query features per layer
    enc_ref,      # (B*M, D)      encoder output (flattened)
    wattn_ref,    # (L, 2, D, 4D) per layer, per attention: [Wq | Wk | Wv | Wo]
    w1_ref,       # (L, D, F)     FFN fc1 weight
    w2_ref,       # (L, F, D)     FFN fc2 weight
    bias_ref,     # (L, 16, F)    packed biases + LayerNorm gamma/beta
    out_ref,      # (L, B*N, D)   per-layer outputs
):
    enc2d = enc_ref[...]          # (BM, D)
    x2d = enc2d                   # running decoder state ("dec_out"), layer 0 uses enc_out
    x_len = M                     # per-batch sequence length of x2d

    for l in range(L):            # static unroll over layers

        def bias(r, width=D):
            # (1, width) row of the packed bias slab
            return bias_ref[l, r:r + 1, :width]

        def layernorm(y, g_row, b_row):
            mu = jnp.mean(y, axis=-1, keepdims=True)
            var = jnp.mean((y - mu) ** 2, axis=-1, keepdims=True)
            return (y - mu) * lax.rsqrt(var + EPS) * bias(g_row) + bias(b_row)

        def mha(q2d, kv2d, kv_len, widx, brow):
            """Multi-head cross attention. q2d:(BN,D), kv2d:(B*kv_len,D)."""
            w = wattn_ref[l, widx]                       # (D, 4D)
            # Q projection + fused K|V projection (one (D,2D) matmul).
            q = jnp.dot(q2d, w[:, 0:D],
                        preferred_element_type=jnp.float32) + bias(brow + 0)
            kv = jnp.dot(kv2d, w[:, D:3 * D],
                         preferred_element_type=jnp.float32)
            k = kv[:, 0:D] + bias(brow + 1)
            v = kv[:, D:2 * D] + bias(brow + 2)

            # Free reshapes: leading-dim split only (N == sublane tile).
            q3 = (q * SCALE).reshape(B, N, D)
            k3 = k.reshape(B, kv_len, D)
            v3 = v.reshape(B, kv_len, D)

            acc = jnp.zeros((BN, D), jnp.float32)
            for h in range(H):                           # static unroll over heads
                sl = slice(h * DH, (h + 1) * DH)
                # scores for all batch elements of this head at once
                s = jnp.einsum('bnd,bmd->bnm', q3[:, :, sl], k3[:, :, sl],
                               preferred_element_type=jnp.float32)
                s = s - jnp.max(s, axis=-1, keepdims=True)
                p = jnp.exp(s)
                p = p * pl.reciprocal(jnp.sum(p, axis=-1, keepdims=True),
                                      approx=True)
                pv = jnp.einsum('bnm,bmd->bnd', p, v3[:, :, sl],
                                preferred_element_type=jnp.float32)
                # Fold the output projection into the head loop (no concat):
                acc = acc + jnp.dot(pv.reshape(BN, DH), w[sl, 3 * D:4 * D],
                                    preferred_element_type=jnp.float32)
            return acc + bias(brow + 3)                  # + out_proj bias

        feat2d = feats_ref[l]                            # (BN, D)

        # ---- block 1: cross-attention with enc_out + residual + norm1 ----
        a1 = mha(feat2d, enc2d, M, 0, _BQ1)
        h1 = layernorm(a1 + feat2d, _G1, _BE1)

        # ---- block 2: cross-attention with dec_out (prev x) + norm2 ------
        a2 = mha(h1, x2d, x_len, 1, _BQ2)
        h2 = layernorm(a2 + h1, _G2, _BE2)

        # ---- feed-forward (relu) + residual + norm3 -----------------------
        f = jnp.dot(h2, w1_ref[l], preferred_element_type=jnp.float32) + bias(_B1, F)
        f = jnp.maximum(f, 0.0)
        f = jnp.dot(f, w2_ref[l], preferred_element_type=jnp.float32) + bias(_B2)
        h3 = layernorm(f + h2, _G3, _BE3)

        out_ref[l] = h3
        x2d = h3
        x_len = N


# ------------------------------ wrapper -------------------------------------
def _full_spec(shape):
    nd = len(shape)
    return pl.BlockSpec(shape, lambda i, _nd=nd: (0,) * _nd)


@jax.jit
def transformer_decoder(feats, enc_out, packed):
    """feats: (L, B, N, D); enc_out: (B, M, D).  Returns stacked outputs (L, B, N, D)."""
    wattn, w1, w2, bias_slab = packed
    feats2d = feats.reshape(L, BN, D)
    enc2d = enc_out.reshape(BM, D)

    out = pl.pallas_call(
        decoder_kernel,
        out_shape=jax.ShapeDtypeStruct((L, BN, D), jnp.float32),
        grid_spec=pltpu.PrefetchScalarGridSpec(
            num_scalar_prefetch=0,
            grid=(1,),                       # single grid step: whole problem in VMEM
            in_specs=[
                _full_spec((L, BN, D)),
                _full_spec((BM, D)),
                _full_spec(wattn.shape),
                _full_spec(w1.shape),
                _full_spec(w2.shape),
                _full_spec(bias_slab.shape),
            ],
            out_specs=_full_spec((L, BN, D)),
        ),
        compiler_params=pltpu.CompilerParams(
            dimension_semantics=("arbitrary",)),
    )(feats2d, enc2d, wattn, w1, w2, bias_slab)
    return out.reshape(L, B, N, D)


# --------------------------- parameter handling ------------------------------
def init_layer(key):
    """Random parameters for one TransformerDecoderLayer (PyTorch layout -> pre-transposed)."""
    ks = jax.random.split(key, 26)

    def lin(kw, kb, din, dout):
        # PyTorch Linear stores W as (out, in); pre-transpose so kernel does x @ W.
        w = (jax.random.normal(kw, (dout, din), jnp.float32) * 0.1).T
        b = jax.random.normal(kb, (dout,), jnp.float32) * 0.05
        return w, b

    p = {}
    i = 0
    for nm in ('q1', 'k1', 'v1', 'o1', 'q2', 'k2', 'v2', 'o2'):
        p['w' + nm], p['b' + nm] = lin(ks[i], ks[i + 1], D, D)
        i += 2
    p['w1'], p['b1'] = lin(ks[i], ks[i + 1], D, F); i += 2
    p['w2'], p['b2'] = lin(ks[i], ks[i + 1], F, D); i += 2
    for nm in ('1', '2', '3'):   # LayerNorm affine (perturbed so slab indexing is actually tested)
        p['g' + nm] = 1.0 + 0.1 * jax.random.normal(ks[i], (D,), jnp.float32)
        p['be' + nm] = 0.05 * jax.random.normal(ks[i + 1], (D,), jnp.float32)
        i += 2
    return p


def pack_params(layers):
    wattn = jnp.stack([
        jnp.stack([
            jnp.concatenate([p['wq1'], p['wk1'], p['wv1'], p['wo1']], axis=1),
            jnp.concatenate([p['wq2'], p['wk2'], p['wv2'], p['wo2']], axis=1),
        ]) for p in layers])                                   # (L, 2, D, 4D)
    w1 = jnp.stack([p['w1'] for p in layers])                  # (L, D, F)
    w2 = jnp.stack([p['w2'] for p in layers])                  # (L, F, D)

    def padD(v):
        return jnp.pad(v, (0, F - D))

    slabs = []
    for p in layers:
        rows = [padD(p['bq1']), padD(p['bk1']), padD(p['bv1']), padD(p['bo1']),
                padD(p['bq2']), padD(p['bk2']), padD(p['bv2']), padD(p['bo2']),
                padD(p['b2']),
                padD(p['g1']), padD(p['be1']),
                padD(p['g2']), padD(p['be2']),
                padD(p['g3']), padD(p['be3']),
                p['b1']]
        slabs.append(jnp.stack(rows))                          # (16, F)
    bias_slab = jnp.stack(slabs)                               # (L, 16, F)
    return wattn, w1, w2, bias_slab


# --------------------------- pure-JAX reference ------------------------------
def reference(feats, enc_out, layers):
    def ln(y, g, b):
        mu = jnp.mean(y, -1, keepdims=True)
        var = jnp.mean((y - mu) ** 2, -1, keepdims=True)
        return (y - mu) / jnp.sqrt(var + EPS) * g + b

    def mha(q_in, kv_in, wq, bq, wk, bk, wv, bv, wo, bo):
        b_, nq, _ = q_in.shape
        nk = kv_in.shape[1]
        q = q_in @ wq + bq
        k = kv_in @ wk + bk
        v = kv_in @ wv + bv
        qh = q.reshape(b_, nq, H, DH).transpose(0, 2, 1, 3) * SCALE
        kh = k.reshape(b_, nk, H, DH).transpose(0, 2, 1, 3)
        vh = v.reshape(b_, nk, H, DH).transpose(0, 2, 1, 3)
        a = jax.nn.softmax(jnp.einsum('bhid,bhjd->bhij', qh, kh), axis=-1)
        o = jnp.einsum('bhij,bhjd->bhid', a, vh)
        o = o.transpose(0, 2, 1, 3).reshape(b_, nq, D)
        return o @ wo + bo

    outs = []
    x = enc_out
    for l, p in enumerate(layers):
        feat = feats[l]
        y = mha(feat, enc_out, p['wq1'], p['bq1'], p['wk1'], p['bk1'],
                p['wv1'], p['bv1'], p['wo1'], p['bo1'])
        y = ln(y + feat, p['g1'], p['be1'])
        z = mha(y, x, p['wq2'], p['bq2'], p['wk2'], p['bk2'],
                p['wv2'], p['bv2'], p['wo2'], p['bo2'])
        z = ln(z + y, p['g2'], p['be2'])
        f = jnp.maximum(z @ p['w1'] + p['b1'], 0.0) @ p['w2'] + p['b2']
        x = ln(f + z, p['g3'], p['be3'])
        outs.append(x)
    return jnp.stack(outs)


# --------------------------------- main --------------------------------------
if __name__ == "__main__":
    key = jax.random.PRNGKey(0)
    kfeat, kenc, *lkeys = jax.random.split(key, 2 + L)

    layers = [init_layer(k) for k in lkeys]
    packed = pack_params(layers)

    feats = jax.random.normal(kfeat, (L, B, N, D), jnp.float32)
    enc_out = jax.random.normal(kenc, (B, M, D), jnp.float32)

    out = transformer_decoder(feats, enc_out, packed)
    out = jax.block_until_ready(out)

    ref = reference(feats, enc_out, layers)
    # Tolerance loosened (vs 1e-4) for the approx=True softmax reciprocal.
    err = jnp.max(jnp.abs(out - ref))
    assert jnp.allclose(out, ref, atol=2e-2, rtol=2e-2), f"mismatch vs reference: {err}"

    print("KERNEL_OK")
</pallas_src>

<mosaic_0001>
module attributes {stable_mosaic.version = 11 : i64} {
  func.func @decoder_kernel(%arg0: i32, %arg1: memref<2x16x32xf32, #tpu.memory_space<vmem>>, %arg2: memref<16x32xf32, #tpu.memory_space<vmem>>, %arg3: memref<2x2x32x128xf32, #tpu.memory_space<vmem>>, %arg4: memref<2x32x64xf32, #tpu.memory_space<vmem>>, %arg5: memref<2x64x32xf32, #tpu.memory_space<vmem>>, %arg6: memref<2x16x64xf32, #tpu.memory_space<vmem>>, %arg7: memref<2x16x32xf32, #tpu.memory_space<vmem>>) attributes {dimension_semantics = [#tpu.dimension_semantics<arbitrary>], iteration_bounds = array<i64: 1>, scalar_prefetch = 0 : i64, scratch_operands = 0 : i64, tpu.core_type = #tpu.core_type<tc>, window_params = [{pipeline_mode = #tpu.pipeline_mode<synchronous>, transform_indices = @transform_0, window_bounds = array<i64: 2, 16, 32>}, {pipeline_mode = #tpu.pipeline_mode<synchronous>, transform_indices = @transform_1, window_bounds = array<i64: 16, 32>}, {pipeline_mode = #tpu.pipeline_mode<synchronous>, transform_indices = @transform_2, window_bounds = array<i64: 2, 2, 32, 128>}, {pipeline_mode = #tpu.pipeline_mode<synchronous>, transform_indices = @transform_3, window_bounds = array<i64: 2, 32, 64>}, {pipeline_mode = #tpu.pipeline_mode<synchronous>, transform_indices = @transform_4, window_bounds = array<i64: 2, 64, 32>}, {pipeline_mode = #tpu.pipeline_mode<synchronous>, transform_indices = @transform_5, window_bounds = array<i64: 2, 16, 64>}, {pipeline_mode = #tpu.pipeline_mode<synchronous>, transform_indices = @transform_6, window_bounds = array<i64: 2, 16, 32>}]} {
    %c0 = arith.constant 0 : index
    %c0_0 = arith.constant 0 : index
    %0 = vector.load %arg2[%c0, %c0_0] : memref<16x32xf32, #tpu.memory_space<vmem>>, vector<16x32xf32>
    %c0_1 = arith.constant 0 : index
    %c0_2 = arith.constant 0 : index
    %c0_3 = arith.constant 0 : index
    %1 = vector.load %arg1[%c0_1, %c0_2, %c0_3] : memref<2x16x32xf32, #tpu.memory_space<vmem>>, vector<1x16x32xf32>
    %2 = vector.shape_cast %1 : vector<1x16x32xf32> to vector<16x32xf32>
    %c0_4 = arith.constant 0 : index
    %c0_5 = arith.constant 0 : index
    %c0_6 = arith.constant 0 : index
    %c0_7 = arith.constant 0 : index
    %3 = vector.load %arg3[%c0_4, %c0_5, %c0_6, %c0_7] : memref<2x2x32x128xf32, #tpu.memory_space<vmem>>, vector<1x1x32x128xf32>
    %4 = vector.shape_cast %3 : vector<1x1x32x128xf32> to vector<32x128xf32>
    %5 = vector.extract_strided_slice %4 {offsets = [0, 0], sizes = [32, 32], strides = [1, 1]} : vector<32x128xf32> to vector<32x32xf32>
    %cst = arith.constant dense<0.000000e+00> : vector<16x32xf32>
    %6 = tpu.matmul %2, %5, %cst {dimension_numbers = #tpu.dot_dimension_numbers<[1], [0], [0], [1], [0, 0, 1, 1], [], []>} : vector<16x32xf32>, vector<32x32xf32>, vector<16x32xf32> -> vector<16x32xf32>
    %c0_8 = arith.constant 0 : index
    %c0_9 = arith.constant 0 : index
    %c0_10 = arith.constant 0 : index
    %7 = vector.load %arg6[%c0_8, %c0_9, %c0_10] : memref<2x16x64xf32, #tpu.memory_space<vmem>>, vector<1x1x32xf32>
    %8 = vector.shape_cast %7 : vector<1x1x32xf32> to vector<1x32xf32>
    %9 = vector.broadcast %8 : vector<1x32xf32> to vector<16x32xf32>
    %10 = arith.addf %6, %9 : vector<16x32xf32>
    %11 = vector.extract_strided_slice %4 {offsets = [0, 32], sizes = [32, 64], strides = [1, 1]} : vector<32x128xf32> to vector<32x64xf32>
    %cst_11 = arith.constant dense<0.000000e+00> : vector<16x64xf32>
    %12 = tpu.matmul %0, %11, %cst_11 {dimension_numbers = #tpu.dot_dimension_numbers<[1], [0], [0], [1], [0, 0, 1, 1], [], []>} : vector<16x32xf32>, vector<32x64xf32>, vector<16x64xf32> -> vector<16x64xf32>
    %13 = vector.extract_strided_slice %12 {offsets = [0, 0], sizes = [16, 32], strides = [1, 1]} : vector<16x64xf32> to vector<16x32xf32>
    %c0_12 = arith.constant 0 : index
    %c1 = arith.constant 1 : index
    %c0_13 = arith.constant 0 : index
    %14 = vector.load %arg6[%c0_12, %c1, %c0_13] : memref<2x16x64xf32, #tpu.memory_space<vmem>>, vector<1x1x32xf32>
    %15 = vector.shape_cast %14 : vector<1x1x32xf32> to vector<1x32xf32>
    %16 = vector.broadcast %15 : vector<1x32xf32> to vector<16x32xf32>
    %17 = arith.addf %13, %16 : vector<16x32xf32>
    %18 = vector.extract_strided_slice %12 {offsets = [0, 32], sizes = [16, 32], strides = [1, 1]} : vector<16x64xf32> to vector<16x32xf32>
    %c0_14 = arith.constant 0 : index
    %c2 = arith.constant 2 : index
    %c0_15 = arith.constant 0 : index
    %19 = vector.load %arg6[%c0_14, %c2, %c0_15] : memref<2x16x64xf32, #tpu.memory_space<vmem>>, vector<1x1x32xf32>
    %20 = vector.shape_cast %19 : vector<1x1x32xf32> to vector<1x32xf32>
    %21 = vector.broadcast %20 : vector<1x32xf32> to vector<16x32xf32>
    %22 = arith.addf %18, %21 : vector<16x32xf32>
    %cst_16 = arith.constant 0.353553385 : f32
    %23 = vector.broadcast %cst_16 : f32 to vector<16x32xf32>
    %24 = arith.mulf %10, %23 : vector<16x32xf32>
    %25 = vector.shape_cast %24 : vector<16x32xf32> to vector<2x8x32xf32>
    %26 = vector.shape_cast %17 : vector<16x32xf32> to vector<2x8x32xf32>
    %27 = vector.shape_cast %22 : vector<16x32xf32> to vector<2x8x32xf32>
    %cst_17 = arith.constant 0.000000e+00 : f32
    %28 = vector.broadcast %cst_17 : f32 to vector<16x32xf32>
    %29 = vector.extract_strided_slice %25 {offsets = [0, 0, 0], sizes = [2, 8, 8], strides = [1, 1, 1]} : vector<2x8x32xf32> to vector<2x8x8xf32>
    %30 = vector.extract_strided_slice %26 {offsets = [0, 0, 0], sizes = [2, 8, 8], strides = [1, 1, 1]} : vector<2x8x32xf32> to vector<2x8x8xf32>
    "tpu.trace_start"() <{level = 10 : i32, message = "bnd,bmd->bnm"}> : () -> ()
    %cst_18 = arith.constant dense<0.000000e+00> : vector<2x8x8xf32>
    %31 = tpu.matmul %29, %30, %cst_18 {dimension_numbers = #tpu.dot_dimension_numbers<[2], [2], [1], [1], [0, 0, 0, 1, 1, 1], [0], [0]>} : vector<2x8x8xf32>, vector<2x8x8xf32>, vector<2x8x8xf32> -> vector<2x8x8xf32>
    "tpu.trace_stop"() : () -> ()
    %cst_19 = arith.constant dense<0xFF800000> : vector<2x8xf32>
    %32 = vector.multi_reduction <maximumf>, %31, %cst_19 [2] : vector<2x8x8xf32> to vector<2x8xf32>
    %33 = vector.shape_cast %32 : vector<2x8xf32> to vector<2x8x1xf32>
    %34 = vector.broadcast %33 : vector<2x8x1xf32> to vector<2x8x8xf32>
    %35 = arith.subf %31, %34 : vector<2x8x8xf32>
    %36 = math.exp %35 : vector<2x8x8xf32>
    %cst_20 = arith.constant dense<0.000000e+00> : vector<2x8xf32>
    %37 = vector.multi_reduction <add>, %36, %cst_20 [2] : vector<2x8x8xf32> to vector<2x8xf32>
    %38 = vector.shape_cast %37 : vector<2x8xf32> to vector<2x8x1xf32>
    %39 = tpu.reciprocal %38 {approx = true} : vector<2x8x1xf32> -> vector<2x8x1xf32>
    %40 = vector.broadcast %39 : vector<2x8x1xf32> to vector<2x8x8xf32>
    %41 = arith.mulf %36, %40 : vector<2x8x8xf32>
    %42 = vector.extract_strided_slice %27 {offsets = [0, 0, 0], sizes = [2, 8, 8], strides = [1, 1, 1]} : vector<2x8x32xf32> to vector<2x8x8xf32>
    "tpu.trace_start"() <{level = 10 : i32, message = "bnm,bmd->bnd"}> : () -> ()
    %cst_21 = arith.constant dense<0.000000e+00> : vector<2x8x8xf32>
    %43 = tpu.matmul %41, %42, %cst_21 {dimension_numbers = #tpu.dot_dimension_numbers<[2], [1], [1], [2], [0, 0, 0, 1, 1, 2], [0], [0]>} : vector<2x8x8xf32>, vector<2x8x8xf32>, vector<2x8x8xf32> -> vector<2x8x8xf32>
    "tpu.trace_stop"() : () -> ()
    %44 = vector.shape_cast %43 : vector<2x8x8xf32> to vector<16x8xf32>
    %45 = vector.extract_strided_slice %4 {offsets = [0, 96], sizes = [8, 32], strides = [1, 1]} : vector<32x128xf32> to vector<8x32xf32>
    %cst_22 = arith.constant dense<0.000000e+00> : vector<16x32xf32>
    %46 = tpu.matmul %44, %45, %cst_22 {dimension_numbers = #tpu.dot_dimension_numbers<[1], [0], [0], [1], [0, 0, 1, 1], [], []>} : vector<16x8xf32>, vector<8x32xf32>, vector<16x32xf32> -> vector<16x32xf32>
    %47 = arith.addf %28, %46 : vector<16x32xf32>
    %48 = vector.extract_strided_slice %25 {offsets = [0, 0, 8], sizes = [2, 8, 8], strides = [1, 1, 1]} : vector<2x8x32xf32> to vector<2x8x8xf32>
    %49 = vector.extract_strided_slice %26 {offsets = [0, 0, 8], sizes = [2, 8, 8], strides = [1, 1, 1]} : vector<2x8x32xf32> to vector<2x8x8xf32>
    "tpu.trace_start"() <{level = 10 : i32, message = "bnd,bmd->bnm"}> : () -> ()
    %cst_23 = arith.constant dense<0.000000e+00> : vector<2x8x8xf32>
    %50 = tpu.matmul %48, %49, %cst_23 {dimension_numbers = #tpu.dot_dimension_numbers<[2], [2], [1], [1], [0, 0, 0, 1, 1, 1], [0], [0]>} : vector<2x8x8xf32>, vector<2x8x8xf32>, vector<2x8x8xf32> -> vector<2x8x8xf32>
    "tpu.trace_stop"() : () -> ()
    %cst_24 = arith.constant dense<0xFF800000> : vector<2x8xf32>
    %51 = vector.multi_reduction <maximumf>, %50, %cst_24 [2] : vector<2x8x8xf32> to vector<2x8xf32>
    %52 = vector.shape_cast %51 : vector<2x8xf32> to vector<2x8x1xf32>
    %53 = vector.broadcast %52 : vector<2x8x1xf32> to vector<2x8x8xf32>
    %54 = arith.subf %50, %53 : vector<2x8x8xf32>
    %55 = math.exp %54 : vector<2x8x8xf32>
    %cst_25 = arith.constant dense<0.000000e+00> : vector<2x8xf32>
    %56 = vector.multi_reduction <add>, %55, %cst_25 [2] : vector<2x8x8xf32> to vector<2x8xf32>
    %57 = vector.shape_cast %56 : vector<2x8xf32> to vector<2x8x1xf32>
    %58 = tpu.reciprocal %57 {approx = true} : vector<2x8x1xf32> -> vector<2x8x1xf32>
    %59 = vector.broadcast %58 : vector<2x8x1xf32> to vector<2x8x8xf32>
    %60 = arith.mulf %55, %59 : vector<2x8x8xf32>
    %61 = vector.extract_strided_slice %27 {offsets = [0, 0, 8], sizes = [2, 8, 8], strides = [1, 1, 1]} : vector<2x8x32xf32> to vector<2x8x8xf32>
    "tpu.trace_start"() <{level = 10 : i32, message = "bnm,bmd->bnd"}> : () -> ()
    %cst_26 = arith.constant dense<0.000000e+00> : vector<2x8x8xf32>
    %62 = tpu.matmul %60, %61, %cst_26 {dimension_numbers = #tpu.dot_dimension_numbers<[2], [1], [1], [2], [0, 0, 0, 1, 1, 2], [0], [0]>} : vector<2x8x8xf32>, vector<2x8x8xf32>, vector<2x8x8xf32> -> vector<2x8x8xf32>
    "tpu.trace_stop"() : () -> ()
    %63 = vector.shape_cast %62 : vector<2x8x8xf32> to vector<16x8xf32>
    %64 = vector.extract_strided_slice %4 {offsets = [8, 96], sizes = [8, 32], strides = [1, 1]} : vector<32x128xf32> to vector<8x32xf32>
    %cst_27 = arith.constant dense<0.000000e+00> : vector<16x32xf32>
    %65 = tpu.matmul %63, %64, %cst_27 {dimension_numbers = #tpu.dot_dimension_numbers<[1], [0], [0], [1], [0, 0, 1, 1], [], []>} : vector<16x8xf32>, vector<8x32xf32>, vector<16x32xf32> -> vector<16x32xf32>
    %66 = arith.addf %47, %65 : vector<16x32xf32>
    %67 = vector.extract_strided_slice %25 {offsets = [0, 0, 16], sizes = [2, 8, 8], strides = [1, 1, 1]} : vector<2x8x32xf32> to vector<2x8x8xf32>
    %68 = vector.extract_strided_slice %26 {offsets = [0, 0, 16], sizes = [2, 8, 8], strides = [1, 1, 1]} : vector<2x8x32xf32> to vector<2x8x8xf32>
    "tpu.trace_start"() <{level = 10 : i32, message = "bnd,bmd->bnm"}> : () -> ()
    %cst_28 = arith.constant dense<0.000000e+00> : vector<2x8x8xf32>
    %69 = tpu.matmul %67, %68, %cst_28 {dimension_numbers = #tpu.dot_dimension_numbers<[2], [2], [1], [1], [0, 0, 0, 1, 1, 1], [0], [0]>} : vector<2x8x8xf32>, vector<2x8x8xf32>, vector<2x8x8xf32> -> vector<2x8x8xf32>
    "tpu.trace_stop"() : () -> ()
    %cst_29 = arith.constant dense<0xFF800000> : vector<2x8xf32>
    %70 = vector.multi_reduction <maximumf>, %69, %cst_29 [2] : vector<2x8x8xf32> to vector<2x8xf32>
    %71 = vector.shape_cast %70 : vector<2x8xf32> to vector<2x8x1xf32>
    %72 = vector.broadcast %71 : vector<2x8x1xf32> to vector<2x8x8xf32>
    %73 = arith.subf %69, %72 : vector<2x8x8xf32>
    %74 = math.exp %73 : vector<2x8x8xf32>
    %cst_30 = arith.constant dense<0.000000e+00> : vector<2x8xf32>
    %75 = vector.multi_reduction <add>, %74, %cst_30 [2] : vector<2x8x8xf32> to vector<2x8xf32>
    %76 = vector.shape_cast %75 : vector<2x8xf32> to vector<2x8x1xf32>
    %77 = tpu.reciprocal %76 {approx = true} : vector<2x8x1xf32> -> vector<2x8x1xf32>
    %78 = vector.broadcast %77 : vector<2x8x1xf32> to vector<2x8x8xf32>
    %79 = arith.mulf %74, %78 : vector<2x8x8xf32>
    %80 = vector.extract_strided_slice %27 {offsets = [0, 0, 16], sizes = [2, 8, 8], strides = [1, 1, 1]} : vector<2x8x32xf32> to vector<2x8x8xf32>
    "tpu.trace_start"() <{level = 10 : i32, message = "bnm,bmd->bnd"}> : () -> ()
    %cst_31 = arith.constant dense<0.000000e+00> : vector<2x8x8xf32>
    %81 = tpu.matmul %79, %80, %cst_31 {dimension_numbers = #tpu.dot_dimension_numbers<[2], [1], [1], [2], [0, 0, 0, 1, 1, 2], [0], [0]>} : vector<2x8x8xf32>, vector<2x8x8xf32>, vector<2x8x8xf32> -> vector<2x8x8xf32>
    "tpu.trace_stop"() : () -> ()
    %82 = vector.shape_cast %81 : vector<2x8x8xf32> to vector<16x8xf32>
    %83 = vector.extract_strided_slice %4 {offsets = [16, 96], sizes = [8, 32], strides = [1, 1]} : vector<32x128xf32> to vector<8x32xf32>
    %cst_32 = arith.constant dense<0.000000e+00> : vector<16x32xf32>
    %84 = tpu.matmul %82, %83, %cst_32 {dimension_numbers = #tpu.dot_dimension_numbers<[1], [0], [0], [1], [0, 0, 1, 1], [], []>} : vector<16x8xf32>, vector<8x32xf32>, vector<16x32xf32> -> vector<16x32xf32>
    %85 = arith.addf %66, %84 : vector<16x32xf32>
    %86 = vector.extract_strided_slice %25 {offsets = [0, 0, 24], sizes = [2, 8, 8], strides = [1, 1, 1]} : vector<2x8x32xf32> to vector<2x8x8xf32>
    %87 = vector.extract_strided_slice %26 {offsets = [0, 0, 24], sizes = [2, 8, 8], strides = [1, 1, 1]} : vector<2x8x32xf32> to vector<2x8x8xf32>
    "tpu.trace_start"() <{level = 10 : i32, message = "bnd,bmd->bnm"}> : () -> ()
    %cst_33 = arith.constant dense<0.000000e+00> : vector<2x8x8xf32>
    %88 = tpu.matmul %86, %87, %cst_33 {dimension_numbers = #tpu.dot_dimension_numbers<[2], [2], [1], [1], [0, 0, 0, 1, 1, 1], [0], [0]>} : vector<2x8x8xf32>, vector<2x8x8xf32>, vector<2x8x8xf32> -> vector<2x8x8xf32>
    "tpu.trace_stop"() : () -> ()
    %cst_34 = arith.constant dense<0xFF800000> : vector<2x8xf32>
    %89 = vector.multi_reduction <maximumf>, %88, %cst_34 [2] : vector<2x8x8xf32> to vector<2x8xf32>
    %90 = vector.shape_cast %89 : vector<2x8xf32> to vector<2x8x1xf32>
    %91 = vector.broadcast %90 : vector<2x8x1xf32> to vector<2x8x8xf32>
    %92 = arith.subf %88, %91 : vector<2x8x8xf32>
    %93 = math.exp %92 : vector<2x8x8xf32>
    %cst_35 = arith.constant dense<0.000000e+00> : vector<2x8xf32>
    %94 = vector.multi_reduction <add>, %93, %cst_35 [2] : vector<2x8x8xf32> to vector<2x8xf32>
    %95 = vector.shape_cast %94 : vector<2x8xf32> to vector<2x8x1xf32>
    %96 = tpu.reciprocal %95 {approx = true} : vector<2x8x1xf32> -> vector<2x8x1xf32>
    %97 = vector.broadcast %96 : vector<2x8x1xf32> to vector<2x8x8xf32>
    %98 = arith.mulf %93, %97 : vector<2x8x8xf32>
    %99 = vector.extract_strided_slice %27 {offsets = [0, 0, 24], sizes = [2, 8, 8], strides = [1, 1, 1]} : vector<2x8x32xf32> to vector<2x8x8xf32>
    "tpu.trace_start"() <{level = 10 : i32, message = "bnm,bmd->bnd"}> : () -> ()
    %cst_36 = arith.constant dense<0.000000e+00> : vector<2x8x8xf32>
    %100 = tpu.matmul %98, %99, %cst_36 {dimension_numbers = #tpu.dot_dimension_numbers<[2], [1], [1], [2], [0, 0, 0, 1, 1, 2], [0], [0]>} : vector<2x8x8xf32>, vector<2x8x8xf32>, vector<2x8x8xf32> -> vector<2x8x8xf32>
    "tpu.trace_stop"() : () -> ()
    %101 = vector.shape_cast %100 : vector<2x8x8xf32> to vector<16x8xf32>
    %102 = vector.extract_strided_slice %4 {offsets = [24, 96], sizes = [8, 32], strides = [1, 1]} : vector<32x128xf32> to vector<8x32xf32>
    %cst_37 = arith.constant dense<0.000000e+00> : vector<16x32xf32>
    %103 = tpu.matmul %101, %102, %cst_37 {dimension_numbers = #tpu.dot_dimension_numbers<[1], [0], [0], [1], [0, 0, 1, 1], [], []>} : vector<16x8xf32>, vector<8x32xf32>, vector<16x32xf32> -> vector<16x32xf32>
    %104 = arith.addf %85, %103 : vector<16x32xf32>
    %c0_38 = arith.constant 0 : index
    %c3 = arith.constant 3 : index
    %c0_39 = arith.constant 0 : index
    %105 = vector.load %arg6[%c0_38, %c3, %c0_39] : memref<2x16x64xf32, #tpu.memory_space<vmem>>, vector<1x1x32xf32>
    %106 = vector.shape_cast %105 : vector<1x1x32xf32> to vector<1x32xf32>
    %107 = vector.broadcast %106 : vector<1x32xf32> to vector<16x32xf32>
    %108 = arith.addf %104, %107 : vector<16x32xf32>
    %109 = arith.addf %108, %2 : vector<16x32xf32>
    %cst_40 = arith.constant dense<0.000000e+00> : vector<16xf32>
    %110 = vector.multi_reduction <add>, %109, %cst_40 [1] : vector<16x32xf32> to vector<16xf32>
    %111 = vector.shape_cast %110 : vector<16xf32> to vector<16x1xf32>
    %cst_41 = arith.constant 3.200000e+01 : f32
    %112 = vector.broadcast %cst_41 : f32 to vector<16x1xf32>
    %113 = arith.divf %111, %112 : vector<16x1xf32>
    %114 = vector.broadcast %113 : vector<16x1xf32> to vector<16x32xf32>
    %115 = arith.subf %109, %114 : vector<16x32xf32>
    %116 = arith.mulf %115, %115 : vector<16x32xf32>
    %cst_42 = arith.constant dense<0.000000e+00> : vector<16xf32>
    %117 = vector.multi_reduction <add>, %116, %cst_42 [1] : vector<16x32xf32> to vector<16xf32>
    %118 = vector.shape_cast %117 : vector<16xf32> to vector<16x1xf32>
    %cst_43 = arith.constant 3.200000e+01 : f32
    %119 = vector.broadcast %cst_43 : f32 to vector<16x1xf32>
    %120 = arith.divf %118, %119 : vector<16x1xf32>
    %121 = vector.broadcast %113 : vector<16x1xf32> to vector<16x32xf32>
    %122 = arith.subf %109, %121 : vector<16x32xf32>
    %cst_44 = arith.constant 9.99999974E-6 : f32
    %123 = vector.broadcast %cst_44 : f32 to vector<16x1xf32>
    %124 = arith.addf %120, %123 : vector<16x1xf32>
    %125 = math.rsqrt %124 : vector<16x1xf32>
    %126 = vector.broadcast %125 : vector<16x1xf32> to vector<16x32xf32>
    %127 = arith.mulf %122, %126 : vector<16x32xf32>
    %c0_45 = arith.constant 0 : index
    %c9 = arith.constant 9 : index
    %c0_46 = arith.constant 0 : index
    %128 = vector.load %arg6[%c0_45, %c9, %c0_46] : memref<2x16x64xf32, #tpu.memory_space<vmem>>, vector<1x1x32xf32>
    %129 = vector.shape_cast %128 : vector<1x1x32xf32> to vector<1x32xf32>
    %130 = vector.broadcast %129 : vector<1x32xf32> to vector<16x32xf32>
    %131 = arith.mulf %127, %130 : vector<16x32xf32>
    %c0_47 = arith.constant 0 : index
    %c10 = arith.constant 10 : index
    %c0_48 = arith.constant 0 : index
    %132 = vector.load %arg6[%c0_47, %c10, %c0_48] : memref<2x16x64xf32, #tpu.memory_space<vmem>>, vector<1x1x32xf32>
    %133 = vector.shape_cast %132 : vector<1x1x32xf32> to vector<1x32xf32>
    %134 = vector.broadcast %133 : vector<1x32xf32> to vector<16x32xf32>
    %135 = arith.addf %131, %134 : vector<16x32xf32>
    %c0_49 = arith.constant 0 : index
    %c1_50 = arith.constant 1 : index
    %c0_51 = arith.constant 0 : index
    %c0_52 = arith.constant 0 : index
    %136 = vector.load %arg3[%c0_49, %c1_50, %c0_51, %c0_52] : memref<2x2x32x128xf32, #tpu.memory_space<vmem>>, vector<1x1x32x128xf32>
    %137 = vector.shape_cast %136 : vector<1x1x32x128xf32> to vector<32x128xf32>
    %138 = vector.extract_strided_slice %137 {offsets = [0, 0], sizes = [32, 32], strides = [1, 1]} : vector<32x128xf32> to vector<32x32xf32>
    %cst_53 = arith.constant dense<0.000000e+00> : vector<16x32xf32>
    %139 = tpu.matmul %135, %138, %cst_53 {dimension_numbers = #tpu.dot_dimension_numbers<[1], [0], [0], [1], [0, 0, 1, 1], [], []>} : vector<16x32xf32>, vector<32x32xf32>, vector<16x32xf32> -> vector<16x32xf32>
    %c0_54 = arith.constant 0 : index
    %c4 = arith.constant 4 : index
    %c0_55 = arith.constant 0 : index
    %140 = vector.load %arg6[%c0_54, %c4, %c0_55] : memref<2x16x64xf32, #tpu.memory_space<vmem>>, vector<1x1x32xf32>
    %141 = vector.shape_cast %140 : vector<1x1x32xf32> to vector<1x32xf32>
    %142 = vector.broadcast %141 : vector<1x32xf32> to vector<16x32xf32>
    %143 = arith.addf %139, %142 : vector<16x32xf32>
    %144 = vector.extract_strided_slice %137 {offsets = [0, 32], sizes = [32, 64], strides = [1, 1]} : vector<32x128xf32> to vector<32x64xf32>
    %cst_56 = arith.constant dense<0.000000e+00> : vector<16x64xf32>
    %145 = tpu.matmul %0, %144, %cst_56 {dimension_numbers = #tpu.dot_dimension_numbers<[1], [0], [0], [1], [0, 0, 1, 1], [], []>} : vector<16x32xf32>, vector<32x64xf32>, vector<16x64xf32> -> vector<16x64xf32>
    %146 = vector.extract_strided_slice %145 {offsets = [0, 0], sizes = [16, 32], strides = [1, 1]} : vector<16x64xf32> to vector<16x32xf32>
    %c0_57 = arith.constant 0 : index
    %c5 = arith.constant 5 : index
    %c0_58 = arith.constant 0 : index
    %147 = vector.load %arg6[%c0_57, %c5, %c0_58] : memref<2x16x64xf32, #tpu.memory_space<vmem>>, vector<1x1x32xf32>
    %148 = vector.shape_cast %147 : vector<1x1x32xf32> to vector<1x32xf32>
    %149 = vector.broadcast %148 : vector<1x32xf32> to vector<16x32xf32>
    %150 = arith.addf %146, %149 : vector<16x32xf32>
    %151 = vector.extract_strided_slice %145 {offsets = [0, 32], sizes = [16, 32], strides = [1, 1]} : vector<16x64xf32> to vector<16x32xf32>
    %c0_59 = arith.constant 0 : index
    %c6 = arith.constant 6 : index
    %c0_60 = arith.constant 0 : index
    %152 = vector.load %arg6[%c0_59, %c6, %c0_60] : memref<2x16x64xf32, #tpu.memory_space<vmem>>, vector<1x1x32xf32>
    %153 = vector.shape_cast %152 : vector<1x1x32xf32> to vector<1x32xf32>
    %154 = vector.broadcast %153 : vector<1x32xf32> to vector<16x32xf32>
    %155 = arith.addf %151, %154 : vector<16x32xf32>
    %cst_61 = arith.constant 0.353553385 : f32
    %156 = vector.broadcast %cst_61 : f32 to vector<16x32xf32>
    %157 = arith.mulf %143, %156 : vector<16x32xf32>
    %158 = vector.shape_cast %157 : vector<16x32xf32> to vector<2x8x32xf32>
    %159 = vector.shape_cast %150 : vector<16x32xf32> to vector<2x8x32xf32>
    %160 = vector.shape_cast %155 : vector<16x32xf32> to vector<2x8x32xf32>
    %cst_62 = arith.constant 0.000000e+00 : f32
    %161 = vector.broadcast %cst_62 : f32 to vector<16x32xf32>
    %162 = vector.extract_strided_slice %158 {offsets = [0, 0, 0], sizes = [2, 8, 8], strides = [1, 1, 1]} : vector<2x8x32xf32> to vector<2x8x8xf32>
    %163 = vector.extract_strided_slice %159 {offsets = [0, 0, 0], sizes = [2, 8, 8], strides = [1, 1, 1]} : vector<2x8x32xf32> to vector<2x8x8xf32>
    "tpu.trace_start"() <{level = 10 : i32, message = "bnd,bmd->bnm"}> : () -> ()
    %cst_63 = arith.constant dense<0.000000e+00> : vector<2x8x8xf32>
    %164 = tpu.matmul %162, %163, %cst_63 {dimension_numbers = #tpu.dot_dimension_numbers<[2], [2], [1], [1], [0, 0, 0, 1, 1, 1], [0], [0]>} : vector<2x8x8xf32>, vector<2x8x8xf32>, vector<2x8x8xf32> -> vector<2x8x8xf32>
    "tpu.trace_stop"() : () -> ()
    %cst_64 = arith.constant dense<0xFF800000> : vector<2x8xf32>
    %165 = vector.multi_reduction <maximumf>, %164, %cst_64 [2] : vector<2x8x8xf32> to vector<2x8xf32>
    %166 = vector.shape_cast %165 : vector<2x8xf32> to vector<2x8x1xf32>
    %167 = vector.broadcast %166 : vector<2x8x1xf32> to vector<2x8x8xf32>
    %168 = arith.subf %164, %167 : vector<2x8x8xf32>
    %169 = math.exp %168 : vector<2x8x8xf32>
    %cst_65 = arith.constant dense<0.000000e+00> : vector<2x8xf32>
    %170 = vector.multi_reduction <add>, %169, %cst_65 [2] : vector<2x8x8xf32> to vector<2x8xf32>
    %171 = vector.shape_cast %170 : vector<2x8xf32> to vector<2x8x1xf32>
    %172 = tpu.reciprocal %171 {approx = true} : vector<2x8x1xf32> -> vector<2x8x1xf32>
    %173 = vector.broadcast %172 : vector<2x8x1xf32> to vector<2x8x8xf32>
    %174 = arith.mulf %169, %173 : vector<2x8x8xf32>
    %175 = vector.extract_strided_slice %160 {offsets = [0, 0, 0], sizes = [2, 8, 8], strides = [1, 1, 1]} : vector<2x8x32xf32> to vector<2x8x8xf32>
    "tpu.trace_start"() <{level = 10 : i32, message = "bnm,bmd->bnd"}> : () -> ()
    %cst_66 = arith.constant dense<0.000000e+00> : vector<2x8x8xf32>
    %176 = tpu.matmul %174, %175, %cst_66 {dimension_numbers = #tpu.dot_dimension_numbers<[2], [1], [1], [2], [0, 0, 0, 1, 1, 2], [0], [0]>} : vector<2x8x8xf32>, vector<2x8x8xf32>, vector<2x8x8xf32> -> vector<2x8x8xf32>
    "tpu.trace_stop"() : () -> ()
    %177 = vector.shape_cast %176 : vector<2x8x8xf32> to vector<16x8xf32>
    %178 = vector.extract_strided_slice %137 {offsets = [0, 96], sizes = [8, 32], strides = [1, 1]} : vector<32x128xf32> to vector<8x32xf32>
    %cst_67 = arith.constant dense<0.000000e+00> : vector<16x32xf32>
    %179 = tpu.matmul %177, %178, %cst_67 {dimension_numbers = #tpu.dot_dimension_numbers<[1], [0], [0], [1], [0, 0, 1, 1], [], []>} : vector<16x8xf32>, vector<8x32xf32>, vector<16x32xf32> -> vector<16x32xf32>
    %180 = arith.addf %161, %179 : vector<16x32xf32>
    %181 = vector.extract_strided_slice %158 {offsets = [0, 0, 8], sizes = [2, 8, 8], strides = [1, 1, 1]} : vector<2x8x32xf32> to vector<2x8x8xf32>
    %182 = vector.extract_strided_slice %159 {offsets = [0, 0, 8], sizes = [2, 8, 8], strides = [1, 1, 1]} : vector<2x8x32xf32> to vector<2x8x8xf32>
    "tpu.trace_start"() <{level = 10 : i32, message = "bnd,bmd->bnm"}> : () -> ()
    %cst_68 = arith.constant dense<0.000000e+00> : vector<2x8x8xf32>
    %183 = tpu.matmul %181, %182, %cst_68 {dimension_numbers = #tpu.dot_dimension_numbers<[2], [2], [1], [1], [0, 0, 0, 1, 1, 1], [0], [0]>} : vector<2x8x8xf32>, vector<2x8x8xf32>, vector<2x8x8xf32> -> vector<2x8x8xf32>
    "tpu.trace_stop"() : () -> ()
    %cst_69 = arith.constant dense<0xFF800000> : vector<2x8xf32>
    %184 = vector.multi_reduction <maximumf>, %183, %cst_69 [2] : vector<2x8x8xf32> to vector<2x8xf32>
    %185 = vector.shape_cast %184 : vector<2x8xf32> to vector<2x8x1xf32>
    %186 = vector.broadcast %185 : vector<2x8x1xf32> to vector<2x8x8xf32>
    %187 = arith.subf %183, %186 : vector<2x8x8xf32>
    %188 = math.exp %187 : vector<2x8x8xf32>
    %cst_70 = arith.constant dense<0.000000e+00> : vector<2x8xf32>
    %189 = vector.multi_reduction <add>, %188, %cst_70 [2] : vector<2x8x8xf32> to vector<2x8xf32>
    %190 = vector.shape_cast %189 : vector<2x8xf32> to vector<2x8x1xf32>
    %191 = tpu.reciprocal %190 {approx = true} : vector<2x8x1xf32> -> vector<2x8x1xf32>
    %192 = vector.broadcast %191 : vector<2x8x1xf32> to vector<2x8x8xf32>
    %193 = arith.mulf %188, %192 : vector<2x8x8xf32>
    %194 = vector.extract_strided_slice %160 {offsets = [0, 0, 8], sizes = [2, 8, 8], strides = [1, 1, 1]} : vector<2x8x32xf32> to vector<2x8x8xf32>
    "tpu.trace_start"() <{level = 10 : i32, message = "bnm,bmd->bnd"}> : () -> ()
    %cst_71 = arith.constant dense<0.000000e+00> : vector<2x8x8xf32>
    %195 = tpu.matmul %193, %194, %cst_71 {dimension_numbers = #tpu.dot_dimension_numbers<[2], [1], [1], [2], [0, 0, 0, 1, 1, 2], [0], [0]>} : vector<2x8x8xf32>, vector<2x8x8xf32>, vector<2x8x8xf32> -> vector<2x8x8xf32>
    "tpu.trace_stop"() : () -> ()
    %196 = vector.shape_cast %195 : vector<2x8x8xf32> to vector<16x8xf32>
    %197 = vector.extract_strided_slice %137 {offsets = [8, 96], sizes = [8, 32], strides = [1, 1]} : vector<32x128xf32> to vector<8x32xf32>
    %cst_72 = arith.constant dense<0.000000e+00> : vector<16x32xf32>
    %198 = tpu.matmul %196, %197, %cst_72 {dimension_numbers = #tpu.dot_dimension_numbers<[1], [0], [0], [1], [0, 0, 1, 1], [], []>} : vector<16x8xf32>, vector<8x32xf32>, vector<16x32xf32> -> vector<16x32xf32>
    %199 = arith.addf %180, %198 : vector<16x32xf32>
    %200 = vector.extract_strided_slice %158 {offsets = [0, 0, 16], sizes = [2, 8, 8], strides = [1, 1, 1]} : vector<2x8x32xf32> to vector<2x8x8xf32>
    %201 = vector.extract_strided_slice %159 {offsets = [0, 0, 16], sizes = [2, 8, 8], strides = [1, 1, 1]} : vector<2x8x32xf32> to vector<2x8x8xf32>
    "tpu.trace_start"() <{level = 10 : i32, message = "bnd,bmd->bnm"}> : () -> ()
    %cst_73 = arith.constant dense<0.000000e+00> : vector<2x8x8xf32>
    %202 = tpu.matmul %200, %201, %cst_73 {dimension_numbers = #tpu.dot_dimension_numbers<[2], [2], [1], [1], [0, 0, 0, 1, 1, 1], [0], [0]>} : vector<2x8x8xf32>, vector<2x8x8xf32>, vector<2x8x8xf32> -> vector<2x8x8xf32>
    "tpu.trace_stop"() : () -> ()
    %cst_74 = arith.constant dense<0xFF800000> : vector<2x8xf32>
    %203 = vector.multi_reduction <maximumf>, %202, %cst_74 [2] : vector<2x8x8xf32> to vector<2x8xf32>
    %204 = vector.shape_cast %203 : vector<2x8xf32> to vector<2x8x1xf32>
    %205 = vector.broadcast %204 : vector<2x8x1xf32> to vector<2x8x8xf32>
    %206 = arith.subf %202, %205 : vector<2x8x8xf32>
    %207 = math.exp %206 : vector<2x8x8xf32>
    %cst_75 = arith.constant dense<0.000000e+00> : vector<2x8xf32>
    %208 = vector.multi_reduction <add>, %207, %cst_75 [2] : vector<2x8x8xf32> to vector<2x8xf32>
    %209 = vector.shape_cast %208 : vector<2x8xf32> to vector<2x8x1xf32>
    %210 = tpu.reciprocal %209 {approx = true} : vector<2x8x1xf32> -> vector<2x8x1xf32>
    %211 = vector.broadcast %210 : vector<2x8x1xf32> to vector<2x8x8xf32>
    %212 = arith.mulf %207, %211 : vector<2x8x8xf32>
    %213 = vector.extract_strided_slice %160 {offsets = [0, 0, 16], sizes = [2, 8, 8], strides = [1, 1, 1]} : vector<2x8x32xf32> to vector<2x8x8xf32>
    "tpu.trace_start"() <{level = 10 : i32, message = "bnm,bmd->bnd"}> : () -> ()
    %cst_76 = arith.constant dense<0.000000e+00> : vector<2x8x8xf32>
    %214 = tpu.matmul %212, %213, %cst_76 {dimension_numbers = #tpu.dot_dimension_numbers<[2], [1], [1], [2], [0, 0, 0, 1, 1, 2], [0], [0]>} : vector<2x8x8xf32>, vector<2x8x8xf32>, vector<2x8x8xf32> -> vector<2x8x8xf32>
    "tpu.trace_stop"() : () -> ()
    %215 = vector.shape_cast %214 : vector<2x8x8xf32> to vector<16x8xf32>
    %216 = vector.extract_strided_slice %137 {offsets = [16, 96], sizes = [8, 32], strides = [1, 1]} : vector<32x128xf32> to vector<8x32xf32>
    %cst_77 = arith.constant dense<0.000000e+00> : vector<16x32xf32>
    %217 = tpu.matmul %215, %216, %cst_77 {dimension_numbers = #tpu.dot_dimension_numbers<[1], [0], [0], [1], [0, 0, 1, 1], [], []>} : vector<16x8xf32>, vector<8x32xf32>, vector<16x32xf32> -> vector<16x32xf32>
    %218 = arith.addf %199, %217 : vector<16x32xf32>
    %219 = vector.extract_strided_slice %158 {offsets = [0, 0, 24], sizes = [2, 8, 8], strides = [1, 1, 1]} : vector<2x8x32xf32> to vector<2x8x8xf32>
    %220 = vector.extract_strided_slice %159 {offsets = [0, 0, 24], sizes = [2, 8, 8], strides = [1, 1, 1]} : vector<2x8x32xf32> to vector<2x8x8xf32>
    "tpu.trace_start"() <{level = 10 : i32, message = "bnd,bmd->bnm"}> : () -> ()
    %cst_78 = arith.constant dense<0.000000e+00> : vector<2x8x8xf32>
    %221 = tpu.matmul %219, %220, %cst_78 {dimension_numbers = #tpu.dot_dimension_numbers<[2], [2], [1], [1], [0, 0, 0, 1, 1, 1], [0], [0]>} : vector<2x8x8xf32>, vector<2x8x8xf32>, vector<2x8x8xf32> -> vector<2x8x8xf32>
    "tpu.trace_stop"() : () -> ()
    %cst_79 = arith.constant dense<0xFF800000> : vector<2x8xf32>
    %222 = vector.multi_reduction <maximumf>, %221, %cst_79 [2] : vector<2x8x8xf32> to vector<2x8xf32>
    %223 = vector.shape_cast %222 : vector<2x8xf32> to vector<2x8x1xf32>
    %224 = vector.broadcast %223 : vector<2x8x1xf32> to vector<2x8x8xf32>
    %225 = arith.subf %221, %224 : vector<2x8x8xf32>
    %226 = math.exp %225 : vector<2x8x8xf32>
    %cst_80 = arith.constant dense<0.000000e+00> : vector<2x8xf32>
    %227 = vector.multi_reduction <add>, %226, %cst_80 [2] : vector<2x8x8xf32> to vector<2x8xf32>
    %228 = vector.shape_cast %227 : vector<2x8xf32> to vector<2x8x1xf32>
    %229 = tpu.reciprocal %228 {approx = true} : vector<2x8x1xf32> -> vector<2x8x1xf32>
    %230 = vector.broadcast %229 : vector<2x8x1xf32> to vector<2x8x8xf32>
    %231 = arith.mulf %226, %230 : vector<2x8x8xf32>
    %232 = vector.extract_strided_slice %160 {offsets = [0, 0, 24], sizes = [2, 8, 8], strides = [1, 1, 1]} : vector<2x8x32xf32> to vector<2x8x8xf32>
    "tpu.trace_start"() <{level = 10 : i32, message = "bnm,bmd->bnd"}> : () -> ()
    %cst_81 = arith.constant dense<0.000000e+00> : vector<2x8x8xf32>
    %233 = tpu.matmul %231, %232, %cst_81 {dimension_numbers = #tpu.dot_dimension_numbers<[2], [1], [1], [2], [0, 0, 0, 1, 1, 2], [0], [0]>} : vector<2x8x8xf32>, vector<2x8x8xf32>, vector<2x8x8xf32> -> vector<2x8x8xf32>
    "tpu.trace_stop"() : () -> ()
    %234 = vector.shape_cast %233 : vector<2x8x8xf32> to vector<16x8xf32>
    %235 = vector.extract_strided_slice %137 {offsets = [24, 96], sizes = [8, 32], strides = [1, 1]} : vector<32x128xf32> to vector<8x32xf32>
    %cst_82 = arith.constant dense<0.000000e+00> : vector<16x32xf32>
    %236 = tpu.matmul %234, %235, %cst_82 {dimension_numbers = #tpu.dot_dimension_numbers<[1], [0], [0], [1], [0, 0, 1, 1], [], []>} : vector<16x8xf32>, vector<8x32xf32>, vector<16x32xf32> -> vector<16x32xf32>
    %237 = arith.addf %218, %236 : vector<16x32xf32>
    %c0_83 = arith.constant 0 : index
    %c7 = arith.constant 7 : index
    %c0_84 = arith.constant 0 : index
    %238 = vector.load %arg6[%c0_83, %c7, %c0_84] : memref<2x16x64xf32, #tpu.memory_space<vmem>>, vector<1x1x32xf32>
    %239 = vector.shape_cast %238 : vector<1x1x32xf32> to vector<1x32xf32>
    %240 = vector.broadcast %239 : vector<1x32xf32> to vector<16x32xf32>
    %241 = arith.addf %237, %240 : vector<16x32xf32>
    %242 = arith.addf %241, %135 : vector<16x32xf32>
    %cst_85 = arith.constant dense<0.000000e+00> : vector<16xf32>
    %243 = vector.multi_reduction <add>, %242, %cst_85 [1] : vector<16x32xf32> to vector<16xf32>
    %244 = vector.shape_cast %243 : vector<16xf32> to vector<16x1xf32>
    %cst_86 = arith.constant 3.200000e+01 : f32
    %245 = vector.broadcast %cst_86 : f32 to vector<16x1xf32>
    %246 = arith.divf %244, %245 : vector<16x1xf32>
    %247 = vector.broadcast %246 : vector<16x1xf32> to vector<16x32xf32>
    %248 = arith.subf %242, %247 : vector<16x32xf32>
    %249 = arith.mulf %248, %248 : vector<16x32xf32>
    %cst_87 = arith.constant dense<0.000000e+00> : vector<16xf32>
    %250 = vector.multi_reduction <add>, %249, %cst_87 [1] : vector<16x32xf32> to vector<16xf32>
    %251 = vector.shape_cast %250 : vector<16xf32> to vector<16x1xf32>
    %cst_88 = arith.constant 3.200000e+01 : f32
    %252 = vector.broadcast %cst_88 : f32 to vector<16x1xf32>
    %253 = arith.divf %251, %252 : vector<16x1xf32>
    %254 = vector.broadcast %246 : vector<16x1xf32> to vector<16x32xf32>
    %255 = arith.subf %242, %254 : vector<16x32xf32>
    %cst_89 = arith.constant 9.99999974E-6 : f32
    %256 = vector.broadcast %cst_89 : f32 to vector<16x1xf32>
    %257 = arith.addf %253, %256 : vector<16x1xf32>
    %258 = math.rsqrt %257 : vector<16x1xf32>
    %259 = vector.broadcast %258 : vector<16x1xf32> to vector<16x32xf32>
    %260 = arith.mulf %255, %259 : vector<16x32xf32>
    %c0_90 = arith.constant 0 : index
    %c11 = arith.constant 11 : index
    %c0_91 = arith.constant 0 : index
    %261 = vector.load %arg6[%c0_90, %c11, %c0_91] : memref<2x16x64xf32, #tpu.memory_space<vmem>>, vector<1x1x32xf32>
    %262 = vector.shape_cast %261 : vector<1x1x32xf32> to vector<1x32xf32>
    %263 = vector.broadcast %262 : vector<1x32xf32> to vector<16x32xf32>
    %264 = arith.mulf %260, %263 : vector<16x32xf32>
    %c0_92 = arith.constant 0 : index
    %c12 = arith.constant 12 : index
    %c0_93 = arith.constant 0 : index
    %265 = vector.load %arg6[%c0_92, %c12, %c0_93] : memref<2x16x64xf32, #tpu.memory_space<vmem>>, vector<1x1x32xf32>
    %266 = vector.shape_cast %265 : vector<1x1x32xf32> to vector<1x32xf32>
    %267 = vector.broadcast %266 : vector<1x32xf32> to vector<16x32xf32>
    %268 = arith.addf %264, %267 : vector<16x32xf32>
    %c0_94 = arith.constant 0 : index
    %c0_95 = arith.constant 0 : index
    %c0_96 = arith.constant 0 : index
    %269 = vector.load %arg4[%c0_94, %c0_95, %c0_96] : memref<2x32x64xf32, #tpu.memory_space<vmem>>, vector<1x32x64xf32>
    %270 = vector.shape_cast %269 : vector<1x32x64xf32> to vector<32x64xf32>
    %cst_97 = arith.constant dense<0.000000e+00> : vector<16x64xf32>
    %271 = tpu.matmul %268, %270, %cst_97 {dimension_numbers = #tpu.dot_dimension_numbers<[1], [0], [0], [1], [0, 0, 1, 1], [], []>} : vector<16x32xf32>, vector<32x64xf32>, vector<16x64xf32> -> vector<16x64xf32>
    %c0_98 = arith.constant 0 : index
    %c15 = arith.constant 15 : index
    %c0_99 = arith.constant 0 : index
    %272 = vector.load %arg6[%c0_98, %c15, %c0_99] : memref<2x16x64xf32, #tpu.memory_space<vmem>>, vector<1x1x64xf32>
    %273 = vector.shape_cast %272 : vector<1x1x64xf32> to vector<1x64xf32>
    %274 = vector.broadcast %273 : vector<1x64xf32> to vector<16x64xf32>
    %275 = arith.addf %271, %274 : vector<16x64xf32>
    %cst_100 = arith.constant 0.000000e+00 : f32
    %276 = vector.broadcast %cst_100 : f32 to vector<16x64xf32>
    %277 = arith.maximumf %275, %276 : vector<16x64xf32>
    %c0_101 = arith.constant 0 : index
    %c0_102 = arith.constant 0 : index
    %c0_103 = arith.constant 0 : index
    %278 = vector.load %arg5[%c0_101, %c0_102, %c0_103] : memref<2x64x32xf32, #tpu.memory_space<vmem>>, vector<1x64x32xf32>
    %279 = vector.shape_cast %278 : vector<1x64x32xf32> to vector<64x32xf32>
    %cst_104 = arith.constant dense<0.000000e+00> : vector<16x32xf32>
    %280 = tpu.matmul %277, %279, %cst_104 {dimension_numbers = #tpu.dot_dimension_numbers<[1], [0], [0], [1], [0, 0, 1, 1], [], []>} : vector<16x64xf32>, vector<64x32xf32>, vector<16x32xf32> -> vector<16x32xf32>
    %c0_105 = arith.constant 0 : index
    %c8 = arith.constant 8 : index
    %c0_106 = arith.constant 0 : index
    %281 = vector.load %arg6[%c0_105, %c8, %c0_106] : memref<2x16x64xf32, #tpu.memory_space<vmem>>, vector<1x1x32xf32>
    %282 = vector.shape_cast %281 : vector<1x1x32xf32> to vector<1x32xf32>
    %283 = vector.broadcast %282 : vector<1x32xf32> to vector<16x32xf32>
    %284 = arith.addf %280, %283 : vector<16x32xf32>
    %285 = arith.addf %284, %268 : vector<16x32xf32>
    %cst_107 = arith.constant dense<0.000000e+00> : vector<16xf32>
    %286 = vector.multi_reduction <add>, %285, %cst_107 [1] : vector<16x32xf32> to vector<16xf32>
    %287 = vector.shape_cast %286 : vector<16xf32> to vector<16x1xf32>
    %cst_108 = arith.constant 3.200000e+01 : f32
    %288 = vector.broadcast %cst_108 : f32 to vector<16x1xf32>
    %289 = arith.divf %287, %288 : vector<16x1xf32>
    %290 = vector.broadcast %289 : vector<16x1xf32> to vector<16x32xf32>
    %291 = arith.subf %285, %290 : vector<16x32xf32>
    %292 = arith.mulf %291, %291 : vector<16x32xf32>
    %cst_109 = arith.constant dense<0.000000e+00> : vector<16xf32>
    %293 = vector.multi_reduction <add>, %292, %cst_109 [1] : vector<16x32xf32> to vector<16xf32>
    %294 = vector.shape_cast %293 : vector<16xf32> to vector<16x1xf32>
    %cst_110 = arith.constant 3.200000e+01 : f32
    %295 = vector.broadcast %cst_110 : f32 to vector<16x1xf32>
    %296 = arith.divf %294, %295 : vector<16x1xf32>
    %297 = vector.broadcast %289 : vector<16x1xf32> to vector<16x32xf32>
    %298 = arith.subf %285, %297 : vector<16x32xf32>
    %cst_111 = arith.constant 9.99999974E-6 : f32
    %299 = vector.broadcast %cst_111 : f32 to vector<16x1xf32>
    %300 = arith.addf %296, %299 : vector<16x1xf32>
    %301 = math.rsqrt %300 : vector<16x1xf32>
    %302 = vector.broadcast %301 : vector<16x1xf32> to vector<16x32xf32>
    %303 = arith.mulf %298, %302 : vector<16x32xf32>
    %c0_112 = arith.constant 0 : index
    %c13 = arith.constant 13 : index
    %c0_113 = arith.constant 0 : index
    %304 = vector.load %arg6[%c0_112, %c13, %c0_113] : memref<2x16x64xf32, #tpu.memory_space<vmem>>, vector<1x1x32xf32>
    %305 = vector.shape_cast %304 : vector<1x1x32xf32> to vector<1x32xf32>
    %306 = vector.broadcast %305 : vector<1x32xf32> to vector<16x32xf32>
    %307 = arith.mulf %303, %306 : vector<16x32xf32>
    %c0_114 = arith.constant 0 : index
    %c14 = arith.constant 14 : index
    %c0_115 = arith.constant 0 : index
    %308 = vector.load %arg6[%c0_114, %c14, %c0_115] : memref<2x16x64xf32, #tpu.memory_space<vmem>>, vector<1x1x32xf32>
    %309 = vector.shape_cast %308 : vector<1x1x32xf32> to vector<1x32xf32>
    %310 = vector.broadcast %309 : vector<1x32xf32> to vector<16x32xf32>
    %311 = arith.addf %307, %310 : vector<16x32xf32>
    %c0_116 = arith.constant 0 : index
    %c0_117 = arith.constant 0 : index
    %c0_118 = arith.constant 0 : index
    %312 = vector.load %arg7[%c0_116, %c0_117, %c0_118] : memref<2x16x32xf32, #tpu.memory_space<vmem>>, vector<1x16x32xf32>
    %313 = vector.shape_cast %312 : vector<1x16x32xf32> to vector<16x32xf32>
    %314 = vector.shape_cast %311 : vector<16x32xf32> to vector<1x16x32xf32>
    tpu.vector_store %arg7[%c0_116, %c0_117, %c0_118], %314 {strides = array<i32>} : memref<2x16x32xf32, #tpu.memory_space<vmem>>, vector<1x16x32xf32>,
    %c1_119 = arith.constant 1 : index
    %c0_120 = arith.constant 0 : index
    %c0_121 = arith.constant 0 : index
    %315 = vector.load %arg1[%c1_119, %c0_120, %c0_121] : memref<2x16x32xf32, #tpu.memory_space<vmem>>, vector<1x16x32xf32>
    %316 = vector.shape_cast %315 : vector<1x16x32xf32> to vector<16x32xf32>
    %c1_122 = arith.constant 1 : index
    %c0_123 = arith.constant 0 : index
    %c0_124 = arith.constant 0 : index
    %c0_125 = arith.constant 0 : index
    %317 = vector.load %arg3[%c1_122, %c0_123, %c0_124, %c0_125] : memref<2x2x32x128xf32, #tpu.memory_space<vmem>>, vector<1x1x32x128xf32>
    %318 = vector.shape_cast %317 : vector<1x1x32x128xf32> to vector<32x128xf32>
    %319 = vector.extract_strided_slice %318 {offsets = [0, 0], sizes = [32, 32], strides = [1, 1]} : vector<32x128xf32> to vector<32x32xf32>
    %cst_126 = arith.constant dense<0.000000e+00> : vector<16x32xf32>
    %320 = tpu.matmul %316, %319, %cst_126 {dimension_numbers = #tpu.dot_dimension_numbers<[1], [0], [0], [1], [0, 0, 1, 1], [], []>} : vector<16x32xf32>, vector<32x32xf32>, vector<16x32xf32> -> vector<16x32xf32>
    %c1_127 = arith.constant 1 : index
    %c0_128 = arith.constant 0 : index
    %c0_129 = arith.constant 0 : index
    %321 = vector.load %arg6[%c1_127, %c0_128, %c0_129] : memref<2x16x64xf32, #tpu.memory_space<vmem>>, vector<1x1x32xf32>
    %322 = vector.shape_cast %321 : vector<1x1x32xf32> to vector<1x32xf32>
    %323 = vector.broadcast %322 : vector<1x32xf32> to vector<16x32xf32>
    %324 = arith.addf %320, %323 : vector<16x32xf32>
    %325 = vector.extract_strided_slice %318 {offsets = [0, 32], sizes = [32, 64], strides = [1, 1]} : vector<32x128xf32> to vector<32x64xf32>
    %cst_130 = arith.constant dense<0.000000e+00> : vector<16x64xf32>
    %326 = tpu.matmul %0, %325, %cst_130 {dimension_numbers = #tpu.dot_dimension_numbers<[1], [0], [0], [1], [0, 0, 1, 1], [], []>} : vector<16x32xf32>, vector<32x64xf32>, vector<16x64xf32> -> vector<16x64xf32>
    %327 = vector.extract_strided_slice %326 {offsets = [0, 0], sizes = [16, 32], strides = [1, 1]} : vector<16x64xf32> to vector<16x32xf32>
    %c1_131 = arith.constant 1 : index
    %c1_132 = arith.constant 1 : index
    %c0_133 = arith.constant 0 : index
    %328 = vector.load %arg6[%c1_131, %c1_132, %c0_133] : memref<2x16x64xf32, #tpu.memory_space<vmem>>, vector<1x1x32xf32>
    %329 = vector.shape_cast %328 : vector<1x1x32xf32> to vector<1x32xf32>
    %330 = vector.broadcast %329 : vector<1x32xf32> to vector<16x32xf32>
    %331 = arith.addf %327, %330 : vector<16x32xf32>
    %332 = vector.extract_strided_slice %326 {offsets = [0, 32], sizes = [16, 32], strides = [1, 1]} : vector<16x64xf32> to vector<16x32xf32>
    %c1_134 = arith.constant 1 : index
    %c2_135 = arith.constant 2 : index
    %c0_136 = arith.constant 0 : index
    %333 = vector.load %arg6[%c1_134, %c2_135, %c0_136] : memref<2x16x64xf32, #tpu.memory_space<vmem>>, vector<1x1x32xf32>
    %334 = vector.shape_cast %333 : vector<1x1x32xf32> to vector<1x32xf32>
    %335 = vector.broadcast %334 : vector<1x32xf32> to vector<16x32xf32>
    %336 = arith.addf %332, %335 : vector<16x32xf32>
    %cst_137 = arith.constant 0.353553385 : f32
    %337 = vector.broadcast %cst_137 : f32 to vector<16x32xf32>
    %338 = arith.mulf %324, %337 : vector<16x32xf32>
    %339 = vector.shape_cast %338 : vector<16x32xf32> to vector<2x8x32xf32>
    %340 = vector.shape_cast %331 : vector<16x32xf32> to vector<2x8x32xf32>
    %341 = vector.shape_cast %336 : vector<16x32xf32> to vector<2x8x32xf32>
    %cst_138 = arith.constant 0.000000e+00 : f32
    %342 = vector.broadcast %cst_138 : f32 to vector<16x32xf32>
    %343 = vector.extract_strided_slice %339 {offsets = [0, 0, 0], sizes = [2, 8, 8], strides = [1, 1, 1]} : vector<2x8x32xf32> to vector<2x8x8xf32>
    %344 = vector.extract_strided_slice %340 {offsets = [0, 0, 0], sizes = [2, 8, 8], strides = [1, 1, 1]} : vector<2x8x32xf32> to vector<2x8x8xf32>
    "tpu.trace_start"() <{level = 10 : i32, message = "bnd,bmd->bnm"}> : () -> ()
    %cst_139 = arith.constant dense<0.000000e+00> : vector<2x8x8xf32>
    %345 = tpu.matmul %343, %344, %cst_139 {dimension_numbers = #tpu.dot_dimension_numbers<[2], [2], [1], [1], [0, 0, 0, 1, 1, 1], [0], [0]>} : vector<2x8x8xf32>, vector<2x8x8xf32>, vector<2x8x8xf32> -> vector<2x8x8xf32>
    "tpu.trace_stop"() : () -> ()
    %cst_140 = arith.constant dense<0xFF800000> : vector<2x8xf32>
    %346 = vector.multi_reduction <maximumf>, %345, %cst_140 [2] : vector<2x8x8xf32> to vector<2x8xf32>
    %347 = vector.shape_cast %346 : vector<2x8xf32> to vector<2x8x1xf32>
    %348 = vector.broadcast %347 : vector<2x8x1xf32> to vector<2x8x8xf32>
    %349 = arith.subf %345, %348 : vector<2x8x8xf32>
    %350 = math.exp %349 : vector<2x8x8xf32>
    %cst_141 = arith.constant dense<0.000000e+00> : vector<2x8xf32>
    %351 = vector.multi_reduction <add>, %350, %cst_141 [2] : vector<2x8x8xf32> to vector<2x8xf32>
    %352 = vector.shape_cast %351 : vector<2x8xf32> to vector<2x8x1xf32>
    %353 = tpu.reciprocal %352 {approx = true} : vector<2x8x1xf32> -> vector<2x8x1xf32>
    %354 = vector.broadcast %353 : vector<2x8x1xf32> to vector<2x8x8xf32>
    %355 = arith.mulf %350, %354 : vector<2x8x8xf32>
    %356 = vector.extract_strided_slice %341 {offsets = [0, 0, 0], sizes = [2, 8, 8], strides = [1, 1, 1]} : vector<2x8x32xf32> to vector<2x8x8xf32>
    "tpu.trace_start"() <{level = 10 : i32, message = "bnm,bmd->bnd"}> : () -> ()
    %cst_142 = arith.constant dense<0.000000e+00> : vector<2x8x8xf32>
    %357 = tpu.matmul %355, %356, %cst_142 {dimension_numbers = #tpu.dot_dimension_numbers<[2], [1], [1], [2], [0, 0, 0, 1, 1, 2], [0], [0]>} : vector<2x8x8xf32>, vector<2x8x8xf32>, vector<2x8x8xf32> -> vector<2x8x8xf32>
    "tpu.trace_stop"() : () -> ()
    %358 = vector.shape_cast %357 : vector<2x8x8xf32> to vector<16x8xf32>
    %359 = vector.extract_strided_slice %318 {offsets = [0, 96], sizes = [8, 32], strides = [1, 1]} : vector<32x128xf32> to vector<8x32xf32>
    %cst_143 = arith.constant dense<0.000000e+00> : vector<16x32xf32>
    %360 = tpu.matmul %358, %359, %cst_143 {dimension_numbers = #tpu.dot_dimension_numbers<[1], [0], [0], [1], [0, 0, 1, 1], [], []>} : vector<16x8xf32>, vector<8x32xf32>, vector<16x32xf32> -> vector<16x32xf32>
    %361 = arith.addf %342, %360 : vector<16x32xf32>
    %362 = vector.extract_strided_slice %339 {offsets = [0, 0, 8], sizes = [2, 8, 8], strides = [1, 1, 1]} : vector<2x8x32xf32> to vector<2x8x8xf32>
    %363 = vector.extract_strided_slice %340 {offsets = [0, 0, 8], sizes = [2, 8, 8], strides = [1, 1, 1]} : vector<2x8x32xf32> to vector<2x8x8xf32>
    "tpu.trace_start"() <{level = 10 : i32, message = "bnd,bmd->bnm"}> : () -> ()
    %cst_144 = arith.constant dense<0.000000e+00> : vector<2x8x8xf32>
    %364 = tpu.matmul %362, %363, %cst_144 {dimension_numbers = #tpu.dot_dimension_numbers<[2], [2], [1], [1], [0, 0, 0, 1, 1, 1], [0], [0]>} : vector<2x8x8xf32>, vector<2x8x8xf32>, vector<2x8x8xf32> -> vector<2x8x8xf32>
    "tpu.trace_stop"() : () -> ()
    %cst_145 = arith.constant dense<0xFF800000> : vector<2x8xf32>
    %365 = vector.multi_reduction <maximumf>, %364, %cst_145 [2] : vector<2x8x8xf32> to vector<2x8xf32>
    %366 = vector.shape_cast %365 : vector<2x8xf32> to vector<2x8x1xf32>
    %367 = vector.broadcast %366 : vector<2x8x1xf32> to vector<2x8x8xf32>
    %368 = arith.subf %364, %367 : vector<2x8x8xf32>
    %369 = math.exp %368 : vector<2x8x8xf32>
    %cst_146 = arith.constant dense<0.000000e+00> : vector<2x8xf32>
    %370 = vector.multi_reduction <add>, %369, %cst_146 [2] : vector<2x8x8xf32> to vector<2x8xf32>
    %371 = vector.shape_cast %370 : vector<2x8xf32> to vector<2x8x1xf32>
    %372 = tpu.reciprocal %371 {approx = true} : vector<2x8x1xf32> -> vector<2x8x1xf32>
    %373 = vector.broadcast %372 : vector<2x8x1xf32> to vector<2x8x8xf32>
    %374 = arith.mulf %369, %373 : vector<2x8x8xf32>
    %375 = vector.extract_strided_slice %341 {offsets = [0, 0, 8], sizes = [2, 8, 8], strides = [1, 1, 1]} : vector<2x8x32xf32> to vector<2x8x8xf32>
    "tpu.trace_start"() <{level = 10 : i32, message = "bnm,bmd->bnd"}> : () -> ()
    %cst_147 = arith.constant dense<0.000000e+00> : vector<2x8x8xf32>
    %376 = tpu.matmul %374, %375, %cst_147 {dimension_numbers = #tpu.dot_dimension_numbers<[2], [1], [1], [2], [0, 0, 0, 1, 1, 2], [0], [0]>} : vector<2x8x8xf32>, vector<2x8x8xf32>, vector<2x8x8xf32> -> vector<2x8x8xf32>
    "tpu.trace_stop"() : () -> ()
    %377 = vector.shape_cast %376 : vector<2x8x8xf32> to vector<16x8xf32>
    %378 = vector.extract_strided_slice %318 {offsets = [8, 96], sizes = [8, 32], strides = [1, 1]} : vector<32x128xf32> to vector<8x32xf32>
    %cst_148 = arith.constant dense<0.000000e+00> : vector<16x32xf32>
    %379 = tpu.matmul %377, %378, %cst_148 {dimension_numbers = #tpu.dot_dimension_numbers<[1], [0], [0], [1], [0, 0, 1, 1], [], []>} : vector<16x8xf32>, vector<8x32xf32>, vector<16x32xf32> -> vector<16x32xf32>
    %380 = arith.addf %361, %379 : vector<16x32xf32>
    %381 = vector.extract_strided_slice %339 {offsets = [0, 0, 16], sizes = [2, 8, 8], strides = [1, 1, 1]} : vector<2x8x32xf32> to vector<2x8x8xf32>
    %382 = vector.extract_strided_slice %340 {offsets = [0, 0, 16], sizes = [2, 8, 8], strides = [1, 1, 1]} : vector<2x8x32xf32> to vector<2x8x8xf32>
    "tpu.trace_start"() <{level = 10 : i32, message = "bnd,bmd->bnm"}> : () -> ()
    %cst_149 = arith.constant dense<0.000000e+00> : vector<2x8x8xf32>
    %383 = tpu.matmul %381, %382, %cst_149 {dimension_numbers = #tpu.dot_dimension_numbers<[2], [2], [1], [1], [0, 0, 0, 1, 1, 1], [0], [0]>} : vector<2x8x8xf32>, vector<2x8x8xf32>, vector<2x8x8xf32> -> vector<2x8x8xf32>
    "tpu.trace_stop"() : () -> ()
    %cst_150 = arith.constant dense<0xFF800000> : vector<2x8xf32>
    %384 = vector.multi_reduction <maximumf>, %383, %cst_150 [2] : vector<2x8x8xf32> to vector<2x8xf32>
    %385 = vector.shape_cast %384 : vector<2x8xf32> to vector<2x8x1xf32>
    %386 = vector.broadcast %385 : vector<2x8x1xf32> to vector<2x8x8xf32>
    %387 = arith.subf %383, %386 : vector<2x8x8xf32>
    %388 = math.exp %387 : vector<2x8x8xf32>
    %cst_151 = arith.constant dense<0.000000e+00> : vector<2x8xf32>
    %389 = vector.multi_reduction <add>, %388, %cst_151 [2] : vector<2x8x8xf32> to vector<2x8xf32>
    %390 = vector.shape_cast %389 : vector<2x8xf32> to vector<2x8x1xf32>
    %391 = tpu.reciprocal %390 {approx = true} : vector<2x8x1xf32> -> vector<2x8x1xf32>
    %392 = vector.broadcast %391 : vector<2x8x1xf32> to vector<2x8x8xf32>
    %393 = arith.mulf %388, %392 : vector<2x8x8xf32>
    %394 = vector.extract_strided_slice %341 {offsets = [0, 0, 16], sizes = [2, 8, 8], strides = [1, 1, 1]} : vector<2x8x32xf32> to vector<2x8x8xf32>
    "tpu.trace_start"() <{level = 10 : i32, message = "bnm,bmd->bnd"}> : () -> ()
    %cst_152 = arith.constant dense<0.000000e+00> : vector<2x8x8xf32>
    %395 = tpu.matmul %393, %394, %cst_152 {dimension_numbers = #tpu.dot_dimension_numbers<[2], [1], [1], [2], [0, 0, 0, 1, 1, 2], [0], [0]>} : vector<2x8x8xf32>, vector<2x8x8xf32>, vector<2x8x8xf32> -> vector<2x8x8xf32>
    "tpu.trace_stop"() : () -> ()
    %396 = vector.shape_cast %395 : vector<2x8x8xf32> to vector<16x8xf32>
    %397 = vector.extract_strided_slice %318 {offsets = [16, 96], sizes = [8, 32], strides = [1, 1]} : vector<32x128xf32> to vector<8x32xf32>
    %cst_153 = arith.constant dense<0.000000e+00> : vector<16x32xf32>
    %398 = tpu.matmul %396, %397, %cst_153 {dimension_numbers = #tpu.dot_dimension_numbers<[1], [0], [0], [1], [0, 0, 1, 1], [], []>} : vector<16x8xf32>, vector<8x32xf32>, vector<16x32xf32> -> vector<16x32xf32>
    %399 = arith.addf %380, %398 : vector<16x32xf32>
    %400 = vector.extract_strided_slice %339 {offsets = [0, 0, 24], sizes = [2, 8, 8], strides = [1, 1, 1]} : vector<2x8x32xf32> to vector<2x8x8xf32>
    %401 = vector.extract_strided_slice %340 {offsets = [0, 0, 24], sizes = [2, 8, 8], strides = [1, 1, 1]} : vector<2x8x32xf32> to vector<2x8x8xf32>
    "tpu.trace_start"() <{level = 10 : i32, message = "bnd,bmd->bnm"}> : () -> ()
    %cst_154 = arith.constant dense<0.000000e+00> : vector<2x8x8xf32>
    %402 = tpu.matmul %400, %401, %cst_154 {dimension_numbers = #tpu.dot_dimension_numbers<[2], [2], [1], [1], [0, 0, 0, 1, 1, 1], [0], [0]>} : vector<2x8x8xf32>, vector<2x8x8xf32>, vector<2x8x8xf32> -> vector<2x8x8xf32>
    "tpu.trace_stop"() : () -> ()
    %cst_155 = arith.constant dense<0xFF800000> : vector<2x8xf32>
    %403 = vector.multi_reduction <maximumf>, %402, %cst_155 [2] : vector<2x8x8xf32> to vector<2x8xf32>
    %404 = vector.shape_cast %403 : vector<2x8xf32> to vector<2x8x1xf32>
    %405 = vector.broadcast %404 : vector<2x8x1xf32> to vector<2x8x8xf32>
    %406 = arith.subf %402, %405 : vector<2x8x8xf32>
    %407 = math.exp %406 : vector<2x8x8xf32>
    %cst_156 = arith.constant dense<0.000000e+00> : vector<2x8xf32>
    %408 = vector.multi_reduction <add>, %407, %cst_156 [2] : vector<2x8x8xf32> to vector<2x8xf32>
    %409 = vector.shape_cast %408 : vector<2x8xf32> to vector<2x8x1xf32>
    %410 = tpu.reciprocal %409 {approx = true} : vector<2x8x1xf32> -> vector<2x8x1xf32>
    %411 = vector.broadcast %410 : vector<2x8x1xf32> to vector<2x8x8xf32>
    %412 = arith.mulf %407, %411 : vector<2x8x8xf32>
    %413 = vector.extract_strided_slice %341 {offsets = [0, 0, 24], sizes = [2, 8, 8], strides = [1, 1, 1]} : vector<2x8x32xf32> to vector<2x8x8xf32>
    "tpu.trace_start"() <{level = 10 : i32, message = "bnm,bmd->bnd"}> : () -> ()
    %cst_157 = arith.constant dense<0.000000e+00> : vector<2x8x8xf32>
    %414 = tpu.matmul %412, %413, %cst_157 {dimension_numbers = #tpu.dot_dimension_numbers<[2], [1], [1], [2], [0, 0, 0, 1, 1, 2], [0], [0]>} : vector<2x8x8xf32>, vector<2x8x8xf32>, vector<2x8x8xf32> -> vector<2x8x8xf32>
    "tpu.trace_stop"() : () -> ()
    %415 = vector.shape_cast %414 : vector<2x8x8xf32> to vector<16x8xf32>
    %416 = vector.extract_strided_slice %318 {offsets = [24, 96], sizes = [8, 32], strides = [1, 1]} : vector<32x128xf32> to vector<8x32xf32>
    %cst_158 = arith.constant dense<0.000000e+00> : vector<16x32xf32>
    %417 = tpu.matmul %415, %416, %cst_158 {dimension_numbers = #tpu.dot_dimension_numbers<[1], [0], [0], [1], [0, 0, 1, 1], [], []>} : vector<16x8xf32>, vector<8x32xf32>, vector<16x32xf32> -> vector<16x32xf32>
    %418 = arith.addf %399, %417 : vector<16x32xf32>
    %c1_159 = arith.constant 1 : index
    %c3_160 = arith.constant 3 : index
    %c0_161 = arith.constant 0 : index
    %419 = vector.load %arg6[%c1_159, %c3_160, %c0_161] : memref<2x16x64xf32, #tpu.memory_space<vmem>>, vector<1x1x32xf32>
    %420 = vector.shape_cast %419 : vector<1x1x32xf32> to vector<1x32xf32>
    %421 = vector.broadcast %420 : vector<1x32xf32> to vector<16x32xf32>
    %422 = arith.addf %418, %421 : vector<16x32xf32>
    %423 = arith.addf %422, %316 : vector<16x32xf32>
    %cst_162 = arith.constant dense<0.000000e+00> : vector<16xf32>
    %424 = vector.multi_reduction <add>, %423, %cst_162 [1] : vector<16x32xf32> to vector<16xf32>
    %425 = vector.shape_cast %424 : vector<16xf32> to vector<16x1xf32>
    %cst_163 = arith.constant 3.200000e+01 : f32
    %426 = vector.broadcast %cst_163 : f32 to vector<16x1xf32>
    %427 = arith.divf %425, %426 : vector<16x1xf32>
    %428 = vector.broadcast %427 : vector<16x1xf32> to vector<16x32xf32>
    %429 = arith.subf %423, %428 : vector<16x32xf32>
    %430 = arith.mulf %429, %429 : vector<16x32xf32>
    %cst_164 = arith.constant dense<0.000000e+00> : vector<16xf32>
    %431 = vector.multi_reduction <add>, %430, %cst_164 [1] : vector<16x32xf32> to vector<16xf32>
    %432 = vector.shape_cast %431 : vector<16xf32> to vector<16x1xf32>
    %cst_165 = arith.constant 3.200000e+01 : f32
    %433 = vector.broadcast %cst_165 : f32 to vector<16x1xf32>
    %434 = arith.divf %432, %433 : vector<16x1xf32>
    %435 = vector.broadcast %427 : vector<16x1xf32> to vector<16x32xf32>
    %436 = arith.subf %423, %435 : vector<16x32xf32>
    %cst_166 = arith.constant 9.99999974E-6 : f32
    %437 = vector.broadcast %cst_166 : f32 to vector<16x1xf32>
    %438 = arith.addf %434, %437 : vector<16x1xf32>
    %439 = math.rsqrt %438 : vector<16x1xf32>
    %440 = vector.broadcast %439 : vector<16x1xf32> to vector<16x32xf32>
    %441 = arith.mulf %436, %440 : vector<16x32xf32>
    %c1_167 = arith.constant 1 : index
    %c9_168 = arith.constant 9 : index
    %c0_169 = arith.constant 0 : index
    %442 = vector.load %arg6[%c1_167, %c9_168, %c0_169] : memref<2x16x64xf32, #tpu.memory_space<vmem>>, vector<1x1x32xf32>
    %443 = vector.shape_cast %442 : vector<1x1x32xf32> to vector<1x32xf32>
    %444 = vector.broadcast %443 : vector<1x32xf32> to vector<16x32xf32>
    %445 = arith.mulf %441, %444 : vector<16x32xf32>
    %c1_170 = arith.constant 1 : index
    %c10_171 = arith.constant 10 : index
    %c0_172 = arith.constant 0 : index
    %446 = vector.load %arg6[%c1_170, %c10_171, %c0_172] : memref<2x16x64xf32, #tpu.memory_space<vmem>>, vector<1x1x32xf32>
    %447 = vector.shape_cast %446 : vector<1x1x32xf32> to vector<1x32xf32>
    %448 = vector.broadcast %447 : vector<1x32xf32> to vector<16x32xf32>
    %449 = arith.addf %445, %448 : vector<16x32xf32>
    %c1_173 = arith.constant 1 : index
    %c1_174 = arith.constant 1 : index
    %c0_175 = arith.constant 0 : index
    %c0_176 = arith.constant 0 : index
    %450 = vector.load %arg3[%c1_173, %c1_174, %c0_175, %c0_176] : memref<2x2x32x128xf32, #tpu.memory_space<vmem>>, vector<1x1x32x128xf32>
    %451 = vector.shape_cast %450 : vector<1x1x32x128xf32> to vector<32x128xf32>
    %452 = vector.extract_strided_slice %451 {offsets = [0, 0], sizes = [32, 32], strides = [1, 1]} : vector<32x128xf32> to vector<32x32xf32>
    %cst_177 = arith.constant dense<0.000000e+00> : vector<16x32xf32>
    %453 = tpu.matmul %449, %452, %cst_177 {dimension_numbers = #tpu.dot_dimension_numbers<[1], [0], [0], [1], [0, 0, 1, 1], [], []>} : vector<16x32xf32>, vector<32x32xf32>, vector<16x32xf32> -> vector<16x32xf32>
    %c1_178 = arith.constant 1 : index
    %c4_179 = arith.constant 4 : index
    %c0_180 = arith.constant 0 : index
    %454 = vector.load %arg6[%c1_178, %c4_179, %c0_180] : memref<2x16x64xf32, #tpu.memory_space<vmem>>, vector<1x1x32xf32>
    %455 = vector.shape_cast %454 : vector<1x1x32xf32> to vector<1x32xf32>
    %456 = vector.broadcast %455 : vector<1x32xf32> to vector<16x32xf32>
    %457 = arith.addf %453, %456 : vector<16x32xf32>
    %458 = vector.extract_strided_slice %451 {offsets = [0, 32], sizes = [32, 64], strides = [1, 1]} : vector<32x128xf32> to vector<32x64xf32>
    %cst_181 = arith.constant dense<0.000000e+00> : vector<16x64xf32>
    %459 = tpu.matmul %311, %458, %cst_181 {dimension_numbers = #tpu.dot_dimension_numbers<[1], [0], [0], [1], [0, 0, 1, 1], [], []>} : vector<16x32xf32>, vector<32x64xf32>, vector<16x64xf32> -> vector<16x64xf32>
    %460 = vector.extract_strided_slice %459 {offsets = [0, 0], sizes = [16, 32], strides = [1, 1]} : vector<16x64xf32> to vector<16x32xf32>
    %c1_182 = arith.constant 1 : index
    %c5_183 = arith.constant 5 : index
    %c0_184 = arith.constant 0 : index
    %461 = vector.load %arg6[%c1_182, %c5_183, %c0_184] : memref<2x16x64xf32, #tpu.memory_space<vmem>>, vector<1x1x32xf32>
    %462 = vector.shape_cast %461 : vector<1x1x32xf32> to vector<1x32xf32>
    %463 = vector.broadcast %462 : vector<1x32xf32> to vector<16x32xf32>
    %464 = arith.addf %460, %463 : vector<16x32xf32>
    %465 = vector.extract_strided_slice %459 {offsets = [0, 32], sizes = [16, 32], strides = [1, 1]} : vector<16x64xf32> to vector<16x32xf32>
    %c1_185 = arith.constant 1 : index
    %c6_186 = arith.constant 6 : index
    %c0_187 = arith.constant 0 : index
    %466 = vector.load %arg6[%c1_185, %c6_186, %c0_187] : memref<2x16x64xf32, #tpu.memory_space<vmem>>, vector<1x1x32xf32>
    %467 = vector.shape_cast %466 : vector<1x1x32xf32> to vector<1x32xf32>
    %468 = vector.broadcast %467 : vector<1x32xf32> to vector<16x32xf32>
    %469 = arith.addf %465, %468 : vector<16x32xf32>
    %cst_188 = arith.constant 0.353553385 : f32
    %470 = vector.broadcast %cst_188 : f32 to vector<16x32xf32>
    %471 = arith.mulf %457, %470 : vector<16x32xf32>
    %472 = vector.shape_cast %471 : vector<16x32xf32> to vector<2x8x32xf32>
    %473 = vector.shape_cast %464 : vector<16x32xf32> to vector<2x8x32xf32>
    %474 = vector.shape_cast %469 : vector<16x32xf32> to vector<2x8x32xf32>
    %cst_189 = arith.constant 0.000000e+00 : f32
    %475 = vector.broadcast %cst_189 : f32 to vector<16x32xf32>
    %476 = vector.extract_strided_slice %472 {offsets = [0, 0, 0], sizes = [2, 8, 8], strides = [1, 1, 1]} : vector<2x8x32xf32> to vector<2x8x8xf32>
    %477 = vector.extract_strided_slice %473 {offsets = [0, 0, 0], sizes = [2, 8, 8], strides = [1, 1, 1]} : vector<2x8x32xf32> to vector<2x8x8xf32>
    "tpu.trace_start"() <{level = 10 : i32, message = "bnd,bmd->bnm"}> : () -> ()
    %cst_190 = arith.constant dense<0.000000e+00> : vector<2x8x8xf32>
    %478 = tpu.matmul %476, %477, %cst_190 {dimension_numbers = #tpu.dot_dimension_numbers<[2], [2], [1], [1], [0, 0, 0, 1, 1, 1], [0], [0]>} : vector<2x8x8xf32>, vector<2x8x8xf32>, vector<2x8x8xf32> -> vector<2x8x8xf32>
    "tpu.trace_stop"() : () -> ()
    %cst_191 = arith.constant dense<0xFF800000> : vector<2x8xf32>
    %479 = vector.multi_reduction <maximumf>, %478, %cst_191 [2] : vector<2x8x8xf32> to vector<2x8xf32>
    %480 = vector.shape_cast %479 : vector<2x8xf32> to vector<2x8x1xf32>
    %481 = vector.broadcast %480 : vector<2x8x1xf32> to vector<2x8x8xf32>
    %482 = arith.subf %478, %481 : vector<2x8x8xf32>
    %483 = math.exp %482 : vector<2x8x8xf32>
    %cst_192 = arith.constant dense<0.000000e+00> : vector<2x8xf32>
    %484 = vector.multi_reduction <add>, %483, %cst_192 [2] : vector<2x8x8xf32> to vector<2x8xf32>
    %485 = vector.shape_cast %484 : vector<2x8xf32> to vector<2x8x1xf32>
    %486 = tpu.reciprocal %485 {approx = true} : vector<2x8x1xf32> -> vector<2x8x1xf32>
    %487 = vector.broadcast %486 : vector<2x8x1xf32> to vector<2x8x8xf32>
    %488 = arith.mulf %483, %487 : vector<2x8x8xf32>
    %489 = vector.extract_strided_slice %474 {offsets = [0, 0, 0], sizes = [2, 8, 8], strides = [1, 1, 1]} : vector<2x8x32xf32> to vector<2x8x8xf32>
    "tpu.trace_start"() <{level = 10 : i32, message = "bnm,bmd->bnd"}> : () -> ()
    %cst_193 = arith.constant dense<0.000000e+00> : vector<2x8x8xf32>
    %490 = tpu.matmul %488, %489, %cst_193 {dimension_numbers = #tpu.dot_dimension_numbers<[2], [1], [1], [2], [0, 0, 0, 1, 1, 2], [0], [0]>} : vector<2x8x8xf32>, vector<2x8x8xf32>, vector<2x8x8xf32> -> vector<2x8x8xf32>
    "tpu.trace_stop"() : () -> ()
    %491 = vector.shape_cast %490 : vector<2x8x8xf32> to vector<16x8xf32>
    %492 = vector.extract_strided_slice %451 {offsets = [0, 96], sizes = [8, 32], strides = [1, 1]} : vector<32x128xf32> to vector<8x32xf32>
    %cst_194 = arith.constant dense<0.000000e+00> : vector<16x32xf32>
    %493 = tpu.matmul %491, %492, %cst_194 {dimension_numbers = #tpu.dot_dimension_numbers<[1], [0], [0], [1], [0, 0, 1, 1], [], []>} : vector<16x8xf32>, vector<8x32xf32>, vector<16x32xf32> -> vector<16x32xf32>
    %494 = arith.addf %475, %493 : vector<16x32xf32>
    %495 = vector.extract_strided_slice %472 {offsets = [0, 0, 8], sizes = [2, 8, 8], strides = [1, 1, 1]} : vector<2x8x32xf32> to vector<2x8x8xf32>
    %496 = vector.extract_strided_slice %473 {offsets = [0, 0, 8], sizes = [2, 8, 8], strides = [1, 1, 1]} : vector<2x8x32xf32> to vector<2x8x8xf32>
    "tpu.trace_start"() <{level = 10 : i32, message = "bnd,bmd->bnm"}> : () -> ()
    %cst_195 = arith.constant dense<0.000000e+00> : vector<2x8x8xf32>
    %497 = tpu.matmul %495, %496, %cst_195 {dimension_numbers = #tpu.dot_dimension_numbers<[2], [2], [1], [1], [0, 0, 0, 1, 1, 1], [0], [0]>} : vector<2x8x8xf32>, vector<2x8x8xf32>, vector<2x8x8xf32> -> vector<2x8x8xf32>
    "tpu.trace_stop"() : () -> ()
    %cst_196 = arith.constant dense<0xFF800000> : vector<2x8xf32>
    %498 = vector.multi_reduction <maximumf>, %497, %cst_196 [2] : vector<2x8x8xf32> to vector<2x8xf32>
    %499 = vector.shape_cast %498 : vector<2x8xf32> to vector<2x8x1xf32>
    %500 = vector.broadcast %499 : vector<2x8x1xf32> to vector<2x8x8xf32>
    %501 = arith.subf %497, %500 : vector<2x8x8xf32>
    %502 = math.exp %501 : vector<2x8x8xf32>
    %cst_197 = arith.constant dense<0.000000e+00> : vector<2x8xf32>
    %503 = vector.multi_reduction <add>, %502, %cst_197 [2] : vector<2x8x8xf32> to vector<2x8xf32>
    %504 = vector.shape_cast %503 : vector<2x8xf32> to vector<2x8x1xf32>
    %505 = tpu.reciprocal %504 {approx = true} : vector<2x8x1xf32> -> vector<2x8x1xf32>
    %506 = vector.broadcast %505 : vector<2x8x1xf32> to vector<2x8x8xf32>
    %507 = arith.mulf %502, %506 : vector<2x8x8xf32>
    %508 = vector.extract_strided_slice %474 {offsets = [0, 0, 8], sizes = [2, 8, 8], strides = [1, 1, 1]} : vector<2x8x32xf32> to vector<2x8x8xf32>
    "tpu.trace_start"() <{level = 10 : i32, message = "bnm,bmd->bnd"}> : () -> ()
    %cst_198 = arith.constant dense<0.000000e+00> : vector<2x8x8xf32>
    %509 = tpu.matmul %507, %508, %cst_198 {dimension_numbers = #tpu.dot_dimension_numbers<[2], [1], [1], [2], [0, 0, 0, 1, 1, 2], [0], [0]>} : vector<2x8x8xf32>, vector<2x8x8xf32>, vector<2x8x8xf32> -> vector<2x8x8xf32>
    "tpu.trace_stop"() : () -> ()
    %510 = vector.shape_cast %509 : vector<2x8x8xf32> to vector<16x8xf32>
    %511 = vector.extract_strided_slice %451 {offsets = [8, 96], sizes = [8, 32], strides = [1, 1]} : vector<32x128xf32> to vector<8x32xf32>
    %cst_199 = arith.constant dense<0.000000e+00> : vector<16x32xf32>
    %512 = tpu.matmul %510, %511, %cst_199 {dimension_numbers = #tpu.dot_dimension_numbers<[1], [0], [0], [1], [0, 0, 1, 1], [], []>} : vector<16x8xf32>, vector<8x32xf32>, vector<16x32xf32> -> vector<16x32xf32>
    %513 = arith.addf %494, %512 : vector<16x32xf32>
    %514 = vector.extract_strided_slice %472 {offsets = [0, 0, 16], sizes = [2, 8, 8], strides = [1, 1, 1]} : vector<2x8x32xf32> to vector<2x8x8xf32>
    %515 = vector.extract_strided_slice %473 {offsets = [0, 0, 16], sizes = [2, 8, 8], strides = [1, 1, 1]} : vector<2x8x32xf32> to vector<2x8x8xf32>
    "tpu.trace_start"() <{level = 10 : i32, message = "bnd,bmd->bnm"}> : () -> ()
    %cst_200 = arith.constant dense<0.000000e+00> : vector<2x8x8xf32>
    %516 = tpu.matmul %514, %515, %cst_200 {dimension_numbers = #tpu.dot_dimension_numbers<[2], [2], [1], [1], [0, 0, 0, 1, 1, 1], [0], [0]>} : vector<2x8x8xf32>, vector<2x8x8xf32>, vector<2x8x8xf32> -> vector<2x8x8xf32>
    "tpu.trace_stop"() : () -> ()
    %cst_201 = arith.constant dense<0xFF800000> : vector<2x8xf32>
    %517 = vector.multi_reduction <maximumf>, %516, %cst_201 [2] : vector<2x8x8xf32> to vector<2x8xf32>
    %518 = vector.shape_cast %517 : vector<2x8xf32> to vector<2x8x1xf32>
    %519 = vector.broadcast %518 : vector<2x8x1xf32> to vector<2x8x8xf32>
    %520 = arith.subf %516, %519 : vector<2x8x8xf32>
    %521 = math.exp %520 : vector<2x8x8xf32>
    %cst_202 = arith.constant dense<0.000000e+00> : vector<2x8xf32>
    %522 = vector.multi_reduction <add>, %521, %cst_202 [2] : vector<2x8x8xf32> to vector<2x8xf32>
    %523 = vector.shape_cast %522 : vector<2x8xf32> to vector<2x8x1xf32>
    %524 = tpu.reciprocal %523 {approx = true} : vector<2x8x1xf32> -> vector<2x8x1xf32>
    %525 = vector.broadcast %524 : vector<2x8x1xf32> to vector<2x8x8xf32>
    %526 = arith.mulf %521, %525 : vector<2x8x8xf32>
    %527 = vector.extract_strided_slice %474 {offsets = [0, 0, 16], sizes = [2, 8, 8], strides = [1, 1, 1]} : vector<2x8x32xf32> to vector<2x8x8xf32>
    "tpu.trace_start"() <{level = 10 : i32, message = "bnm,bmd->bnd"}> : () -> ()
    %cst_203 = arith.constant dense<0.000000e+00> : vector<2x8x8xf32>
    %528 = tpu.matmul %526, %527, %cst_203 {dimension_numbers = #tpu.dot_dimension_numbers<[2], [1], [1], [2], [0, 0, 0, 1, 1, 2], [0], [0]>} : vector<2x8x8xf32>, vector<2x8x8xf32>, vector<2x8x8xf32> -> vector<2x8x8xf32>
    "tpu.trace_stop"() : () -> ()
    %529 = vector.shape_cast %528 : vector<2x8x8xf32> to vector<16x8xf32>
    %530 = vector.extract_strided_slice %451 {offsets = [16, 96], sizes = [8, 32], strides = [1, 1]} : vector<32x128xf32> to vector<8x32xf32>
    %cst_204 = arith.constant dense<0.000000e+00> : vector<16x32xf32>
    %531 = tpu.matmul %529, %530, %cst_204 {dimension_numbers = #tpu.dot_dimension_numbers<[1], [0], [0], [1], [0, 0, 1, 1], [], []>} : vector<16x8xf32>, vector<8x32xf32>, vector<16x32xf32> -> vector<16x32xf32>
    %532 = arith.addf %513, %531 : vector<16x32xf32>
    %533 = vector.extract_strided_slice %472 {offsets = [0, 0, 24], sizes = [2, 8, 8], strides = [1, 1, 1]} : vector<2x8x32xf32> to vector<2x8x8xf32>
    %534 = vector.extract_strided_slice %473 {offsets = [0, 0, 24], sizes = [2, 8, 8], strides = [1, 1, 1]} : vector<2x8x32xf32> to vector<2x8x8xf32>
    "tpu.trace_start"() <{level = 10 : i32, message = "bnd,bmd->bnm"}> : () -> ()
    %cst_205 = arith.constant dense<0.000000e+00> : vector<2x8x8xf32>
    %535 = tpu.matmul %533, %534, %cst_205 {dimension_numbers = #tpu.dot_dimension_numbers<[2], [2], [1], [1], [0, 0, 0, 1, 1, 1], [0], [0]>} : vector<2x8x8xf32>, vector<2x8x8xf32>, vector<2x8x8xf32> -> vector<2x8x8xf32>
    "tpu.trace_stop"() : () -> ()
    %cst_206 = arith.constant dense<0xFF800000> : vector<2x8xf32>
    %536 = vector.multi_reduction <maximumf>, %535, %cst_206 [2] : vector<2x8x8xf32> to vector<2x8xf32>
    %537 = vector.shape_cast %536 : vector<2x8xf32> to vector<2x8x1xf32>
    %538 = vector.broadcast %537 : vector<2x8x1xf32> to vector<2x8x8xf32>
    %539 = arith.subf %535, %538 : vector<2x8x8xf32>
    %540 = math.exp %539 : vector<2x8x8xf32>
    %cst_207 = arith.constant dense<0.000000e+00> : vector<2x8xf32>
    %541 = vector.multi_reduction <add>, %540, %cst_207 [2] : vector<2x8x8xf32> to vector<2x8xf32>
    %542 = vector.shape_cast %541 : vector<2x8xf32> to vector<2x8x1xf32>
    %543 = tpu.reciprocal %542 {approx = true} : vector<2x8x1xf32> -> vector<2x8x1xf32>
    %544 = vector.broadcast %543 : vector<2x8x1xf32> to vector<2x8x8xf32>
    %545 = arith.mulf %540, %544 : vector<2x8x8xf32>
    %546 = vector.extract_strided_slice %474 {offsets = [0, 0, 24], sizes = [2, 8, 8], strides = [1, 1, 1]} : vector<2x8x32xf32> to vector<2x8x8xf32>
    "tpu.trace_start"() <{level = 10 : i32, message = "bnm,bmd->bnd"}> : () -> ()
    %cst_208 = arith.constant dense<0.000000e+00> : vector<2x8x8xf32>
    %547 = tpu.matmul %545, %546, %cst_208 {dimension_numbers = #tpu.dot_dimension_numbers<[2], [1], [1], [2], [0, 0, 0, 1, 1, 2], [0], [0]>} : vector<2x8x8xf32>, vector<2x8x8xf32>, vector<2x8x8xf32> -> vector<2x8x8xf32>
    "tpu.trace_stop"() : () -> ()
    %548 = vector.shape_cast %547 : vector<2x8x8xf32> to vector<16x8xf32>
    %549 = vector.extract_strided_slice %451 {offsets = [24, 96], sizes = [8, 32], strides = [1, 1]} : vector<32x128xf32> to vector<8x32xf32>
    %cst_209 = arith.constant dense<0.000000e+00> : vector<16x32xf32>
    %550 = tpu.matmul %548, %549, %cst_209 {dimension_numbers = #tpu.dot_dimension_numbers<[1], [0], [0], [1], [0, 0, 1, 1], [], []>} : vector<16x8xf32>, vector<8x32xf32>, vector<16x32xf32> -> vector<16x32xf32>
    %551 = arith.addf %532, %550 : vector<16x32xf32>
    %c1_210 = arith.constant 1 : index
    %c7_211 = arith.constant 7 : index
    %c0_212 = arith.constant 0 : index
    %552 = vector.load %arg6[%c1_210, %c7_211, %c0_212] : memref<2x16x64xf32, #tpu.memory_space<vmem>>, vector<1x1x32xf32>
    %553 = vector.shape_cast %552 : vector<1x1x32xf32> to vector<1x32xf32>
    %554 = vector.broadcast %553 : vector<1x32xf32> to vector<16x32xf32>
    %555 = arith.addf %551, %554 : vector<16x32xf32>
    %556 = arith.addf %555, %449 : vector<16x32xf32>
    %cst_213 = arith.constant dense<0.000000e+00> : vector<16xf32>
    %557 = vector.multi_reduction <add>, %556, %cst_213 [1] : vector<16x32xf32> to vector<16xf32>
    %558 = vector.shape_cast %557 : vector<16xf32> to vector<16x1xf32>
    %cst_214 = arith.constant 3.200000e+01 : f32
    %559 = vector.broadcast %cst_214 : f32 to vector<16x1xf32>
    %560 = arith.divf %558, %559 : vector<16x1xf32>
    %561 = vector.broadcast %560 : vector<16x1xf32> to vector<16x32xf32>
    %562 = arith.subf %556, %561 : vector<16x32xf32>
    %563 = arith.mulf %562, %562 : vector<16x32xf32>
    %cst_215 = arith.constant dense<0.000000e+00> : vector<16xf32>
    %564 = vector.multi_reduction <add>, %563, %cst_215 [1] : vector<16x32xf32> to vector<16xf32>
    %565 = vector.shape_cast %564 : vector<16xf32> to vector<16x1xf32>
    %cst_216 = arith.constant 3.200000e+01 : f32
    %566 = vector.broadcast %cst_216 : f32 to vector<16x1xf32>
    %567 = arith.divf %565, %566 : vector<16x1xf32>
    %568 = vector.broadcast %560 : vector<16x1xf32> to vector<16x32xf32>
    %569 = arith.subf %556, %568 : vector<16x32xf32>
    %cst_217 = arith.constant 9.99999974E-6 : f32
    %570 = vector.broadcast %cst_217 : f32 to vector<16x1xf32>
    %571 = arith.addf %567, %570 : vector<16x1xf32>
    %572 = math.rsqrt %571 : vector<16x1xf32>
    %573 = vector.broadcast %572 : vector<16x1xf32> to vector<16x32xf32>
    %574 = arith.mulf %569, %573 : vector<16x32xf32>
    %c1_218 = arith.constant 1 : index
    %c11_219 = arith.constant 11 : index
    %c0_220 = arith.constant 0 : index
    %575 = vector.load %arg6[%c1_218, %c11_219, %c0_220] : memref<2x16x64xf32, #tpu.memory_space<vmem>>, vector<1x1x32xf32>
    %576 = vector.shape_cast %575 : vector<1x1x32xf32> to vector<1x32xf32>
    %577 = vector.broadcast %576 : vector<1x32xf32> to vector<16x32xf32>
    %578 = arith.mulf %574, %577 : vector<16x32xf32>
    %c1_221 = arith.constant 1 : index
    %c12_222 = arith.constant 12 : index
    %c0_223 = arith.constant 0 : index
    %579 = vector.load %arg6[%c1_221, %c12_222, %c0_223] : memref<2x16x64xf32, #tpu.memory_space<vmem>>, vector<1x1x32xf32>
    %580 = vector.shape_cast %579 : vector<1x1x32xf32> to vector<1x32xf32>
    %581 = vector.broadcast %580 : vector<1x32xf32> to vector<16x32xf32>
    %582 = arith.addf %578, %581 : vector<16x32xf32>
    %c1_224 = arith.constant 1 : index
    %c0_225 = arith.constant 0 : index
    %c0_226 = arith.constant 0 : index
    %583 = vector.load %arg4[%c1_224, %c0_225, %c0_226] : memref<2x32x64xf32, #tpu.memory_space<vmem>>, vector<1x32x64xf32>
    %584 = vector.shape_cast %583 : vector<1x32x64xf32> to vector<32x64xf32>
    %cst_227 = arith.constant dense<0.000000e+00> : vector<16x64xf32>
    %585 = tpu.matmul %582, %584, %cst_227 {dimension_numbers = #tpu.dot_dimension_numbers<[1], [0], [0], [1], [0, 0, 1, 1], [], []>} : vector<16x32xf32>, vector<32x64xf32>, vector<16x64xf32> -> vector<16x64xf32>
    %c1_228 = arith.constant 1 : index
    %c15_229 = arith.constant 15 : index
    %c0_230 = arith.constant 0 : index
    %586 = vector.load %arg6[%c1_228, %c15_229, %c0_230] : memref<2x16x64xf32, #tpu.memory_space<vmem>>, vector<1x1x64xf32>
    %587 = vector.shape_cast %586 : vector<1x1x64xf32> to vector<1x64xf32>
    %588 = vector.broadcast %587 : vector<1x64xf32> to vector<16x64xf32>
    %589 = arith.addf %585, %588 : vector<16x64xf32>
    %cst_231 = arith.constant 0.000000e+00 : f32
    %590 = vector.broadcast %cst_231 : f32 to vector<16x64xf32>
    %591 = arith.maximumf %589, %590 : vector<16x64xf32>
    %c1_232 = arith.constant 1 : index
    %c0_233 = arith.constant 0 : index
    %c0_234 = arith.constant 0 : index
    %592 = vector.load %arg5[%c1_232, %c0_233, %c0_234] : memref<2x64x32xf32, #tpu.memory_space<vmem>>, vector<1x64x32xf32>
    %593 = vector.shape_cast %592 : vector<1x64x32xf32> to vector<64x32xf32>
    %cst_235 = arith.constant dense<0.000000e+00> : vector<16x32xf32>
    %594 = tpu.matmul %591, %593, %cst_235 {dimension_numbers = #tpu.dot_dimension_numbers<[1], [0], [0], [1], [0, 0, 1, 1], [], []>} : vector<16x64xf32>, vector<64x32xf32>, vector<16x32xf32> -> vector<16x32xf32>
    %c1_236 = arith.constant 1 : index
    %c8_237 = arith.constant 8 : index
    %c0_238 = arith.constant 0 : index
    %595 = vector.load %arg6[%c1_236, %c8_237, %c0_238] : memref<2x16x64xf32, #tpu.memory_space<vmem>>, vector<1x1x32xf32>
    %596 = vector.shape_cast %595 : vector<1x1x32xf32> to vector<1x32xf32>
    %597 = vector.broadcast %596 : vector<1x32xf32> to vector<16x32xf32>
    %598 = arith.addf %594, %597 : vector<16x32xf32>
    %599 = arith.addf %598, %582 : vector<16x32xf32>
    %cst_239 = arith.constant dense<0.000000e+00> : vector<16xf32>
    %600 = vector.multi_reduction <add>, %599, %cst_239 [1] : vector<16x32xf32> to vector<16xf32>
    %601 = vector.shape_cast %600 : vector<16xf32> to vector<16x1xf32>
    %cst_240 = arith.constant 3.200000e+01 : f32
    %602 = vector.broadcast %cst_240 : f32 to vector<16x1xf32>
    %603 = arith.divf %601, %602 : vector<16x1xf32>
    %604 = vector.broadcast %603 : vector<16x1xf32> to vector<16x32xf32>
    %605 = arith.subf %599, %604 : vector<16x32xf32>
    %606 = arith.mulf %605, %605 : vector<16x32xf32>
    %cst_241 = arith.constant dense<0.000000e+00> : vector<16xf32>
    %607 = vector.multi_reduction <add>, %606, %cst_241 [1] : vector<16x32xf32> to vector<16xf32>
    %608 = vector.shape_cast %607 : vector<16xf32> to vector<16x1xf32>
    %cst_242 = arith.constant 3.200000e+01 : f32
    %609 = vector.broadcast %cst_242 : f32 to vector<16x1xf32>
    %610 = arith.divf %608, %609 : vector<16x1xf32>
    %611 = vector.broadcast %603 : vector<16x1xf32> to vector<16x32xf32>
    %612 = arith.subf %599, %611 : vector<16x32xf32>
    %cst_243 = arith.constant 9.99999974E-6 : f32
    %613 = vector.broadcast %cst_243 : f32 to vector<16x1xf32>
    %614 = arith.addf %610, %613 : vector<16x1xf32>
    %615 = math.rsqrt %614 : vector<16x1xf32>
    %616 = vector.broadcast %615 : vector<16x1xf32> to vector<16x32xf32>
    %617 = arith.mulf %612, %616 : vector<16x32xf32>
    %c1_244 = arith.constant 1 : index
    %c13_245 = arith.constant 13 : index
    %c0_246 = arith.constant 0 : index
    %618 = vector.load %arg6[%c1_244, %c13_245, %c0_246] : memref<2x16x64xf32, #tpu.memory_space<vmem>>, vector<1x1x32xf32>
    %619 = vector.shape_cast %618 : vector<1x1x32xf32> to vector<1x32xf32>
    %620 = vector.broadcast %619 : vector<1x32xf32> to vector<16x32xf32>
    %621 = arith.mulf %617, %620 : vector<16x32xf32>
    %c1_247 = arith.constant 1 : index
    %c14_248 = arith.constant 14 : index
    %c0_249 = arith.constant 0 : index
    %622 = vector.load %arg6[%c1_247, %c14_248, %c0_249] : memref<2x16x64xf32, #tpu.memory_space<vmem>>, vector<1x1x32xf32>
    %623 = vector.shape_cast %622 : vector<1x1x32xf32> to vector<1x32xf32>
    %624 = vector.broadcast %623 : vector<1x32xf32> to vector<16x32xf32>
    %625 = arith.addf %621, %624 : vector<16x32xf32>
    %c1_250 = arith.constant 1 : index
    %c0_251 = arith.constant 0 : index
    %c0_252 = arith.constant 0 : index
    %626 = vector.load %arg7[%c1_250, %c0_251, %c0_252] : memref<2x16x32xf32, #tpu.memory_space<vmem>>, vector<1x16x32xf32>
    %627 = vector.shape_cast %626 : vector<1x16x32xf32> to vector<16x32xf32>
    %628 = vector.shape_cast %625 : vector<16x32xf32> to vector<1x16x32xf32>
    tpu.vector_store %arg7[%c1_250, %c0_251, %c0_252], %628 {strides = array<i32>} : memref<2x16x32xf32, #tpu.memory_space<vmem>>, vector<1x16x32xf32>,
    return
  }
  func.func @transform_0(%arg0: i32) -> (i32, i32, i32) {
    %c0_i32 = arith.constant 0 : i32
    %c0_i32_0 = arith.constant 0 : i32
    %c0_i32_1 = arith.constant 0 : i32
    %c0_i32_2 = arith.constant 0 : i32
    return %c0_i32, %c0_i32_0, %c0_i32_1 : i32, i32, i32
  }
  func.func @transform_1(%arg0: i32) -> (i32, i32) {
    %c0_i32 = arith.constant 0 : i32
    %c0_i32_0 = arith.constant 0 : i32
    %c0_i32_1 = arith.constant 0 : i32
    return %c0_i32, %c0_i32_0 : i32, i32
  }
  func.func @transform_2(%arg0: i32) -> (i32, i32, i32, i32) {
    %c0_i32 = arith.constant 0 : i32
    %c0_i32_0 = arith.constant 0 : i32
    %c0_i32_1 = arith.constant 0 : i32
    %c0_i32_2 = arith.constant 0 : i32
    %c0_i32_3 = arith.constant 0 : i32
    return %c0_i32, %c0_i32_0, %c0_i32_1, %c0_i32_2 : i32, i32, i32, i32
  }
  func.func @transform_3(%arg0: i32) -> (i32, i32, i32) {
    %c0_i32 = arith.constant 0 : i32
    %c0_i32_0 = arith.constant 0 : i32
    %c0_i32_1 = arith.constant 0 : i32
    %c0_i32_2 = arith.constant 0 : i32
    return %c0_i32, %c0_i32_0, %c0_i32_1 : i32, i32, i32
  }
  func.func @transform_4(%arg0: i32) -> (i32, i32, i32) {
    %c0_i32 = arith.constant 0 : i32
    %c0_i32_0 = arith.constant 0 : i32
    %c0_i32_1 = arith.constant 0 : i32
    %c0_i32_2 = arith.constant 0 : i32
    return %c0_i32, %c0_i32_0, %c0_i32_1 : i32, i32, i32
  }
  func.func @transform_5(%arg0: i32) -> (i32, i32, i32) {
    %c0_i32 = arith.constant 0 : i32
    %c0_i32_0 = arith.constant 0 : i32
    %c0_i32_1 = arith.constant 0 : i32
    %c0_i32_2 = arith.constant 0 : i32
    return %c0_i32, %c0_i32_0, %c0_i32_1 : i32, i32, i32
  }
  func.func @transform_6(%arg0: i32) -> (i32, i32, i32) {
    %c0_i32 = arith.constant 0 : i32
    %c0_i32_0 = arith.constant 0 : i32
    %c0_i32_1 = arith.constant 0 : i32
    %c0_i32_2 = arith.constant 0 : i32
    return %c0_i32, %c0_i32_0, %c0_i32_1 : i32, i32, i32
  }
}

</mosaic_0001>

<llo_original>
// kernel: transformer_decoder.1
$region0: #{transformer_decoder.1}
  #allocation0 [shape = 'u32[]', space=smem, size = 0x4, offset = 0x4, fixed_abs, tag = 'smem constant byte address 0x4 - core index']
  #allocation1 [shape = 'u32[72,128]{1,0:T(1,128)}', space=vmem, size = 0x9000, scoped, tag = 'internal scratch']
  %s0 = inlined_call_operand.hbm [shape: f32[2,16,32], index: 0, kind: input, shape index: {}]
  %s1 = inlined_call_operand.hbm [shape: f32[16,32], index: 1, kind: input, shape index: {}]
  %s2 = inlined_call_operand.vmem [shape: f32[2,2,32,128], index: 2, kind: input, shape index: {}]
  %s3 = inlined_call_operand.vmem [shape: f32[2,32,64], index: 3, kind: input, shape index: {}]
  %s4 = inlined_call_operand.vmem [shape: f32[2,64,32], index: 4, kind: input, shape index: {}]
  %s5 = inlined_call_operand.hbm [shape: f32[2,16,64], index: 5, kind: input, shape index: {}]
  %s6 = inlined_call_operand.hbm [shape: f32[2,16,32], index: 6, kind: output, shape index: {}]
  %s7 = sld [smem:[#allocation0]]
  $region46: #{transformer_decoder.1} parent=0
    _
  %s9 = ssub.s32 1, %s7
  %s10 = scalar_select 0, %s9, %s7
  $region1: #{transformer_decoder.1} parent=0
    #allocation2 [shape = 'u8[16384]{0}', space=vmem, size = 0x4000, scoped, tag = 'input window, operand 0, single buffered']
    #allocation3 [shape = 's32[1]{0}', space=sflag, size = 0x4, scoped, tag = 'scoped memory for transformer_decoder.1']
    #allocation4 [shape = 's32[1]{0}', space=sflag, size = 0x4, scoped, tag = 'scoped memory for transformer_decoder.1']
    #allocation5 [shape = 'u8[8192]{0}', space=vmem, size = 0x2000, scoped, tag = 'input window, operand 1, single buffered']
    #allocation6 [shape = 's32[1]{0}', space=sflag, size = 0x4, scoped, tag = 'scoped memory for transformer_decoder.1']
    #allocation7 [shape = 'u8[16384]{0}', space=vmem, size = 0x4000, scoped, tag = 'input window, operand 5, single buffered']
    #allocation8 [shape = 'u8[16384]{0}', space=vmem, size = 0x4000, scoped, tag = 'output window, operand 0, single buffered']
    %11 = vsyncpa [#allocation3], 0
    %12 = vsyncpa [#allocation6], 0
    %13 = vsyncpa [#allocation4], 0
    // Predicated region
    $region2: #{transformer_decoder.1} parent=1 // pred_check
      _
    $region3: #{transformer_decoder.1} parent=1 // pred_check_branch
      %15 = sbr.rel (0) target = $region5
    $region4: #{transformer_decoder.1} parent=1 // pred_region
      %17 = vsyncadd [#allocation3], 0
      %s18 = sshll.u32 %s0, 4
      %s19 = int_to_ptr.hbm [resolvable:$true] %s18
      %s20 = sshll.u32 [#allocation2], 4
      %s21 = int_to_ptr.vmem [resolvable:$true] %s20
      %26 = dma.hbm_to_vmem [thread:$0]  %s19, 512, %s21, [#allocation3], 128, 128, 8
    $region5: #{transformer_decoder.1} parent=1 // pred_fallthru
      _
    // Predicated region
    $region6: #{transformer_decoder.1} parent=1 // pred_check
      _
    $region7: #{transformer_decoder.1} parent=1 // pred_check_branch
      %28 = sbr.rel (0) target = $region9
    $region8: #{transformer_decoder.1} parent=1 // pred_region
      %30 = vsyncadd [#allocation6], 0
      %s31 = sshll.u32 %s1, 4
      %s32 = int_to_ptr.hbm [resolvable:$true] %s31
      %s33 = sshll.u32 [#allocation5], 4
      %s34 = int_to_ptr.vmem [resolvable:$true] %s33
      %39 = dma.hbm_to_vmem [thread:$0]  %s32, 256, %s34, [#allocation6], 128, 128, 8
    $region9: #{transformer_decoder.1} parent=1 // pred_fallthru
      _
    // Predicated region
    $region10: #{transformer_decoder.1} parent=1 // pred_check
      _
    $region11: #{transformer_decoder.1} parent=1 // pred_check_branch
      %41 = sbr.rel (0) target = $region13
    $region12: #{transformer_decoder.1} parent=1 // pred_region
      _
    $region13: #{transformer_decoder.1} parent=1 // pred_fallthru
      _
    // Predicated region
    $region14: #{transformer_decoder.1} parent=1 // pred_check
      _
    $region15: #{transformer_decoder.1} parent=1 // pred_check_branch
      %43 = sbr.rel (0) target = $region17
    $region16: #{transformer_decoder.1} parent=1 // pred_region
      _
    $region17: #{transformer_decoder.1} parent=1 // pred_fallthru
      _
    // Predicated region
    $region18: #{transformer_decoder.1} parent=1 // pred_check
      _
    $region19: #{transformer_decoder.1} parent=1 // pred_check_branch
      %45 = sbr.rel (0) target = $region21
    $region20: #{transformer_decoder.1} parent=1 // pred_region
      _
    $region21: #{transformer_decoder.1} parent=1 // pred_fallthru
      _
    // Predicated region
    $region22: #{transformer_decoder.1} parent=1 // pred_check
      _
    $region23: #{transformer_decoder.1} parent=1 // pred_check_branch
      %47 = sbr.rel (0) target = $region25
    $region24: #{transformer_decoder.1} parent=1 // pred_region
      %49 = vsyncadd [#allocation6], 0
      %s50 = sshll.u32 %s5, 4
      %s51 = int_to_ptr.hbm [resolvable:$true] %s50
      %s52 = sshll.u32 [#allocation7], 4
      %s53 = int_to_ptr.vmem [resolvable:$true] %s52
      %58 = dma.hbm_to_vmem [thread:$0]  %s51, 512, %s53, [#allocation6], 128, 128, 8
    $region25: #{transformer_decoder.1} parent=1 // pred_fallthru
      _
    // Predicated region
    $region26: #{transformer_decoder.1} parent=1 // pred_check
      _
    $region27: #{transformer_decoder.1} parent=1 // pred_check_branch
      %60 = sbr.rel (0) target = $region29
    $region28: #{transformer_decoder.1} parent=1 // pred_region
      %62 = dma.done [#allocation3], 512
    $region29: #{transformer_decoder.1} parent=1 // pred_fallthru
      _
    // Predicated region
    $region30: #{transformer_decoder.1} parent=1 // pred_check
      _
    $region31: #{transformer_decoder.1} parent=1 // pred_check_branch
      %64 = sbr.rel (0) target = $region33
    $region32: #{transformer_decoder.1} parent=1 // pred_region
      %66 = dma.done [#allocation6], 256
    $region33: #{transformer_decoder.1} parent=1 // pred_fallthru
      _
    // Predicated region
    $region34: #{transformer_decoder.1} parent=1 // pred_check
      _
    $region35: #{transformer_decoder.1} parent=1 // pred_check_branch
      %68 = sbr.rel (0) target = $region37
    $region36: #{transformer_decoder.1} parent=1 // pred_region
      %70 = dma.done [#allocation6], 512
    $region37: #{transformer_decoder.1} parent=1 // pred_fallthru
      _
    %v71 = vld [vmem:[#allocation5] sm:$0xff]
    %v72 = vld [vmem:[#allocation5 + $0x8] sm:$0xff]
    %v73 = vld [vmem:[#allocation2] sm:$0xff]
    %v74 = vld [vmem:[#allocation2 + $0x8] sm:$0xff]
    %v75 = vld [vmem:[%s2] sm:$0xff]
    %v76 = vld [vmem:[%s2 + $0x8] sm:$0xff]
    %v77 = vld [vmem:[%s2 + $0x10] sm:$0xff]
    %v78 = vld [vmem:[%s2 + $0x18] sm:$0xff]
    %v79 = vld [vmem:[#allocation7] sm:$0x1]
    %v80 = vperm.slane %v79, 0
    %vm81 = vcmask 261120
    %v83 = vsel %vm81, %v73, 0
    %v86 = vsel %vm81, %v74, 0
    %88 = vmatpush.msra.mxu0 0.0
    %89 = vmatpush.msra.mxu0 0.0
    %90 = vmatpush.msra.mxu0 0.0
    %91 = vmatpush.msra.mxu0 0.0
    %92 = vmatpush.msra.mxu0 0.0
    %93 = vmatpush.msra.mxu0 0.0
    %94 = vmatpush.msra.mxu0 0.0
    %95 = vmatpush.msra.mxu0 0.0
    %96 = vmatpush.msra.mxu0 0.0
    %97 = vmatpush.msra.mxu0 0.0
    %98 = vmatpush.msra.mxu0 0.0
    %99 = vmatpush.msra.mxu0 0.0
    %100 = vmatpush.msra.mxu0 %v78
    %101 = vmatpush.msra.mxu0 %v77
    %102 = vmatpush.msra.mxu0 %v76
    %103 = vmatpush.msra.mxu0 %v75
    %104 = vmatmul.f32.gmra.mxu0 %v83
    %v105 = vpop.f32.mrf.mxu0
    %v106 = vadd.f32 %v80, %v105
    %107 = vmatmul.f32.gmra.mxu0 %v86
    %v108 = vpop.f32.mrf.mxu0
    %v109 = vadd.f32 %v80, %v108
    %110 = vdwg.mxu0
    %115 = vrot.lane.b32.xlu0 %v75, 96
    %v116 = vpop.permute.xlu0 %115
    %117 = vrot.lane.b32.xlu0 %v76, 96
    %v118 = vpop.permute.xlu0 %117
    %119 = vrot.lane.b32.xlu0 %v77, 96
    %v120 = vpop.permute.xlu0 %119
    %121 = vrot.lane.b32.xlu0 %v78, 96
    %v122 = vpop.permute.xlu0 %121
    %v128 = vsel %vm81, %v71, 0
    %v131 = vsel %vm81, %v72, 0
    %133 = vmatpush.msra.mxu0 0.0
    %134 = vmatpush.msra.mxu0 0.0
    %135 = vmatpush.msra.mxu0 0.0
    %136 = vmatpush.msra.mxu0 0.0
    %137 = vmatpush.msra.mxu0 0.0
    %138 = vmatpush.msra.mxu0 0.0
    %139 = vmatpush.msra.mxu0 0.0
    %140 = vmatpush.msra.mxu0 0.0
    %141 = vmatpush.msra.mxu0 0.0
    %142 = vmatpush.msra.mxu0 0.0
    %143 = vmatpush.msra.mxu0 0.0
    %144 = vmatpush.msra.mxu0 0.0
    %145 = vmatpush.msra.mxu0 %v122
    %146 = vmatpush.msra.mxu0 %v120
    %147 = vmatpush.msra.mxu0 %v118
    %148 = vmatpush.msra.mxu0 %v116
    %149 = vmatmul.f32.gmra.mxu0 %v128
    %v150 = vpop.f32.mrf.mxu0
    %v151 = vadd.f32 0.0, %v150
    %152 = vmatmul.f32.gmra.mxu0 %v131
    %v153 = vpop.f32.mrf.mxu0
    %v154 = vadd.f32 0.0, %v153
    %155 = vdwg.mxu0
    %v156 = vld [vmem:[#allocation7 + $0x1] sm:$0x1]
    %v157 = vperm.slane %v156, 0
    %v158 = vadd.f32 %v151, %v157
    %v159 = vadd.f32 %v154, %v157
    %v160 = vld [vmem:[#allocation7 + $0x2] sm:$0x1]
    %v161 = vperm.slane %v160, 0
    %163 = vrot.lane.b32.xlu0 %v161, 32
    %v164 = vpop.permute.xlu0 %163
    %v166 = vadd.f32 %v151, %v164
    %v167 = vadd.f32 %v154, %v164
    %v168 = vmul.f32 %v106, 0.35355338
    %v169 = vmul.f32 %v109, 0.35355338
    %vm170 = vcmask 64512
    %v172 = vsel %vm170, %v168, 0
    %v175 = vsel %vm170, %v158, 0
    %177 = vmatpush.xpose.msra.mxu0 0.0
    %178 = vmatpush.xpose.msra.mxu0 0.0
    %179 = vmatpush.xpose.msra.mxu0 0.0
    %180 = vmatpush.xpose.msra.mxu0 0.0
    %181 = vmatpush.xpose.msra.mxu0 0.0
    %182 = vmatpush.xpose.msra.mxu0 0.0
    %183 = vmatpush.xpose.msra.mxu0 0.0
    %184 = vmatpush.xpose.msra.mxu0 0.0
    %185 = vmatpush.xpose.msra.mxu0 0.0
    %186 = vmatpush.xpose.msra.mxu0 0.0
    %187 = vmatpush.xpose.msra.mxu0 0.0
    %188 = vmatpush.xpose.msra.mxu0 0.0
    %189 = vmatpush.xpose.msra.mxu0 0.0
    %190 = vmatpush.xpose.msra.mxu0 0.0
    %191 = vmatpush.xpose.msra.mxu0 0.0
    %192 = vmatpush.xpose.msra.mxu0 %v175
    %193 = vmatmul.f32.gmra.mxu0 %v172
    %v194 = vpop.f32.mrf.mxu0
    %v195 = vadd.f32 0.0, %v194
    %196 = vdwg.mxu0
    %v198 = vsel %vm170, %v169, 0
    %v201 = vsel %vm170, %v159, 0
    %203 = vmatpush.xpose.msra.mxu0 0.0
    %204 = vmatpush.xpose.msra.mxu0 0.0
    %205 = vmatpush.xpose.msra.mxu0 0.0
    %206 = vmatpush.xpose.msra.mxu0 0.0
    %207 = vmatpush.xpose.msra.mxu0 0.0
    %208 = vmatpush.xpose.msra.mxu0 0.0
    %209 = vmatpush.xpose.msra.mxu0 0.0
    %210 = vmatpush.xpose.msra.mxu0 0.0
    %211 = vmatpush.xpose.msra.mxu0 0.0
    %212 = vmatpush.xpose.msra.mxu0 0.0
    %213 = vmatpush.xpose.msra.mxu0 0.0
    %214 = vmatpush.xpose.msra.mxu0 0.0
    %215 = vmatpush.xpose.msra.mxu0 0.0
    %216 = vmatpush.xpose.msra.mxu0 0.0
    %217 = vmatpush.xpose.msra.mxu0 0.0
    %218 = vmatpush.xpose.msra.mxu0 %v201
    %219 = vmatmul.f32.gmra.mxu0 %v198
    %v220 = vpop.f32.mrf.mxu0
    %v221 = vadd.f32 0.0, %v220
    %222 = vdwg.mxu0
    %v223 = vsel %vm170, %v195, -inf
    %224 = vmax.xlane.f32.xlu0 %v223
    %v225 = vpop.xlane.xlu0 %224
    %v226 = vsel %vm170, %v221, -inf
    %227 = vmax.xlane.f32.xlu0 %v226
    %v228 = vpop.xlane.xlu0 %227
    %v229 = vsub.f32 %v195, %v225
    %v230 = vsub.f32 %v221, %v228
    %v231 = vmul.f32 %v229, 1.442695
    %v232 = vpow.pop %v231
    %v233 = vmul.f32 %v230, 1.442695
    %v234 = vpow.pop %v233
    %v235 = vsel %vm170, %v232, 0.0
    %236 = vadd.xlane.f32.xlu0 %v235
    %v237 = vpop.xlane.xlu0 %236
    %v238 = vsel %vm170, %v234, 0.0
    %239 = vadd.xlane.f32.xlu0 %v238
    %v240 = vpop.xlane.xlu0 %239
    %v241 = vrcp.pop %v237
    %v242 = vrcp.pop %v240
    %v243 = vmul.f32 %v232, %v241
    %v244 = vmul.f32 %v234, %v242
    %246 = vrot.lane.b32.xlu0 %v166, 96
    %v247 = vpop.permute.xlu0 %246
    %v250 = vsel %vm170, %v243, 0
    %252 = vmatpush.msra.mxu0 0.0
    %253 = vmatpush.msra.mxu0 0.0
    %254 = vmatpush.msra.mxu0 0.0
    %255 = vmatpush.msra.mxu0 0.0
    %256 = vmatpush.msra.mxu0 0.0
    %257 = vmatpush.msra.mxu0 0.0
    %258 = vmatpush.msra.mxu0 0.0
    %259 = vmatpush.msra.mxu0 0.0
    %260 = vmatpush.msra.mxu0 0.0
    %261 = vmatpush.msra.mxu0 0.0
    %262 = vmatpush.msra.mxu0 0.0
    %263 = vmatpush.msra.mxu0 0.0
    %264 = vmatpush.msra.mxu0 0.0
    %265 = vmatpush.msra.mxu0 0.0
    %266 = vmatpush.msra.mxu0 0.0
    %267 = vmatpush.msra.mxu0 %v247
    %268 = vmatmul.f32.gmra.mxu0 %v250
    %v269 = vpop.f32.mrf.mxu0
    %v270 = vadd.f32 0.0, %v269
    %271 = vdwg.mxu0
    %273 = vrot.lane.b32.xlu0 %v167, 96
    %v274 = vpop.permute.xlu0 %273
    %v277 = vsel %vm170, %v244, 0
    %279 = vmatpush.msra.mxu0 0.0
    %280 = vmatpush.msra.mxu0 0.0
    %281 = vmatpush.msra.mxu0 0.0
    %282 = vmatpush.msra.mxu0 0.0
    %283 = vmatpush.msra.mxu0 0.0
    %284 = vmatpush.msra.mxu0 0.0
    %285 = vmatpush.msra.mxu0 0.0
    %286 = vmatpush.msra.mxu0 0.0
    %287 = vmatpush.msra.mxu0 0.0
    %288 = vmatpush.msra.mxu0 0.0
    %289 = vmatpush.msra.mxu0 0.0
    %290 = vmatpush.msra.mxu0 0.0
    %291 = vmatpush.msra.mxu0 0.0
    %292 = vmatpush.msra.mxu0 0.0
    %293 = vmatpush.msra.mxu0 0.0
    %294 = vmatpush.msra.mxu0 %v274
    %295 = vmatmul.f32.gmra.mxu0 %v277
    %v296 = vpop.f32.mrf.mxu0
    %v297 = vadd.f32 0.0, %v296
    %298 = vdwg.mxu0
    %299 = vrot.lane.b32.xlu0 %v168, 120
    %v300 = vpop.permute.xlu0 %299
    %301 = vrot.lane.b32.xlu0 %v158, 120
    %v302 = vpop.permute.xlu0 %301
    %v303 = vsel %vm170, %v300, 0
    %v305 = vsel %vm170, %v302, 0
    %307 = vmatpush.xpose.msra.mxu0 0.0
    %308 = vmatpush.xpose.msra.mxu0 0.0
    %309 = vmatpush.xpose.msra.mxu0 0.0
    %310 = vmatpush.xpose.msra.mxu0 0.0
    %311 = vmatpush.xpose.msra.mxu0 0.0
    %312 = vmatpush.xpose.msra.mxu0 0.0
    %313 = vmatpush.xpose.msra.mxu0 0.0
    %314 = vmatpush.xpose.msra.mxu0 0.0
    %315 = vmatpush.xpose.msra.mxu0 0.0
    %316 = vmatpush.xpose.msra.mxu0 0.0
    %317 = vmatpush.xpose.msra.mxu0 0.0
    %318 = vmatpush.xpose.msra.mxu0 0.0
    %319 = vmatpush.xpose.msra.mxu0 0.0
    %320 = vmatpush.xpose.msra.mxu0 0.0
    %321 = vmatpush.xpose.msra.mxu0 0.0
    %322 = vmatpush.xpose.msra.mxu0 %v305
    %323 = vmatmul.f32.gmra.mxu0 %v303
    %v324 = vpop.f32.mrf.mxu0
    %v325 = vadd.f32 0.0, %v324
    %326 = vdwg.mxu0
    %327 = vrot.lane.b32.xlu0 %v169, 120
    %v328 = vpop.permute.xlu0 %327
    %329 = vrot.lane.b32.xlu0 %v159, 120
    %v330 = vpop.permute.xlu0 %329
    %v331 = vsel %vm170, %v328, 0
    %v333 = vsel %vm170, %v330, 0
    %335 = vmatpush.xpose.msra.mxu0 0.0
    %336 = vmatpush.xpose.msra.mxu0 0.0
    %337 = vmatpush.xpose.msra.mxu0 0.0
    %338 = vmatpush.xpose.msra.mxu0 0.0
    %339 = vmatpush.xpose.msra.mxu0 0.0
    %340 = vmatpush.xpose.msra.mxu0 0.0
    %341 = vmatpush.xpose.msra.mxu0 0.0
    %342 = vmatpush.xpose.msra.mxu0 0.0
    %343 = vmatpush.xpose.msra.mxu0 0.0
    %344 = vmatpush.xpose.msra.mxu0 0.0
    %345 = vmatpush.xpose.msra.mxu0 0.0
    %346 = vmatpush.xpose.msra.mxu0 0.0
    %347 = vmatpush.xpose.msra.mxu0 0.0
    %348 = vmatpush.xpose.msra.mxu0 0.0
    %349 = vmatpush.xpose.msra.mxu0 0.0
    %350 = vmatpush.xpose.msra.mxu0 %v333
    %351 = vmatmul.f32.gmra.mxu0 %v331
    %v352 = vpop.f32.mrf.mxu0
    %v353 = vadd.f32 0.0, %v352
    %354 = vdwg.mxu0
    %v355 = vsel %vm170, %v325, -inf
    %356 = vmax.xlane.f32.xlu0 %v355
    %v357 = vpop.xlane.xlu0 %356
    %v358 = vsel %vm170, %v353, -inf
    %359 = vmax.xlane.f32.xlu0 %v358
    %v360 = vpop.xlane.xlu0 %359
    %v361 = vsub.f32 %v325, %v357
    %v362 = vsub.f32 %v353, %v360
    %v363 = vmul.f32 %v361, 1.442695
    %v364 = vpow.pop %v363
    %v365 = vmul.f32 %v362, 1.442695
    %v366 = vpow.pop %v365
    %v367 = vsel %vm170, %v364, 0.0
    %368 = vadd.xlane.f32.xlu0 %v367
    %v369 = vpop.xlane.xlu0 %368
    %v370 = vsel %vm170, %v366, 0.0
    %371 = vadd.xlane.f32.xlu0 %v370
    %v372 = vpop.xlane.xlu0 %371
    %v373 = vrcp.pop %v369
    %v374 = vrcp.pop %v372
    %v375 = vmul.f32 %v364, %v373
    %v376 = vmul.f32 %v366, %v374
    %377 = vrot.lane.b32.xlu0 %v166, 88
    %v378 = vpop.permute.xlu0 %377
    %v381 = vsel %vm170, %v375, 0
    %383 = vmatpush.msra.mxu0 0.0
    %384 = vmatpush.msra.mxu0 0.0
    %385 = vmatpush.msra.mxu0 0.0
    %386 = vmatpush.msra.mxu0 0.0
    %387 = vmatpush.msra.mxu0 0.0
    %388 = vmatpush.msra.mxu0 0.0
    %389 = vmatpush.msra.mxu0 0.0
    %390 = vmatpush.msra.mxu0 0.0
    %391 = vmatpush.msra.mxu0 0.0
    %392 = vmatpush.msra.mxu0 0.0
    %393 = vmatpush.msra.mxu0 0.0
    %394 = vmatpush.msra.mxu0 0.0
    %395 = vmatpush.msra.mxu0 0.0
    %396 = vmatpush.msra.mxu0 0.0
    %397 = vmatpush.msra.mxu0 0.0
    %398 = vmatpush.msra.mxu0 %v378
    %399 = vmatmul.f32.gmra.mxu0 %v381
    %v400 = vpop.f32.mrf.mxu0
    %v401 = vadd.f32 0.0, %v400
    %402 = vdwg.mxu0
    %403 = vrot.lane.b32.xlu0 %v167, 88
    %v404 = vpop.permute.xlu0 %403
    %v407 = vsel %vm170, %v376, 0
    %409 = vmatpush.msra.mxu0 0.0
    %410 = vmatpush.msra.mxu0 0.0
    %411 = vmatpush.msra.mxu0 0.0
    %412 = vmatpush.msra.mxu0 0.0
    %413 = vmatpush.msra.mxu0 0.0
    %414 = vmatpush.msra.mxu0 0.0
    %415 = vmatpush.msra.mxu0 0.0
    %416 = vmatpush.msra.mxu0 0.0
    %417 = vmatpush.msra.mxu0 0.0
    %418 = vmatpush.msra.mxu0 0.0
    %419 = vmatpush.msra.mxu0 0.0
    %420 = vmatpush.msra.mxu0 0.0
    %421 = vmatpush.msra.mxu0 0.0
    %422 = vmatpush.msra.mxu0 0.0
    %423 = vmatpush.msra.mxu0 0.0
    %424 = vmatpush.msra.mxu0 %v404
    %425 = vmatmul.f32.gmra.mxu0 %v407
    %v426 = vpop.f32.mrf.mxu0
    %v427 = vadd.f32 0.0, %v426
    %428 = vdwg.mxu0
    %429 = vrot.lane.b32.xlu0 %v76, 32
    %v430 = vpop.permute.xlu0 %429
    %v433 = vsel %vm170, %v401, 0
    %v436 = vsel %vm170, %v427, 0
    %438 = vmatpush.msra.mxu0 0.0
    %439 = vmatpush.msra.mxu0 0.0
    %440 = vmatpush.msra.mxu0 0.0
    %441 = vmatpush.msra.mxu0 0.0
    %442 = vmatpush.msra.mxu0 0.0
    %443 = vmatpush.msra.mxu0 0.0
    %444 = vmatpush.msra.mxu0 0.0
    %445 = vmatpush.msra.mxu0 0.0
    %446 = vmatpush.msra.mxu0 0.0
    %447 = vmatpush.msra.mxu0 0.0
    %448 = vmatpush.msra.mxu0 0.0
    %449 = vmatpush.msra.mxu0 0.0
    %450 = vmatpush.msra.mxu0 0.0
    %451 = vmatpush.msra.mxu0 0.0
    %452 = vmatpush.msra.mxu0 0.0
    %453 = vmatpush.msra.mxu0 %v430
    %454 = vmatmul.f32.gmra.mxu0 %v433
    %v455 = vpop.f32.mrf.mxu0
    %v456 = vadd.f32 0.0, %v455
    %457 = vmatmul.f32.gmra.mxu0 %v436
    %v458 = vpop.f32.mrf.mxu0
    %v459 = vadd.f32 0.0, %v458
    %460 = vdwg.mxu0
    %461 = vrot.lane.b32.xlu0 %v75, 32
    %v462 = vpop.permute.xlu0 %461
    %v465 = vsel %vm170, %v270, 0
    %v468 = vsel %vm170, %v297, 0
    %470 = vmatpush.msra.mxu0 0.0
    %471 = vmatpush.msra.mxu0 0.0
    %472 = vmatpush.msra.mxu0 0.0
    %473 = vmatpush.msra.mxu0 0.0
    %474 = vmatpush.msra.mxu0 0.0
    %475 = vmatpush.msra.mxu0 0.0
    %476 = vmatpush.msra.mxu0 0.0
    %477 = vmatpush.msra.mxu0 0.0
    %478 = vmatpush.msra.mxu0 0.0
    %479 = vmatpush.msra.mxu0 0.0
    %480 = vmatpush.msra.mxu0 0.0
    %481 = vmatpush.msra.mxu0 0.0
    %482 = vmatpush.msra.mxu0 0.0
    %483 = vmatpush.msra.mxu0 0.0
    %484 = vmatpush.msra.mxu0 0.0
    %485 = vmatpush.msra.mxu0 %v462
    %486 = vmatmul.f32.gmra.mxu0 %v465
    %v487 = vpop.f32.mrf.mxu0
    %v488 = vadd.f32 %v456, %v487
    %489 = vmatmul.f32.gmra.mxu0 %v468
    %v490 = vpop.f32.mrf.mxu0
    %v491 = vadd.f32 %v459, %v490
    %492 = vdwg.mxu0
    %493 = vrot.lane.b32.xlu0 %v168, 112
    %v494 = vpop.permute.xlu0 %493
    %495 = vrot.lane.b32.xlu0 %v158, 112
    %v496 = vpop.permute.xlu0 %495
    %v497 = vsel %vm170, %v494, 0
    %v499 = vsel %vm170, %v496, 0
    %501 = vmatpush.xpose.msra.mxu0 0.0
    %502 = vmatpush.xpose.msra.mxu0 0.0
    %503 = vmatpush.xpose.msra.mxu0 0.0
    %504 = vmatpush.xpose.msra.mxu0 0.0
    %505 = vmatpush.xpose.msra.mxu0 0.0
    %506 = vmatpush.xpose.msra.mxu0 0.0
    %507 = vmatpush.xpose.msra.mxu0 0.0
    %508 = vmatpush.xpose.msra.mxu0 0.0
    %509 = vmatpush.xpose.msra.mxu0 0.0
    %510 = vmatpush.xpose.msra.mxu0 0.0
    %511 = vmatpush.xpose.msra.mxu0 0.0
    %512 = vmatpush.xpose.msra.mxu0 0.0
    %513 = vmatpush.xpose.msra.mxu0 0.0
    %514 = vmatpush.xpose.msra.mxu0 0.0
    %515 = vmatpush.xpose.msra.mxu0 0.0
    %516 = vmatpush.xpose.msra.mxu0 %v499
    %517 = vmatmul.f32.gmra.mxu0 %v497
    %v518 = vpop.f32.mrf.mxu0
    %v519 = vadd.f32 0.0, %v518
    %520 = vdwg.mxu0
    %521 = vrot.lane.b32.xlu0 %v169, 112
    %v522 = vpop.permute.xlu0 %521
    %523 = vrot.lane.b32.xlu0 %v159, 112
    %v524 = vpop.permute.xlu0 %523
    %v525 = vsel %vm170, %v522, 0
    %v527 = vsel %vm170, %v524, 0
    %529 = vmatpush.xpose.msra.mxu0 0.0
    %530 = vmatpush.xpose.msra.mxu0 0.0
    %531 = vmatpush.xpose.msra.mxu0 0.0
    %532 = vmatpush.xpose.msra.mxu0 0.0
    %533 = vmatpush.xpose.msra.mxu0 0.0
    %534 = vmatpush.xpose.msra.mxu0 0.0
    %535 = vmatpush.xpose.msra.mxu0 0.0
    %536 = vmatpush.xpose.msra.mxu0 0.0
    %537 = vmatpush.xpose.msra.mxu0 0.0
    %538 = vmatpush.xpose.msra.mxu0 0.0
    %539 = vmatpush.xpose.msra.mxu0 0.0
    %540 = vmatpush.xpose.msra.mxu0 0.0
    %541 = vmatpush.xpose.msra.mxu0 0.0
    %542 = vmatpush.xpose.msra.mxu0 0.0
    %543 = vmatpush.xpose.msra.mxu0 0.0
    %544 = vmatpush.xpose.msra.mxu0 %v527
    %545 = vmatmul.f32.gmra.mxu0 %v525
    %v546 = vpop.f32.mrf.mxu0
    %v547 = vadd.f32 0.0, %v546
    %548 = vdwg.mxu0
    %v549 = vsel %vm170, %v519, -inf
    %550 = vmax.xlane.f32.xlu0 %v549
    %v551 = vpop.xlane.xlu0 %550
    %v552 = vsel %vm170, %v547, -inf
    %553 = vmax.xlane.f32.xlu0 %v552
    %v554 = vpop.xlane.xlu0 %553
    %v555 = vsub.f32 %v519, %v551
    %v556 = vsub.f32 %v547, %v554
    %v557 = vmul.f32 %v555, 1.442695
    %v558 = vpow.pop %v557
    %v559 = vmul.f32 %v556, 1.442695
    %v560 = vpow.pop %v559
    %v561 = vsel %vm170, %v558, 0.0
    %562 = vadd.xlane.f32.xlu0 %v561
    %v563 = vpop.xlane.xlu0 %562
    %v564 = vsel %vm170, %v560, 0.0
    %565 = vadd.xlane.f32.xlu0 %v564
    %v566 = vpop.xlane.xlu0 %565
    %v567 = vrcp.pop %v563
    %v568 = vrcp.pop %v566
    %v569 = vmul.f32 %v558, %v567
    %v570 = vmul.f32 %v560, %v568
    %571 = vrot.lane.b32.xlu0 %v166, 80
    %v572 = vpop.permute.xlu0 %571
    %v575 = vsel %vm170, %v569, 0
    %577 = vmatpush.msra.mxu0 0.0
    %578 = vmatpush.msra.mxu0 0.0
    %579 = vmatpush.msra.mxu0 0.0
    %580 = vmatpush.msra.mxu0 0.0
    %581 = vmatpush.msra.mxu0 0.0
    %582 = vmatpush.msra.mxu0 0.0
    %583 = vmatpush.msra.mxu0 0.0
    %584 = vmatpush.msra.mxu0 0.0
    %585 = vmatpush.msra.mxu0 0.0
    %586 = vmatpush.msra.mxu0 0.0
    %587 = vmatpush.msra.mxu0 0.0
    %588 = vmatpush.msra.mxu0 0.0
    %589 = vmatpush.msra.mxu0 0.0
    %590 = vmatpush.msra.mxu0 0.0
    %591 = vmatpush.msra.mxu0 0.0
    %592 = vmatpush.msra.mxu0 %v572
    %593 = vmatmul.f32.gmra.mxu0 %v575
    %v594 = vpop.f32.mrf.mxu0
    %v595 = vadd.f32 0.0, %v594
    %596 = vdwg.mxu0
    %597 = vrot.lane.b32.xlu0 %v167, 80
    %v598 = vpop.permute.xlu0 %597
    %v601 = vsel %vm170, %v570, 0
    %603 = vmatpush.msra.mxu0 0.0
    %604 = vmatpush.msra.mxu0 0.0
    %605 = vmatpush.msra.mxu0 0.0
    %606 = vmatpush.msra.mxu0 0.0
    %607 = vmatpush.msra.mxu0 0.0
    %608 = vmatpush.msra.mxu0 0.0
    %609 = vmatpush.msra.mxu0 0.0
    %610 = vmatpush.msra.mxu0 0.0
    %611 = vmatpush.msra.mxu0 0.0
    %612 = vmatpush.msra.mxu0 0.0
    %613 = vmatpush.msra.mxu0 0.0
    %614 = vmatpush.msra.mxu0 0.0
    %615 = vmatpush.msra.mxu0 0.0
    %616 = vmatpush.msra.mxu0 0.0
    %617 = vmatpush.msra.mxu0 0.0
    %618 = vmatpush.msra.mxu0 %v598
    %619 = vmatmul.f32.gmra.mxu0 %v601
    %v620 = vpop.f32.mrf.mxu0
    %v621 = vadd.f32 0.0, %v620
    %622 = vdwg.mxu0
    %623 = vrot.lane.b32.xlu0 %v77, 32
    %v624 = vpop.permute.xlu0 %623
    %v627 = vsel %vm170, %v595, 0
    %v630 = vsel %vm170, %v621, 0
    %632 = vmatpush.msra.mxu0 0.0
    %633 = vmatpush.msra.mxu0 0.0
    %634 = vmatpush.msra.mxu0 0.0
    %635 = vmatpush.msra.mxu0 0.0
    %636 = vmatpush.msra.mxu0 0.0
    %637 = vmatpush.msra.mxu0 0.0
    %638 = vmatpush.msra.mxu0 0.0
    %639 = vmatpush.msra.mxu0 0.0
    %640 = vmatpush.msra.mxu0 0.0
    %641 = vmatpush.msra.mxu0 0.0
    %642 = vmatpush.msra.mxu0 0.0
    %643 = vmatpush.msra.mxu0 0.0
    %644 = vmatpush.msra.mxu0 0.0
    %645 = vmatpush.msra.mxu0 0.0
    %646 = vmatpush.msra.mxu0 0.0
    %647 = vmatpush.msra.mxu0 %v624
    %648 = vmatmul.f32.gmra.mxu0 %v627
    %v649 = vpop.f32.mrf.mxu0
    %v650 = vadd.f32 0.0, %v649
    %651 = vmatmul.f32.gmra.mxu0 %v630
    %v652 = vpop.f32.mrf.mxu0
    %v653 = vadd.f32 0.0, %v652
    %654 = vdwg.mxu0
    %v655 = vadd.f32 %v488, %v650
    %v656 = vadd.f32 %v491, %v653
    %657 = vrot.lane.b32.xlu0 %v168, 104
    %v658 = vpop.permute.xlu0 %657
    %659 = vrot.lane.b32.xlu0 %v158, 104
    %v660 = vpop.permute.xlu0 %659
    %v661 = vsel %vm170, %v658, 0
    %v663 = vsel %vm170, %v660, 0
    %665 = vmatpush.xpose.msra.mxu0 0.0
    %666 = vmatpush.xpose.msra.mxu0 0.0
    %667 = vmatpush.xpose.msra.mxu0 0.0
    %668 = vmatpush.xpose.msra.mxu0 0.0
    %669 = vmatpush.xpose.msra.mxu0 0.0
    %670 = vmatpush.xpose.msra.mxu0 0.0
    %671 = vmatpush.xpose.msra.mxu0 0.0
    %672 = vmatpush.xpose.msra.mxu0 0.0
    %673 = vmatpush.xpose.msra.mxu0 0.0
    %674 = vmatpush.xpose.msra.mxu0 0.0
    %675 = vmatpush.xpose.msra.mxu0 0.0
    %676 = vmatpush.xpose.msra.mxu0 0.0
    %677 = vmatpush.xpose.msra.mxu0 0.0
    %678 = vmatpush.xpose.msra.mxu0 0.0
    %679 = vmatpush.xpose.msra.mxu0 0.0
    %680 = vmatpush.xpose.msra.mxu0 %v663
    %681 = vmatmul.f32.gmra.mxu0 %v661
    %v682 = vpop.f32.mrf.mxu0
    %v683 = vadd.f32 0.0, %v682
    %684 = vdwg.mxu0
    %685 = vrot.lane.b32.xlu0 %v169, 104
    %v686 = vpop.permute.xlu0 %685
    %687 = vrot.lane.b32.xlu0 %v159, 104
    %v688 = vpop.permute.xlu0 %687
    %v689 = vsel %vm170, %v686, 0
    %v691 = vsel %vm170, %v688, 0
    %693 = vmatpush.xpose.msra.mxu0 0.0
    %694 = vmatpush.xpose.msra.mxu0 0.0
    %695 = vmatpush.xpose.msra.mxu0 0.0
    %696 = vmatpush.xpose.msra.mxu0 0.0
    %697 = vmatpush.xpose.msra.mxu0 0.0
    %698 = vmatpush.xpose.msra.mxu0 0.0
    %699 = vmatpush.xpose.msra.mxu0 0.0
    %700 = vmatpush.xpose.msra.mxu0 0.0
    %701 = vmatpush.xpose.msra.mxu0 0.0
    %702 = vmatpush.xpose.msra.mxu0 0.0
    %703 = vmatpush.xpose.msra.mxu0 0.0
    %704 = vmatpush.xpose.msra.mxu0 0.0
    %705 = vmatpush.xpose.msra.mxu0 0.0
    %706 = vmatpush.xpose.msra.mxu0 0.0
    %707 = vmatpush.xpose.msra.mxu0 0.0
    %708 = vmatpush.xpose.msra.mxu0 %v691
    %709 = vmatmul.f32.gmra.mxu0 %v689
    %v710 = vpop.f32.mrf.mxu0
    %v711 = vadd.f32 0.0, %v710
    %712 = vdwg.mxu0
    %v713 = vsel %vm170, %v683, -inf
    %714 = vmax.xlane.f32.xlu0 %v713
    %v715 = vpop.xlane.xlu0 %714
    %v716 = vsel %vm170, %v711, -inf
    %717 = vmax.xlane.f32.xlu0 %v716
    %v718 = vpop.xlane.xlu0 %717
    %v719 = vsub.f32 %v683, %v715
    %v720 = vsub.f32 %v711, %v718
    %v721 = vmul.f32 %v719, 1.442695
    %v722 = vpow.pop %v721
    %v723 = vmul.f32 %v720, 1.442695
    %v724 = vpow.pop %v723
    %v725 = vsel %vm170, %v722, 0.0
    %726 = vadd.xlane.f32.xlu0 %v725
    %v727 = vpop.xlane.xlu0 %726
    %v728 = vsel %vm170, %v724, 0.0
    %729 = vadd.xlane.f32.xlu0 %v728
    %v730 = vpop.xlane.xlu0 %729
    %v731 = vrcp.pop %v727
    %v732 = vrcp.pop %v730
    %v733 = vmul.f32 %v722, %v731
    %v734 = vmul.f32 %v724, %v732
    %735 = vrot.lane.b32.xlu0 %v166, 72
    %v736 = vpop.permute.xlu0 %735
    %v739 = vsel %vm170, %v733, 0
    %741 = vmatpush.msra.mxu0 0.0
    %742 = vmatpush.msra.mxu0 0.0
    %743 = vmatpush.msra.mxu0 0.0
    %744 = vmatpush.msra.mxu0 0.0
    %745 = vmatpush.msra.mxu0 0.0
    %746 = vmatpush.msra.mxu0 0.0
    %747 = vmatpush.msra.mxu0 0.0
    %748 = vmatpush.msra.mxu0 0.0
    %749 = vmatpush.msra.mxu0 0.0
    %750 = vmatpush.msra.mxu0 0.0
    %751 = vmatpush.msra.mxu0 0.0
    %752 = vmatpush.msra.mxu0 0.0
    %753 = vmatpush.msra.mxu0 0.0
    %754 = vmatpush.msra.mxu0 0.0
    %755 = vmatpush.msra.mxu0 0.0
    %756 = vmatpush.msra.mxu0 %v736
    %757 = vmatmul.f32.gmra.mxu0 %v739
    %v758 = vpop.f32.mrf.mxu0
    %v759 = vadd.f32 0.0, %v758
    %760 = vdwg.mxu0
    %761 = vrot.lane.b32.xlu0 %v167, 72
    %v762 = vpop.permute.xlu0 %761
    %v765 = vsel %vm170, %v734, 0
    %767 = vmatpush.msra.mxu0 0.0
    %768 = vmatpush.msra.mxu0 0.0
    %769 = vmatpush.msra.mxu0 0.0
    %770 = vmatpush.msra.mxu0 0.0
    %771 = vmatpush.msra.mxu0 0.0
    %772 = vmatpush.msra.mxu0 0.0
    %773 = vmatpush.msra.mxu0 0.0
    %774 = vmatpush.msra.mxu0 0.0
    %775 = vmatpush.msra.mxu0 0.0
    %776 = vmatpush.msra.mxu0 0.0
    %777 = vmatpush.msra.mxu0 0.0
    %778 = vmatpush.msra.mxu0 0.0
    %779 = vmatpush.msra.mxu0 0.0
    %780 = vmatpush.msra.mxu0 0.0
    %781 = vmatpush.msra.mxu0 0.0
    %782 = vmatpush.msra.mxu0 %v762
    %783 = vmatmul.f32.gmra.mxu0 %v765
    %v784 = vpop.f32.mrf.mxu0
    %v785 = vadd.f32 0.0, %v784
    %786 = vdwg.mxu0
    %787 = vrot.lane.b32.xlu0 %v78, 32
    %v788 = vpop.permute.xlu0 %787
    %v791 = vsel %vm170, %v759, 0
    %v794 = vsel %vm170, %v785, 0
    %796 = vmatpush.msra.mxu0 0.0
    %797 = vmatpush.msra.mxu0 0.0
    %798 = vmatpush.msra.mxu0 0.0
    %799 = vmatpush.msra.mxu0 0.0
    %800 = vmatpush.msra.mxu0 0.0
    %801 = vmatpush.msra.mxu0 0.0
    %802 = vmatpush.msra.mxu0 0.0
    %803 = vmatpush.msra.mxu0 0.0
    %804 = vmatpush.msra.mxu0 0.0
    %805 = vmatpush.msra.mxu0 0.0
    %806 = vmatpush.msra.mxu0 0.0
    %807 = vmatpush.msra.mxu0 0.0
    %808 = vmatpush.msra.mxu0 0.0
    %809 = vmatpush.msra.mxu0 0.0
    %810 = vmatpush.msra.mxu0 0.0
    %811 = vmatpush.msra.mxu0 %v788
    %812 = vmatmul.f32.gmra.mxu0 %v791
    %v813 = vpop.f32.mrf.mxu0
    %v814 = vadd.f32 0.0, %v813
    %815 = vmatmul.f32.gmra.mxu0 %v794
    %v816 = vpop.f32.mrf.mxu0
    %v817 = vadd.f32 0.0, %v816
    %818 = vdwg.mxu0
    %v819 = vadd.f32 %v655, %v814
    %v820 = vadd.f32 %v656, %v817
    %v821 = vld [vmem:[#allocation7 + $0x3] sm:$0x1]
    %v822 = vperm.slane %v821, 0
    %v823 = vadd.f32 %v819, %v822
    %v824 = vadd.f32 %v820, %v822
    %v825 = vadd.f32 %v823, %v73
    %v826 = vadd.f32 %v824, %v74
    %v827 = vsel %vm81, %v825, 0.0
    %828 = vadd.xlane.f32.xlu0 %v827
    %v829 = vpop.xlane.xlu0 %828
    %v830 = vsel %vm81, %v826, 0.0
    %831 = vadd.xlane.f32.xlu0 %v830
    %v832 = vpop.xlane.xlu0 %831
    %v833 = vrcp.pop 32.0
    %v834 = vmul.f32 32.0, %v833
    %v835 = vsub.f32 1.0, %v834
    %v836 = vmul.f32 %v833, %v835
    %v837 = vadd.f32 %v833, %v836
    %vm838 = vweird.f32 %v833
    %v839 = vsel %vm838, %v833, %v837
    %v840 = vmul.f32 %v829, %v839
    %v841 = vmul.f32 %v832, %v839
    %v842 = vsub.f32 %v825, %v840
    %v843 = vsub.f32 %v826, %v841
    %v844 = vmul.f32 %v842, %v842
    %v845 = vmul.f32 %v843, %v843
    %v846 = vsel %vm81, %v844, 0.0
    %847 = vadd.xlane.f32.xlu0 %v846
    %v848 = vpop.xlane.xlu0 %847
    %v849 = vsel %vm81, %v845, 0.0
    %850 = vadd.xlane.f32.xlu0 %v849
    %v851 = vpop.xlane.xlu0 %850
    %v852 = vmul.f32 %v848, %v839
    %v853 = vmul.f32 %v851, %v839
    %v854 = vadd.f32 %v852, 1e-05
    %v855 = vadd.f32 %v853, 1e-05
    %v856 = vrsqrt.pop %v854
    %v857 = vmul.f32 %v856, %v854
    %v858 = vmul.f32 %v857, %v856
    %v859 = vmul.f32 0.5, %v858
    %v860 = vsub.f32 1.5, %v859
    %v861 = vmul.f32 %v856, %v860
    %vm862 = vweird.f32 %v854
    %vm863 = vweird.f32 %v856
    %vm864 = vmor %vm862, %vm863
    %v865 = vsel %vm864, %v856, %v861
    %v866 = vrsqrt.pop %v855
    %v867 = vmul.f32 %v866, %v855
    %v868 = vmul.f32 %v867, %v866
    %v869 = vmul.f32 0.5, %v868
    %v870 = vsub.f32 1.5, %v869
    %v871 = vmul.f32 %v866, %v870
    %vm872 = vweird.f32 %v855
    %vm873 = vweird.f32 %v866
    %vm874 = vmor %vm872, %vm873
    %v875 = vsel %vm874, %v866, %v871
    %v876 = vmul.f32 %v842, %v865
    %v877 = vmul.f32 %v843, %v875
    %v878 = vld [vmem:[#allocation7 + $0x9] sm:$0x1]
    %v879 = vperm.slane %v878, 0
    %v880 = vmul.f32 %v876, %v879
    %v881 = vmul.f32 %v877, %v879
    %v882 = vld [vmem:[#allocation7 + $0xa] sm:$0x1]
    %v883 = vperm.slane %v882, 0
    %v884 = vadd.f32 %v880, %v883
    %v885 = vadd.f32 %v881, %v883
    %s886 = scalar_lea.vmem %s2, 32
    %v887 = vld [vmem:[%s886] sm:$0xff]
    %v888 = vld [vmem:[%s886 + $0x8] sm:$0xff]
    %v889 = vld [vmem:[%s886 + $0x10] sm:$0xff]
    %v890 = vld [vmem:[%s886 + $0x18] sm:$0xff]
    %v891 = vld [vmem:[#allocation7 + $0x4] sm:$0x1]
    %v892 = vperm.slane %v891, 0
    %v894 = vsel %vm81, %v884, 0
    %v897 = vsel %vm81, %v885, 0
    %899 = vmatpush.msra.mxu0 0.0
    %900 = vmatpush.msra.mxu0 0.0
    %901 = vmatpush.msra.mxu0 0.0
    %902 = vmatpush.msra.mxu0 0.0
    %903 = vmatpush.msra.mxu0 0.0
    %904 = vmatpush.msra.mxu0 0.0
    %905 = vmatpush.msra.mxu0 0.0
    %906 = vmatpush.msra.mxu0 0.0
    %907 = vmatpush.msra.mxu0 0.0
    %908 = vmatpush.msra.mxu0 0.0
    %909 = vmatpush.msra.mxu0 0.0
    %910 = vmatpush.msra.mxu0 0.0
    %911 = vmatpush.msra.mxu0 %v890
    %912 = vmatpush.msra.mxu0 %v889
    %913 = vmatpush.msra.mxu0 %v888
    %914 = vmatpush.msra.mxu0 %v887
    %915 = vmatmul.f32.gmra.mxu0 %v894
    %v916 = vpop.f32.mrf.mxu0
    %v917 = vadd.f32 %v892, %v916
    %918 = vmatmul.f32.gmra.mxu0 %v897
    %v919 = vpop.f32.mrf.mxu0
    %v920 = vadd.f32 %v892, %v919
    %921 = vdwg.mxu0
    %926 = vrot.lane.b32.xlu0 %v887, 96
    %v927 = vpop.permute.xlu0 %926
    %928 = vrot.lane.b32.xlu0 %v888, 96
    %v929 = vpop.permute.xlu0 %928
    %930 = vrot.lane.b32.xlu0 %v889, 96
    %v931 = vpop.permute.xlu0 %930
    %932 = vrot.lane.b32.xlu0 %v890, 96
    %v933 = vpop.permute.xlu0 %932
    %938 = vmatpush.msra.mxu0 0.0
    %939 = vmatpush.msra.mxu0 0.0
    %940 = vmatpush.msra.mxu0 0.0
    %941 = vmatpush.msra.mxu0 0.0
    %942 = vmatpush.msra.mxu0 0.0
    %943 = vmatpush.msra.mxu0 0.0
    %944 = vmatpush.msra.mxu0 0.0
    %945 = vmatpush.msra.mxu0 0.0
    %946 = vmatpush.msra.mxu0 0.0
    %947 = vmatpush.msra.mxu0 0.0
    %948 = vmatpush.msra.mxu0 0.0
    %949 = vmatpush.msra.mxu0 0.0
    %950 = vmatpush.msra.mxu0 %v933
    %951 = vmatpush.msra.mxu0 %v931
    %952 = vmatpush.msra.mxu0 %v929
    %953 = vmatpush.msra.mxu0 %v927
    %954 = vmatmul.f32.gmra.mxu0 %v128
    %v955 = vpop.f32.mrf.mxu0
    %v956 = vadd.f32 0.0, %v955
    %957 = vmatmul.f32.gmra.mxu0 %v131
    %v958 = vpop.f32.mrf.mxu0
    %v959 = vadd.f32 0.0, %v958
    %960 = vdwg.mxu0
    %v961 = vld [vmem:[#allocation7 + $0x5] sm:$0x1]
    %v962 = vperm.slane %v961, 0
    %v963 = vadd.f32 %v956, %v962
    %v964 = vadd.f32 %v959, %v962
    %v965 = vld [vmem:[#allocation7 + $0x6] sm:$0x1]
    %v966 = vperm.slane %v965, 0
    %968 = vrot.lane.b32.xlu0 %v966, 32
    %v969 = vpop.permute.xlu0 %968
    %v971 = vadd.f32 %v956, %v969
    %v972 = vadd.f32 %v959, %v969
    %v973 = vmul.f32 %v917, 0.35355338
    %v974 = vmul.f32 %v920, 0.35355338
    %v976 = vsel %vm170, %v973, 0
    %v979 = vsel %vm170, %v963, 0
    %981 = vmatpush.xpose.msra.mxu0 0.0
    %982 = vmatpush.xpose.msra.mxu0 0.0
    %983 = vmatpush.xpose.msra.mxu0 0.0
    %984 = vmatpush.xpose.msra.mxu0 0.0
    %985 = vmatpush.xpose.msra.mxu0 0.0
    %986 = vmatpush.xpose.msra.mxu0 0.0
    %987 = vmatpush.xpose.msra.mxu0 0.0
    %988 = vmatpush.xpose.msra.mxu0 0.0
    %989 = vmatpush.xpose.msra.mxu0 0.0
    %990 = vmatpush.xpose.msra.mxu0 0.0
    %991 = vmatpush.xpose.msra.mxu0 0.0
    %992 = vmatpush.xpose.msra.mxu0 0.0
    %993 = vmatpush.xpose.msra.mxu0 0.0
    %994 = vmatpush.xpose.msra.mxu0 0.0
    %995 = vmatpush.xpose.msra.mxu0 0.0
    %996 = vmatpush.xpose.msra.mxu0 %v979
    %997 = vmatmul.f32.gmra.mxu0 %v976
    %v998 = vpop.f32.mrf.mxu0
    %v999 = vadd.f32 0.0, %v998
    %1000 = vdwg.mxu0
    %v1002 = vsel %vm170, %v974, 0
    %v1005 = vsel %vm170, %v964, 0
    %1007 = vmatpush.xpose.msra.mxu0 0.0
    %1008 = vmatpush.xpose.msra.mxu0 0.0
    %1009 = vmatpush.xpose.msra.mxu0 0.0
    %1010 = vmatpush.xpose.msra.mxu0 0.0
    %1011 = vmatpush.xpose.msra.mxu0 0.0
    %1012 = vmatpush.xpose.msra.mxu0 0.0
    %1013 = vmatpush.xpose.msra.mxu0 0.0
    %1014 = vmatpush.xpose.msra.mxu0 0.0
    %1015 = vmatpush.xpose.msra.mxu0 0.0
    %1016 = vmatpush.xpose.msra.mxu0 0.0
    %1017 = vmatpush.xpose.msra.mxu0 0.0
    %1018 = vmatpush.xpose.msra.mxu0 0.0
    %1019 = vmatpush.xpose.msra.mxu0 0.0
    %1020 = vmatpush.xpose.msra.mxu0 0.0
    %1021 = vmatpush.xpose.msra.mxu0 0.0
    %1022 = vmatpush.xpose.msra.mxu0 %v1005
    %1023 = vmatmul.f32.gmra.mxu0 %v1002
    %v1024 = vpop.f32.mrf.mxu0
    %v1025 = vadd.f32 0.0, %v1024
    %1026 = vdwg.mxu0
    %v1027 = vsel %vm170, %v999, -inf
    %1028 = vmax.xlane.f32.xlu0 %v1027
    %v1029 = vpop.xlane.xlu0 %1028
    %v1030 = vsel %vm170, %v1025, -inf
    %1031 = vmax.xlane.f32.xlu0 %v1030
    %v1032 = vpop.xlane.xlu0 %1031
    %v1033 = vsub.f32 %v999, %v1029
    %v1034 = vsub.f32 %v1025, %v1032
    %v1035 = vmul.f32 %v1033, 1.442695
    %v1036 = vpow.pop %v1035
    %v1037 = vmul.f32 %v1034, 1.442695
    %v1038 = vpow.pop %v1037
    %v1039 = vsel %vm170, %v1036, 0.0
    %1040 = vadd.xlane.f32.xlu0 %v1039
    %v1041 = vpop.xlane.xlu0 %1040
    %v1042 = vsel %vm170, %v1038, 0.0
    %1043 = vadd.xlane.f32.xlu0 %v1042
    %v1044 = vpop.xlane.xlu0 %1043
    %v1045 = vrcp.pop %v1041
    %v1046 = vrcp.pop %v1044
    %v1047 = vmul.f32 %v1036, %v1045
    %v1048 = vmul.f32 %v1038, %v1046
    %1050 = vrot.lane.b32.xlu0 %v971, 96
    %v1051 = vpop.permute.xlu0 %1050
    %v1054 = vsel %vm170, %v1047, 0
    %1056 = vmatpush.msra.mxu0 0.0
    %1057 = vmatpush.msra.mxu0 0.0
    %1058 = vmatpush.msra.mxu0 0.0
    %1059 = vmatpush.msra.mxu0 0.0
    %1060 = vmatpush.msra.mxu0 0.0
    %1061 = vmatpush.msra.mxu0 0.0
    %1062 = vmatpush.msra.mxu0 0.0
    %1063 = vmatpush.msra.mxu0 0.0
    %1064 = vmatpush.msra.mxu0 0.0
    %1065 = vmatpush.msra.mxu0 0.0
    %1066 = vmatpush.msra.mxu0 0.0
    %1067 = vmatpush.msra.mxu0 0.0
    %1068 = vmatpush.msra.mxu0 0.0
    %1069 = vmatpush.msra.mxu0 0.0
    %1070 = vmatpush.msra.mxu0 0.0
    %1071 = vmatpush.msra.mxu0 %v1051
    %1072 = vmatmul.f32.gmra.mxu0 %v1054
    %v1073 = vpop.f32.mrf.mxu0
    %v1074 = vadd.f32 0.0, %v1073
    %1075 = vdwg.mxu0
    %1077 = vrot.lane.b32.xlu0 %v972, 96
    %v1078 = vpop.permute.xlu0 %1077
    %v1081 = vsel %vm170, %v1048, 0
    %1083 = vmatpush.msra.mxu0 0.0
    %1084 = vmatpush.msra.mxu0 0.0
    %1085 = vmatpush.msra.mxu0 0.0
    %1086 = vmatpush.msra.mxu0 0.0
    %1087 = vmatpush.msra.mxu0 0.0
    %1088 = vmatpush.msra.mxu0 0.0
    %1089 = vmatpush.msra.mxu0 0.0
    %1090 = vmatpush.msra.mxu0 0.0
    %1091 = vmatpush.msra.mxu0 0.0
    %1092 = vmatpush.msra.mxu0 0.0
    %1093 = vmatpush.msra.mxu0 0.0
    %1094 = vmatpush.msra.mxu0 0.0
    %1095 = vmatpush.msra.mxu0 0.0
    %1096 = vmatpush.msra.mxu0 0.0
    %1097 = vmatpush.msra.mxu0 0.0
    %1098 = vmatpush.msra.mxu0 %v1078
    %1099 = vmatmul.f32.gmra.mxu0 %v1081
    %v1100 = vpop.f32.mrf.mxu0
    %v1101 = vadd.f32 0.0, %v1100
    %1102 = vdwg.mxu0
    %1103 = vrot.lane.b32.xlu0 %v973, 120
    %v1104 = vpop.permute.xlu0 %1103
    %1105 = vrot.lane.b32.xlu0 %v963, 120
    %v1106 = vpop.permute.xlu0 %1105
    %v1107 = vsel %vm170, %v1104, 0
    %v1109 = vsel %vm170, %v1106, 0
    %1111 = vmatpush.xpose.msra.mxu0 0.0
    %1112 = vmatpush.xpose.msra.mxu0 0.0
    %1113 = vmatpush.xpose.msra.mxu0 0.0
    %1114 = vmatpush.xpose.msra.mxu0 0.0
    %1115 = vmatpush.xpose.msra.mxu0 0.0
    %1116 = vmatpush.xpose.msra.mxu0 0.0
    %1117 = vmatpush.xpose.msra.mxu0 0.0
    %1118 = vmatpush.xpose.msra.mxu0 0.0
    %1119 = vmatpush.xpose.msra.mxu0 0.0
    %1120 = vmatpush.xpose.msra.mxu0 0.0
    %1121 = vmatpush.xpose.msra.mxu0 0.0
    %1122 = vmatpush.xpose.msra.mxu0 0.0
    %1123 = vmatpush.xpose.msra.mxu0 0.0
    %1124 = vmatpush.xpose.msra.mxu0 0.0
    %1125 = vmatpush.xpose.msra.mxu0 0.0
    %1126 = vmatpush.xpose.msra.mxu0 %v1109
    %1127 = vmatmul.f32.gmra.mxu0 %v1107
    %v1128 = vpop.f32.mrf.mxu0
    %v1129 = vadd.f32 0.0, %v1128
    %1130 = vdwg.mxu0
    %1131 = vrot.lane.b32.xlu0 %v974, 120
    %v1132 = vpop.permute.xlu0 %1131
    %1133 = vrot.lane.b32.xlu0 %v964, 120
    %v1134 = vpop.permute.xlu0 %1133
    %v1135 = vsel %vm170, %v1132, 0
    %v1137 = vsel %vm170, %v1134, 0
    %1139 = vmatpush.xpose.msra.mxu0 0.0
    %1140 = vmatpush.xpose.msra.mxu0 0.0
    %1141 = vmatpush.xpose.msra.mxu0 0.0
    %1142 = vmatpush.xpose.msra.mxu0 0.0
    %1143 = vmatpush.xpose.msra.mxu0 0.0
    %1144 = vmatpush.xpose.msra.mxu0 0.0
    %1145 = vmatpush.xpose.msra.mxu0 0.0
    %1146 = vmatpush.xpose.msra.mxu0 0.0
    %1147 = vmatpush.xpose.msra.mxu0 0.0
    %1148 = vmatpush.xpose.msra.mxu0 0.0
    %1149 = vmatpush.xpose.msra.mxu0 0.0
    %1150 = vmatpush.xpose.msra.mxu0 0.0
    %1151 = vmatpush.xpose.msra.mxu0 0.0
    %1152 = vmatpush.xpose.msra.mxu0 0.0
    %1153 = vmatpush.xpose.msra.mxu0 0.0
    %1154 = vmatpush.xpose.msra.mxu0 %v1137
    %1155 = vmatmul.f32.gmra.mxu0 %v1135
    %v1156 = vpop.f32.mrf.mxu0
    %v1157 = vadd.f32 0.0, %v1156
    %1158 = vdwg.mxu0
    %v1159 = vsel %vm170, %v1129, -inf
    %1160 = vmax.xlane.f32.xlu0 %v1159
    %v1161 = vpop.xlane.xlu0 %1160
    %v1162 = vsel %vm170, %v1157, -inf
    %1163 = vmax.xlane.f32.xlu0 %v1162
    %v1164 = vpop.xlane.xlu0 %1163
    %v1165 = vsub.f32 %v1129, %v1161
    %v1166 = vsub.f32 %v1157, %v1164
    %v1167 = vmul.f32 %v1165, 1.442695
    %v1168 = vpow.pop %v1167
    %v1169 = vmul.f32 %v1166, 1.442695
    %v1170 = vpow.pop %v1169
    %v1171 = vsel %vm170, %v1168, 0.0
    %1172 = vadd.xlane.f32.xlu0 %v1171
    %v1173 = vpop.xlane.xlu0 %1172
    %v1174 = vsel %vm170, %v1170, 0.0
    %1175 = vadd.xlane.f32.xlu0 %v1174
    %v1176 = vpop.xlane.xlu0 %1175
    %v1177 = vrcp.pop %v1173
    %v1178 = vrcp.pop %v1176
    %v1179 = vmul.f32 %v1168, %v1177
    %v1180 = vmul.f32 %v1170, %v1178
    %1181 = vrot.lane.b32.xlu0 %v971, 88
    %v1182 = vpop.permute.xlu0 %1181
    %v1185 = vsel %vm170, %v1179, 0
    %1187 = vmatpush.msra.mxu0 0.0
    %1188 = vmatpush.msra.mxu0 0.0
    %1189 = vmatpush.msra.mxu0 0.0
    %1190 = vmatpush.msra.mxu0 0.0
    %1191 = vmatpush.msra.mxu0 0.0
    %1192 = vmatpush.msra.mxu0 0.0
    %1193 = vmatpush.msra.mxu0 0.0
    %1194 = vmatpush.msra.mxu0 0.0
    %1195 = vmatpush.msra.mxu0 0.0
    %1196 = vmatpush.msra.mxu0 0.0
    %1197 = vmatpush.msra.mxu0 0.0
    %1198 = vmatpush.msra.mxu0 0.0
    %1199 = vmatpush.msra.mxu0 0.0
    %1200 = vmatpush.msra.mxu0 0.0
    %1201 = vmatpush.msra.mxu0 0.0
    %1202 = vmatpush.msra.mxu0 %v1182
    %1203 = vmatmul.f32.gmra.mxu0 %v1185
    %v1204 = vpop.f32.mrf.mxu0
    %v1205 = vadd.f32 0.0, %v1204
    %1206 = vdwg.mxu0
    %1207 = vrot.lane.b32.xlu0 %v972, 88
    %v1208 = vpop.permute.xlu0 %1207
    %v1211 = vsel %vm170, %v1180, 0
    %1213 = vmatpush.msra.mxu0 0.0
    %1214 = vmatpush.msra.mxu0 0.0
    %1215 = vmatpush.msra.mxu0 0.0
    %1216 = vmatpush.msra.mxu0 0.0
    %1217 = vmatpush.msra.mxu0 0.0
    %1218 = vmatpush.msra.mxu0 0.0
    %1219 = vmatpush.msra.mxu0 0.0
    %1220 = vmatpush.msra.mxu0 0.0
    %1221 = vmatpush.msra.mxu0 0.0
    %1222 = vmatpush.msra.mxu0 0.0
    %1223 = vmatpush.msra.mxu0 0.0
    %1224 = vmatpush.msra.mxu0 0.0
    %1225 = vmatpush.msra.mxu0 0.0
    %1226 = vmatpush.msra.mxu0 0.0
    %1227 = vmatpush.msra.mxu0 0.0
    %1228 = vmatpush.msra.mxu0 %v1208
    %1229 = vmatmul.f32.gmra.mxu0 %v1211
    %v1230 = vpop.f32.mrf.mxu0
    %v1231 = vadd.f32 0.0, %v1230
    %1232 = vdwg.mxu0
    %1233 = vrot.lane.b32.xlu0 %v888, 32
    %v1234 = vpop.permute.xlu0 %1233
    %v1237 = vsel %vm170, %v1205, 0
    %v1240 = vsel %vm170, %v1231, 0
    %1242 = vmatpush.msra.mxu0 0.0
    %1243 = vmatpush.msra.mxu0 0.0
    %1244 = vmatpush.msra.mxu0 0.0
    %1245 = vmatpush.msra.mxu0 0.0
    %1246 = vmatpush.msra.mxu0 0.0
    %1247 = vmatpush.msra.mxu0 0.0
    %1248 = vmatpush.msra.mxu0 0.0
    %1249 = vmatpush.msra.mxu0 0.0
    %1250 = vmatpush.msra.mxu0 0.0
    %1251 = vmatpush.msra.mxu0 0.0
    %1252 = vmatpush.msra.mxu0 0.0
    %1253 = vmatpush.msra.mxu0 0.0
    %1254 = vmatpush.msra.mxu0 0.0
    %1255 = vmatpush.msra.mxu0 0.0
    %1256 = vmatpush.msra.mxu0 0.0
    %1257 = vmatpush.msra.mxu0 %v1234
    %1258 = vmatmul.f32.gmra.mxu0 %v1237
    %v1259 = vpop.f32.mrf.mxu0
    %v1260 = vadd.f32 0.0, %v1259
    %1261 = vmatmul.f32.gmra.mxu0 %v1240
    %v1262 = vpop.f32.mrf.mxu0
    %v1263 = vadd.f32 0.0, %v1262
    %1264 = vdwg.mxu0
    %1265 = vrot.lane.b32.xlu0 %v887, 32
    %v1266 = vpop.permute.xlu0 %1265
    %v1269 = vsel %vm170, %v1074, 0
    %v1272 = vsel %vm170, %v1101, 0
    %1274 = vmatpush.msra.mxu0 0.0
    %1275 = vmatpush.msra.mxu0 0.0
    %1276 = vmatpush.msra.mxu0 0.0
    %1277 = vmatpush.msra.mxu0 0.0
    %1278 = vmatpush.msra.mxu0 0.0
    %1279 = vmatpush.msra.mxu0 0.0
    %1280 = vmatpush.msra.mxu0 0.0
    %1281 = vmatpush.msra.mxu0 0.0
    %1282 = vmatpush.msra.mxu0 0.0
    %1283 = vmatpush.msra.mxu0 0.0
    %1284 = vmatpush.msra.mxu0 0.0
    %1285 = vmatpush.msra.mxu0 0.0
    %1286 = vmatpush.msra.mxu0 0.0
    %1287 = vmatpush.msra.mxu0 0.0
    %1288 = vmatpush.msra.mxu0 0.0
    %1289 = vmatpush.msra.mxu0 %v1266
    %1290 = vmatmul.f32.gmra.mxu0 %v1269
    %v1291 = vpop.f32.mrf.mxu0
    %v1292 = vadd.f32 %v1260, %v1291
    %1293 = vmatmul.f32.gmra.mxu0 %v1272
    %v1294 = vpop.f32.mrf.mxu0
    %v1295 = vadd.f32 %v1263, %v1294
    %1296 = vdwg.mxu0
    %1297 = vrot.lane.b32.xlu0 %v973, 112
    %v1298 = vpop.permute.xlu0 %1297
    %1299 = vrot.lane.b32.xlu0 %v963, 112
    %v1300 = vpop.permute.xlu0 %1299
    %v1301 = vsel %vm170, %v1298, 0
    %v1303 = vsel %vm170, %v1300, 0
    %1305 = vmatpush.xpose.msra.mxu0 0.0
    %1306 = vmatpush.xpose.msra.mxu0 0.0
    %1307 = vmatpush.xpose.msra.mxu0 0.0
    %1308 = vmatpush.xpose.msra.mxu0 0.0
    %1309 = vmatpush.xpose.msra.mxu0 0.0
    %1310 = vmatpush.xpose.msra.mxu0 0.0
    %1311 = vmatpush.xpose.msra.mxu0 0.0
    %1312 = vmatpush.xpose.msra.mxu0 0.0
    %1313 = vmatpush.xpose.msra.mxu0 0.0
    %1314 = vmatpush.xpose.msra.mxu0 0.0
    %1315 = vmatpush.xpose.msra.mxu0 0.0
    %1316 = vmatpush.xpose.msra.mxu0 0.0
    %1317 = vmatpush.xpose.msra.mxu0 0.0
    %1318 = vmatpush.xpose.msra.mxu0 0.0
    %1319 = vmatpush.xpose.msra.mxu0 0.0
    %1320 = vmatpush.xpose.msra.mxu0 %v1303
    %1321 = vmatmul.f32.gmra.mxu0 %v1301
    %v1322 = vpop.f32.mrf.mxu0
    %v1323 = vadd.f32 0.0, %v1322
    %1324 = vdwg.mxu0
    %1325 = vrot.lane.b32.xlu0 %v974, 112
    %v1326 = vpop.permute.xlu0 %1325
    %1327 = vrot.lane.b32.xlu0 %v964, 112
    %v1328 = vpop.permute.xlu0 %1327
    %v1329 = vsel %vm170, %v1326, 0
    %v1331 = vsel %vm170, %v1328, 0
    %1333 = vmatpush.xpose.msra.mxu0 0.0
    %1334 = vmatpush.xpose.msra.mxu0 0.0
    %1335 = vmatpush.xpose.msra.mxu0 0.0
    %1336 = vmatpush.xpose.msra.mxu0 0.0
    %1337 = vmatpush.xpose.msra.mxu0 0.0
    %1338 = vmatpush.xpose.msra.mxu0 0.0
    %1339 = vmatpush.xpose.msra.mxu0 0.0
    %1340 = vmatpush.xpose.msra.mxu0 0.0
    %1341 = vmatpush.xpose.msra.mxu0 0.0
    %1342 = vmatpush.xpose.msra.mxu0 0.0
    %1343 = vmatpush.xpose.msra.mxu0 0.0
    %1344 = vmatpush.xpose.msra.mxu0 0.0
    %1345 = vmatpush.xpose.msra.mxu0 0.0
    %1346 = vmatpush.xpose.msra.mxu0 0.0
    %1347 = vmatpush.xpose.msra.mxu0 0.0
    %1348 = vmatpush.xpose.msra.mxu0 %v1331
    %1349 = vmatmul.f32.gmra.mxu0 %v1329
    %v1350 = vpop.f32.mrf.mxu0
    %v1351 = vadd.f32 0.0, %v1350
    %1352 = vdwg.mxu0
    %v1353 = vsel %vm170, %v1323, -inf
    %1354 = vmax.xlane.f32.xlu0 %v1353
    %v1355 = vpop.xlane.xlu0 %1354
    %v1356 = vsel %vm170, %v1351, -inf
    %1357 = vmax.xlane.f32.xlu0 %v1356
    %v1358 = vpop.xlane.xlu0 %1357
    %v1359 = vsub.f32 %v1323, %v1355
    %v1360 = vsub.f32 %v1351, %v1358
    %v1361 = vmul.f32 %v1359, 1.442695
    %v1362 = vpow.pop %v1361
    %v1363 = vmul.f32 %v1360, 1.442695
    %v1364 = vpow.pop %v1363
    %v1365 = vsel %vm170, %v1362, 0.0
    %1366 = vadd.xlane.f32.xlu0 %v1365
    %v1367 = vpop.xlane.xlu0 %1366
    %v1368 = vsel %vm170, %v1364, 0.0
    %1369 = vadd.xlane.f32.xlu0 %v1368
    %v1370 = vpop.xlane.xlu0 %1369
    %v1371 = vrcp.pop %v1367
    %v1372 = vrcp.pop %v1370
    %v1373 = vmul.f32 %v1362, %v1371
    %v1374 = vmul.f32 %v1364, %v1372
    %1375 = vrot.lane.b32.xlu0 %v971, 80
    %v1376 = vpop.permute.xlu0 %1375
    %v1379 = vsel %vm170, %v1373, 0
    %1381 = vmatpush.msra.mxu0 0.0
    %1382 = vmatpush.msra.mxu0 0.0
    %1383 = vmatpush.msra.mxu0 0.0
    %1384 = vmatpush.msra.mxu0 0.0
    %1385 = vmatpush.msra.mxu0 0.0
    %1386 = vmatpush.msra.mxu0 0.0
    %1387 = vmatpush.msra.mxu0 0.0
    %1388 = vmatpush.msra.mxu0 0.0
    %1389 = vmatpush.msra.mxu0 0.0
    %1390 = vmatpush.msra.mxu0 0.0
    %1391 = vmatpush.msra.mxu0 0.0
    %1392 = vmatpush.msra.mxu0 0.0
    %1393 = vmatpush.msra.mxu0 0.0
    %1394 = vmatpush.msra.mxu0 0.0
    %1395 = vmatpush.msra.mxu0 0.0
    %1396 = vmatpush.msra.mxu0 %v1376
    %1397 = vmatmul.f32.gmra.mxu0 %v1379
    %v1398 = vpop.f32.mrf.mxu0
    %v1399 = vadd.f32 0.0, %v1398
    %1400 = vdwg.mxu0
    %1401 = vrot.lane.b32.xlu0 %v972, 80
    %v1402 = vpop.permute.xlu0 %1401
    %v1405 = vsel %vm170, %v1374, 0
    %1407 = vmatpush.msra.mxu0 0.0
    %1408 = vmatpush.msra.mxu0 0.0
    %1409 = vmatpush.msra.mxu0 0.0
    %1410 = vmatpush.msra.mxu0 0.0
    %1411 = vmatpush.msra.mxu0 0.0
    %1412 = vmatpush.msra.mxu0 0.0
    %1413 = vmatpush.msra.mxu0 0.0
    %1414 = vmatpush.msra.mxu0 0.0
    %1415 = vmatpush.msra.mxu0 0.0
    %1416 = vmatpush.msra.mxu0 0.0
    %1417 = vmatpush.msra.mxu0 0.0
    %1418 = vmatpush.msra.mxu0 0.0
    %1419 = vmatpush.msra.mxu0 0.0
    %1420 = vmatpush.msra.mxu0 0.0
    %1421 = vmatpush.msra.mxu0 0.0
    %1422 = vmatpush.msra.mxu0 %v1402
    %1423 = vmatmul.f32.gmra.mxu0 %v1405
    %v1424 = vpop.f32.mrf.mxu0
    %v1425 = vadd.f32 0.0, %v1424
    %1426 = vdwg.mxu0
    %1427 = vrot.lane.b32.xlu0 %v889, 32
    %v1428 = vpop.permute.xlu0 %1427
    %v1431 = vsel %vm170, %v1399, 0
    %v1434 = vsel %vm170, %v1425, 0
    %1436 = vmatpush.msra.mxu0 0.0
    %1437 = vmatpush.msra.mxu0 0.0
    %1438 = vmatpush.msra.mxu0 0.0
    %1439 = vmatpush.msra.mxu0 0.0
    %1440 = vmatpush.msra.mxu0 0.0
    %1441 = vmatpush.msra.mxu0 0.0
    %1442 = vmatpush.msra.mxu0 0.0
    %1443 = vmatpush.msra.mxu0 0.0
    %1444 = vmatpush.msra.mxu0 0.0
    %1445 = vmatpush.msra.mxu0 0.0
    %1446 = vmatpush.msra.mxu0 0.0
    %1447 = vmatpush.msra.mxu0 0.0
    %1448 = vmatpush.msra.mxu0 0.0
    %1449 = vmatpush.msra.mxu0 0.0
    %1450 = vmatpush.msra.mxu0 0.0
    %1451 = vmatpush.msra.mxu0 %v1428
    %1452 = vmatmul.f32.gmra.mxu0 %v1431
    %v1453 = vpop.f32.mrf.mxu0
    %v1454 = vadd.f32 0.0, %v1453
    %1455 = vmatmul.f32.gmra.mxu0 %v1434
    %v1456 = vpop.f32.mrf.mxu0
    %v1457 = vadd.f32 0.0, %v1456
    %1458 = vdwg.mxu0
    %v1459 = vadd.f32 %v1292, %v1454
    %v1460 = vadd.f32 %v1295, %v1457
    %1461 = vrot.lane.b32.xlu0 %v973, 104
    %v1462 = vpop.permute.xlu0 %1461
    %1463 = vrot.lane.b32.xlu0 %v963, 104
    %v1464 = vpop.permute.xlu0 %1463
    %v1465 = vsel %vm170, %v1462, 0
    %v1467 = vsel %vm170, %v1464, 0
    %1469 = vmatpush.xpose.msra.mxu0 0.0
    %1470 = vmatpush.xpose.msra.mxu0 0.0
    %1471 = vmatpush.xpose.msra.mxu0 0.0
    %1472 = vmatpush.xpose.msra.mxu0 0.0
    %1473 = vmatpush.xpose.msra.mxu0 0.0
    %1474 = vmatpush.xpose.msra.mxu0 0.0
    %1475 = vmatpush.xpose.msra.mxu0 0.0
    %1476 = vmatpush.xpose.msra.mxu0 0.0
    %1477 = vmatpush.xpose.msra.mxu0 0.0
    %1478 = vmatpush.xpose.msra.mxu0 0.0
    %1479 = vmatpush.xpose.msra.mxu0 0.0
    %1480 = vmatpush.xpose.msra.mxu0 0.0
    %1481 = vmatpush.xpose.msra.mxu0 0.0
    %1482 = vmatpush.xpose.msra.mxu0 0.0
    %1483 = vmatpush.xpose.msra.mxu0 0.0
    %1484 = vmatpush.xpose.msra.mxu0 %v1467
    %1485 = vmatmul.f32.gmra.mxu0 %v1465
    %v1486 = vpop.f32.mrf.mxu0
    %v1487 = vadd.f32 0.0, %v1486
    %1488 = vdwg.mxu0
    %1489 = vrot.lane.b32.xlu0 %v974, 104
    %v1490 = vpop.permute.xlu0 %1489
    %1491 = vrot.lane.b32.xlu0 %v964, 104
    %v1492 = vpop.permute.xlu0 %1491
    %v1493 = vsel %vm170, %v1490, 0
    %v1495 = vsel %vm170, %v1492, 0
    %1497 = vmatpush.xpose.msra.mxu0 0.0
    %1498 = vmatpush.xpose.msra.mxu0 0.0
    %1499 = vmatpush.xpose.msra.mxu0 0.0
    %1500 = vmatpush.xpose.msra.mxu0 0.0
    %1501 = vmatpush.xpose.msra.mxu0 0.0
    %1502 = vmatpush.xpose.msra.mxu0 0.0
    %1503 = vmatpush.xpose.msra.mxu0 0.0
    %1504 = vmatpush.xpose.msra.mxu0 0.0
    %1505 = vmatpush.xpose.msra.mxu0 0.0
    %1506 = vmatpush.xpose.msra.mxu0 0.0
    %1507 = vmatpush.xpose.msra.mxu0 0.0
    %1508 = vmatpush.xpose.msra.mxu0 0.0
    %1509 = vmatpush.xpose.msra.mxu0 0.0
    %1510 = vmatpush.xpose.msra.mxu0 0.0
    %1511 = vmatpush.xpose.msra.mxu0 0.0
    %1512 = vmatpush.xpose.msra.mxu0 %v1495
    %1513 = vmatmul.f32.gmra.mxu0 %v1493
    %v1514 = vpop.f32.mrf.mxu0
    %v1515 = vadd.f32 0.0, %v1514
    %1516 = vdwg.mxu0
    %v1517 = vsel %vm170, %v1487, -inf
    %1518 = vmax.xlane.f32.xlu0 %v1517
    %v1519 = vpop.xlane.xlu0 %1518
    %v1520 = vsel %vm170, %v1515, -inf
    %1521 = vmax.xlane.f32.xlu0 %v1520
    %v1522 = vpop.xlane.xlu0 %1521
    %v1523 = vsub.f32 %v1487, %v1519
    %v1524 = vsub.f32 %v1515, %v1522
    %v1525 = vmul.f32 %v1523, 1.442695
    %v1526 = vpow.pop %v1525
    %v1527 = vmul.f32 %v1524, 1.442695
    %v1528 = vpow.pop %v1527
    %v1529 = vsel %vm170, %v1526, 0.0
    %1530 = vadd.xlane.f32.xlu0 %v1529
    %v1531 = vpop.xlane.xlu0 %1530
    %v1532 = vsel %vm170, %v1528, 0.0
    %1533 = vadd.xlane.f32.xlu0 %v1532
    %v1534 = vpop.xlane.xlu0 %1533
    %v1535 = vrcp.pop %v1531
    %v1536 = vrcp.pop %v1534
    %v1537 = vmul.f32 %v1526, %v1535
    %v1538 = vmul.f32 %v1528, %v1536
    %1539 = vrot.lane.b32.xlu0 %v971, 72
    %v1540 = vpop.permute.xlu0 %1539
    %v1543 = vsel %vm170, %v1537, 0
    %1545 = vmatpush.msra.mxu0 0.0
    %1546 = vmatpush.msra.mxu0 0.0
    %1547 = vmatpush.msra.mxu0 0.0
    %1548 = vmatpush.msra.mxu0 0.0
    %1549 = vmatpush.msra.mxu0 0.0
    %1550 = vmatpush.msra.mxu0 0.0
    %1551 = vmatpush.msra.mxu0 0.0
    %1552 = vmatpush.msra.mxu0 0.0
    %1553 = vmatpush.msra.mxu0 0.0
    %1554 = vmatpush.msra.mxu0 0.0
    %1555 = vmatpush.msra.mxu0 0.0
    %1556 = vmatpush.msra.mxu0 0.0
    %1557 = vmatpush.msra.mxu0 0.0
    %1558 = vmatpush.msra.mxu0 0.0
    %1559 = vmatpush.msra.mxu0 0.0
    %1560 = vmatpush.msra.mxu0 %v1540
    %1561 = vmatmul.f32.gmra.mxu0 %v1543
    %v1562 = vpop.f32.mrf.mxu0
    %v1563 = vadd.f32 0.0, %v1562
    %1564 = vdwg.mxu0
    %1565 = vrot.lane.b32.xlu0 %v972, 72
    %v1566 = vpop.permute.xlu0 %1565
    %v1569 = vsel %vm170, %v1538, 0
    %1571 = vmatpush.msra.mxu0 0.0
    %1572 = vmatpush.msra.mxu0 0.0
    %1573 = vmatpush.msra.mxu0 0.0
    %1574 = vmatpush.msra.mxu0 0.0
    %1575 = vmatpush.msra.mxu0 0.0
    %1576 = vmatpush.msra.mxu0 0.0
    %1577 = vmatpush.msra.mxu0 0.0
    %1578 = vmatpush.msra.mxu0 0.0
    %1579 = vmatpush.msra.mxu0 0.0
    %1580 = vmatpush.msra.mxu0 0.0
    %1581 = vmatpush.msra.mxu0 0.0
    %1582 = vmatpush.msra.mxu0 0.0
    %1583 = vmatpush.msra.mxu0 0.0
    %1584 = vmatpush.msra.mxu0 0.0
    %1585 = vmatpush.msra.mxu0 0.0
    %1586 = vmatpush.msra.mxu0 %v1566
    %1587 = vmatmul.f32.gmra.mxu0 %v1569
    %v1588 = vpop.f32.mrf.mxu0
    %v1589 = vadd.f32 0.0, %v1588
    %1590 = vdwg.mxu0
    %1591 = vrot.lane.b32.xlu0 %v890, 32
    %v1592 = vpop.permute.xlu0 %1591
    %v1595 = vsel %vm170, %v1563, 0
    %v1598 = vsel %vm170, %v1589, 0
    %1600 = vmatpush.msra.mxu0 0.0
    %1601 = vmatpush.msra.mxu0 0.0
    %1602 = vmatpush.msra.mxu0 0.0
    %1603 = vmatpush.msra.mxu0 0.0
    %1604 = vmatpush.msra.mxu0 0.0
    %1605 = vmatpush.msra.mxu0 0.0
    %1606 = vmatpush.msra.mxu0 0.0
    %1607 = vmatpush.msra.mxu0 0.0
    %1608 = vmatpush.msra.mxu0 0.0
    %1609 = vmatpush.msra.mxu0 0.0
    %1610 = vmatpush.msra.mxu0 0.0
    %1611 = vmatpush.msra.mxu0 0.0
    %1612 = vmatpush.msra.mxu0 0.0
    %1613 = vmatpush.msra.mxu0 0.0
    %1614 = vmatpush.msra.mxu0 0.0
    %1615 = vmatpush.msra.mxu0 %v1592
    %1616 = vmatmul.f32.gmra.mxu0 %v1595
    %v1617 = vpop.f32.mrf.mxu0
    %v1618 = vadd.f32 0.0, %v1617
    %1619 = vmatmul.f32.gmra.mxu0 %v1598
    %v1620 = vpop.f32.mrf.mxu0
    %v1621 = vadd.f32 0.0, %v1620
    %1622 = vdwg.mxu0
    %v1623 = vadd.f32 %v1459, %v1618
    %v1624 = vadd.f32 %v1460, %v1621
    %v1625 = vld [vmem:[#allocation7 + $0x7] sm:$0x1]
    %v1626 = vperm.slane %v1625, 0
    %v1627 = vadd.f32 %v1623, %v1626
    %v1628 = vadd.f32 %v1624, %v1626
    %v1629 = vadd.f32 %v1627, %v884
    %v1630 = vadd.f32 %v1628, %v885
    %v1631 = vsel %vm81, %v1629, 0.0
    %1632 = vadd.xlane.f32.xlu0 %v1631
    %v1633 = vpop.xlane.xlu0 %1632
    %v1634 = vsel %vm81, %v1630, 0.0
    %1635 = vadd.xlane.f32.xlu0 %v1634
    %v1636 = vpop.xlane.xlu0 %1635
    %v1637 = vmul.f32 %v1633, %v839
    %v1638 = vmul.f32 %v1636, %v839
    %v1639 = vsub.f32 %v1629, %v1637
    %v1640 = vsub.f32 %v1630, %v1638
    %v1641 = vmul.f32 %v1639, %v1639
    %v1642 = vmul.f32 %v1640, %v1640
    %v1643 = vsel %vm81, %v1641, 0.0
    %1644 = vadd.xlane.f32.xlu0 %v1643
    %v1645 = vpop.xlane.xlu0 %1644
    %v1646 = vsel %vm81, %v1642, 0.0
    %1647 = vadd.xlane.f32.xlu0 %v1646
    %v1648 = vpop.xlane.xlu0 %1647
    %v1649 = vmul.f32 %v1645, %v839
    %v1650 = vmul.f32 %v1648, %v839
    %v1651 = vadd.f32 %v1649, 1e-05
    %v1652 = vadd.f32 %v1650, 1e-05
    %v1653 = vrsqrt.pop %v1651
    %v1654 = vmul.f32 %v1653, %v1651
    %v1655 = vmul.f32 %v1654, %v1653
    %v1656 = vmul.f32 0.5, %v1655
    %v1657 = vsub.f32 1.5, %v1656
    %v1658 = vmul.f32 %v1653, %v1657
    %vm1659 = vweird.f32 %v1651
    %vm1660 = vweird.f32 %v1653
    %vm1661 = vmor %vm1659, %vm1660
    %v1662 = vsel %vm1661, %v1653, %v1658
    %v1663 = vrsqrt.pop %v1652
    %v1664 = vmul.f32 %v1663, %v1652
    %v1665 = vmul.f32 %v1664, %v1663
    %v1666 = vmul.f32 0.5, %v1665
    %v1667 = vsub.f32 1.5, %v1666
    %v1668 = vmul.f32 %v1663, %v1667
    %vm1669 = vweird.f32 %v1652
    %vm1670 = vweird.f32 %v1663
    %vm1671 = vmor %vm1669, %vm1670
    %v1672 = vsel %vm1671, %v1663, %v1668
    %v1673 = vmul.f32 %v1639, %v1662
    %v1674 = vmul.f32 %v1640, %v1672
    %v1675 = vld [vmem:[#allocation7 + $0xb] sm:$0x1]
    %v1676 = vperm.slane %v1675, 0
    %v1677 = vmul.f32 %v1673, %v1676
    %v1678 = vmul.f32 %v1674, %v1676
    %v1679 = vld [vmem:[#allocation7 + $0xc] sm:$0x1]
    %v1680 = vperm.slane %v1679, 0
    %v1681 = vadd.f32 %v1677, %v1680
    %v1682 = vadd.f32 %v1678, %v1680
    %v1683 = vld [vmem:[%s3] sm:$0xff]
    %v1684 = vld [vmem:[%s3 + $0x8] sm:$0xff]
    %v1685 = vld [vmem:[%s3 + $0x10] sm:$0xff]
    %v1686 = vld [vmem:[%s3 + $0x18] sm:$0xff]
    %v1687 = vld [vmem:[#allocation7 + $0xf] sm:$0x1]
    %v1688 = vperm.slane %v1687, 0
    %v1690 = vsel %vm81, %v1681, 0
    %v1693 = vsel %vm81, %v1682, 0
    %1695 = vmatpush.msra.mxu0 0.0
    %1696 = vmatpush.msra.mxu0 0.0
    %1697 = vmatpush.msra.mxu0 0.0
    %1698 = vmatpush.msra.mxu0 0.0
    %1699 = vmatpush.msra.mxu0 0.0
    %1700 = vmatpush.msra.mxu0 0.0
    %1701 = vmatpush.msra.mxu0 0.0
    %1702 = vmatpush.msra.mxu0 0.0
    %1703 = vmatpush.msra.mxu0 0.0
    %1704 = vmatpush.msra.mxu0 0.0
    %1705 = vmatpush.msra.mxu0 0.0
    %1706 = vmatpush.msra.mxu0 0.0
    %1707 = vmatpush.msra.mxu0 %v1686
    %1708 = vmatpush.msra.mxu0 %v1685
    %1709 = vmatpush.msra.mxu0 %v1684
    %1710 = vmatpush.msra.mxu0 %v1683
    %1711 = vmatmul.f32.gmra.mxu0 %v1690
    %v1712 = vpop.f32.mrf.mxu0
    %v1713 = vadd.f32 %v1688, %v1712
    %1714 = vmatmul.f32.gmra.mxu0 %v1693
    %v1715 = vpop.f32.mrf.mxu0
    %v1716 = vadd.f32 %v1688, %v1715
    %1717 = vdwg.mxu0
    %v1718 = vmax.f32 %v1713, 0.0
    %v1719 = vmax.f32 %v1716, 0.0
    %v1720 = vld [vmem:[%s4] sm:$0xff]
    %v1721 = vld [vmem:[%s4 + $0x8] sm:$0xff]
    %v1722 = vld [vmem:[%s4 + $0x10] sm:$0xff]
    %v1723 = vld [vmem:[%s4 + $0x18] sm:$0xff]
    %v1724 = vld [vmem:[%s4 + $0x20] sm:$0xff]
    %v1725 = vld [vmem:[%s4 + $0x28] sm:$0xff]
    %v1726 = vld [vmem:[%s4 + $0x30] sm:$0xff]
    %v1727 = vld [vmem:[%s4 + $0x38] sm:$0xff]
    %v1728 = vld [vmem:[#allocation7 + $0x8] sm:$0x1]
    %v1729 = vperm.slane %v1728, 0
    %vm1730 = vcmask 523264
    %v1732 = vsel %vm1730, %v1718, 0
    %v1735 = vsel %vm1730, %v1719, 0
    %1737 = vmatpush.msra.mxu0 0.0
    %1738 = vmatpush.msra.mxu0 0.0
    %1739 = vmatpush.msra.mxu0 0.0
    %1740 = vmatpush.msra.mxu0 0.0
    %1741 = vmatpush.msra.mxu0 0.0
    %1742 = vmatpush.msra.mxu0 0.0
    %1743 = vmatpush.msra.mxu0 0.0
    %1744 = vmatpush.msra.mxu0 0.0
    %1745 = vmatpush.msra.mxu0 %v1727
    %1746 = vmatpush.msra.mxu0 %v1726
    %1747 = vmatpush.msra.mxu0 %v1725
    %1748 = vmatpush.msra.mxu0 %v1724
    %1749 = vmatpush.msra.mxu0 %v1723
    %1750 = vmatpush.msra.mxu0 %v1722
    %1751 = vmatpush.msra.mxu0 %v1721
    %1752 = vmatpush.msra.mxu0 %v1720
    %1753 = vmatmul.f32.gmra.mxu0 %v1732
    %v1754 = vpop.f32.mrf.mxu0
    %v1755 = vadd.f32 %v1729, %v1754
    %1756 = vmatmul.f32.gmra.mxu0 %v1735
    %v1757 = vpop.f32.mrf.mxu0
    %v1758 = vadd.f32 %v1729, %v1757
    %1759 = vdwg.mxu0
    %v1760 = vadd.f32 %v1755, %v1681
    %v1761 = vadd.f32 %v1758, %v1682
    %v1762 = vsel %vm81, %v1760, 0.0
    %1763 = vadd.xlane.f32.xlu0 %v1762
    %v1764 = vpop.xlane.xlu0 %1763
    %v1765 = vsel %vm81, %v1761, 0.0
    %1766 = vadd.xlane.f32.xlu0 %v1765
    %v1767 = vpop.xlane.xlu0 %1766
    %v1768 = vmul.f32 %v1764, %v839
    %v1769 = vmul.f32 %v1767, %v839
    %v1770 = vsub.f32 %v1760, %v1768
    %v1771 = vsub.f32 %v1761, %v1769
    %v1772 = vmul.f32 %v1770, %v1770
    %v1773 = vmul.f32 %v1771, %v1771
    %v1774 = vsel %vm81, %v1772, 0.0
    %1775 = vadd.xlane.f32.xlu0 %v1774
    %v1776 = vpop.xlane.xlu0 %1775
    %v1777 = vsel %vm81, %v1773, 0.0
    %1778 = vadd.xlane.f32.xlu0 %v1777
    %v1779 = vpop.xlane.xlu0 %1778
    %v1780 = vmul.f32 %v1776, %v839
    %v1781 = vmul.f32 %v1779, %v839
    %v1782 = vadd.f32 %v1780, 1e-05
    %v1783 = vadd.f32 %v1781, 1e-05
    %v1784 = vrsqrt.pop %v1782
    %v1785 = vmul.f32 %v1784, %v1782
    %v1786 = vmul.f32 %v1785, %v1784
    %v1787 = vmul.f32 0.5, %v1786
    %v1788 = vsub.f32 1.5, %v1787
    %v1789 = vmul.f32 %v1784, %v1788
    %vm1790 = vweird.f32 %v1782
    %vm1791 = vweird.f32 %v1784
    %vm1792 = vmor %vm1790, %vm1791
    %v1793 = vsel %vm1792, %v1784, %v1789
    %v1794 = vrsqrt.pop %v1783
    %v1795 = vmul.f32 %v1794, %v1783
    %v1796 = vmul.f32 %v1795, %v1794
    %v1797 = vmul.f32 0.5, %v1796
    %v1798 = vsub.f32 1.5, %v1797
    %v1799 = vmul.f32 %v1794, %v1798
    %vm1800 = vweird.f32 %v1783
    %vm1801 = vweird.f32 %v1794
    %vm1802 = vmor %vm1800, %vm1801
    %v1803 = vsel %vm1802, %v1794, %v1799
    %v1804 = vmul.f32 %v1770, %v1793
    %v1805 = vmul.f32 %v1771, %v1803
    %v1806 = vld [vmem:[#allocation7 + $0xd] sm:$0x1]
    %v1807 = vperm.slane %v1806, 0
    %v1808 = vmul.f32 %v1804, %v1807
    %v1809 = vmul.f32 %v1805, %v1807
    %v1810 = vld [vmem:[#allocation7 + $0xe] sm:$0x1]
    %v1811 = vperm.slane %v1810, 0
    %v1812 = vadd.f32 %v1808, %v1811
    %v1813 = vadd.f32 %v1809, %v1811
    %1814 = vst.msk [vmem:[#allocation8] sm:$0xff] %vm81, %v1812
    %1815 = vst.msk [vmem:[#allocation8 + $0x8] sm:$0xff] %vm81, %v1813
    %s1816 = scalar_lea.vmem [#allocation2], 16
    %v1817 = vld [vmem:[%s1816] sm:$0xff]
    %v1818 = vld [vmem:[%s1816 + $0x8] sm:$0xff]
    %s1819 = scalar_lea.vmem %s2, 64
    %v1820 = vld [vmem:[%s1819] sm:$0xff]
    %v1821 = vld [vmem:[%s1819 + $0x8] sm:$0xff]
    %v1822 = vld [vmem:[%s1819 + $0x10] sm:$0xff]
    %v1823 = vld [vmem:[%s1819 + $0x18] sm:$0xff]
    %s1824 = scalar_lea.vmem [#allocation7], 16
    %v1825 = vld [vmem:[%s1824] sm:$0x1]
    %v1826 = vperm.slane %v1825, 0
    %v1828 = vsel %vm81, %v1817, 0
    %v1831 = vsel %vm81, %v1818, 0
    %1833 = vmatpush.msra.mxu0 0.0
    %1834 = vmatpush.msra.mxu0 0.0
    %1835 = vmatpush.msra.mxu0 0.0
    %1836 = vmatpush.msra.mxu0 0.0
    %1837 = vmatpush.msra.mxu0 0.0
    %1838 = vmatpush.msra.mxu0 0.0
    %1839 = vmatpush.msra.mxu0 0.0
    %1840 = vmatpush.msra.mxu0 0.0
    %1841 = vmatpush.msra.mxu0 0.0
    %1842 = vmatpush.msra.mxu0 0.0
    %1843 = vmatpush.msra.mxu0 0.0
    %1844 = vmatpush.msra.mxu0 0.0
    %1845 = vmatpush.msra.mxu0 %v1823
    %1846 = vmatpush.msra.mxu0 %v1822
    %1847 = vmatpush.msra.mxu0 %v1821
    %1848 = vmatpush.msra.mxu0 %v1820
    %1849 = vmatmul.f32.gmra.mxu0 %v1828
    %v1850 = vpop.f32.mrf.mxu0
    %v1851 = vadd.f32 %v1826, %v1850
    %1852 = vmatmul.f32.gmra.mxu0 %v1831
    %v1853 = vpop.f32.mrf.mxu0
    %v1854 = vadd.f32 %v1826, %v1853
    %1855 = vdwg.mxu0
    %1860 = vrot.lane.b32.xlu0 %v1820, 96
    %v1861 = vpop.permute.xlu0 %1860
    %1862 = vrot.lane.b32.xlu0 %v1821, 96
    %v1863 = vpop.permute.xlu0 %1862
    %1864 = vrot.lane.b32.xlu0 %v1822, 96
    %v1865 = vpop.permute.xlu0 %1864
    %1866 = vrot.lane.b32.xlu0 %v1823, 96
    %v1867 = vpop.permute.xlu0 %1866
    %1872 = vmatpush.msra.mxu0 0.0
    %1873 = vmatpush.msra.mxu0 0.0
    %1874 = vmatpush.msra.mxu0 0.0
    %1875 = vmatpush.msra.mxu0 0.0
    %1876 = vmatpush.msra.mxu0 0.0
    %1877 = vmatpush.msra.mxu0 0.0
    %1878 = vmatpush.msra.mxu0 0.0
    %1879 = vmatpush.msra.mxu0 0.0
    %1880 = vmatpush.msra.mxu0 0.0
    %1881 = vmatpush.msra.mxu0 0.0
    %1882 = vmatpush.msra.mxu0 0.0
    %1883 = vmatpush.msra.mxu0 0.0
    %1884 = vmatpush.msra.mxu0 %v1867
    %1885 = vmatpush.msra.mxu0 %v1865
    %1886 = vmatpush.msra.mxu0 %v1863
    %1887 = vmatpush.msra.mxu0 %v1861
    %1888 = vmatmul.f32.gmra.mxu0 %v128
    %v1889 = vpop.f32.mrf.mxu0
    %v1890 = vadd.f32 0.0, %v1889
    %1891 = vmatmul.f32.gmra.mxu0 %v131
    %v1892 = vpop.f32.mrf.mxu0
    %v1893 = vadd.f32 0.0, %v1892
    %1894 = vdwg.mxu0
    %v1895 = vld [vmem:[%s1824 + $0x1] sm:$0x1]
    %v1896 = vperm.slane %v1895, 0
    %v1897 = vadd.f32 %v1890, %v1896
    %v1898 = vadd.f32 %v1893, %v1896
    %v1899 = vld [vmem:[%s1824 + $0x2] sm:$0x1]
    %v1900 = vperm.slane %v1899, 0
    %1902 = vrot.lane.b32.xlu0 %v1900, 32
    %v1903 = vpop.permute.xlu0 %1902
    %v1905 = vadd.f32 %v1890, %v1903
    %v1906 = vadd.f32 %v1893, %v1903
    %v1907 = vmul.f32 %v1851, 0.35355338
    %v1908 = vmul.f32 %v1854, 0.35355338
    %v1910 = vsel %vm170, %v1907, 0
    %v1913 = vsel %vm170, %v1897, 0
    %1915 = vmatpush.xpose.msra.mxu0 0.0
    %1916 = vmatpush.xpose.msra.mxu0 0.0
    %1917 = vmatpush.xpose.msra.mxu0 0.0
    %1918 = vmatpush.xpose.msra.mxu0 0.0
    %1919 = vmatpush.xpose.msra.mxu0 0.0
    %1920 = vmatpush.xpose.msra.mxu0 0.0
    %1921 = vmatpush.xpose.msra.mxu0 0.0
    %1922 = vmatpush.xpose.msra.mxu0 0.0
    %1923 = vmatpush.xpose.msra.mxu0 0.0
    %1924 = vmatpush.xpose.msra.mxu0 0.0
    %1925 = vmatpush.xpose.msra.mxu0 0.0
    %1926 = vmatpush.xpose.msra.mxu0 0.0
    %1927 = vmatpush.xpose.msra.mxu0 0.0
    %1928 = vmatpush.xpose.msra.mxu0 0.0
    %1929 = vmatpush.xpose.msra.mxu0 0.0
    %1930 = vmatpush.xpose.msra.mxu0 %v1913
    %1931 = vmatmul.f32.gmra.mxu0 %v1910
    %v1932 = vpop.f32.mrf.mxu0
    %v1933 = vadd.f32 0.0, %v1932
    %1934 = vdwg.mxu0
    %v1936 = vsel %vm170, %v1908, 0
    %v1939 = vsel %vm170, %v1898, 0
    %1941 = vmatpush.xpose.msra.mxu0 0.0
    %1942 = vmatpush.xpose.msra.mxu0 0.0
    %1943 = vmatpush.xpose.msra.mxu0 0.0
    %1944 = vmatpush.xpose.msra.mxu0 0.0
    %1945 = vmatpush.xpose.msra.mxu0 0.0
    %1946 = vmatpush.xpose.msra.mxu0 0.0
    %1947 = vmatpush.xpose.msra.mxu0 0.0
    %1948 = vmatpush.xpose.msra.mxu0 0.0
    %1949 = vmatpush.xpose.msra.mxu0 0.0
    %1950 = vmatpush.xpose.msra.mxu0 0.0
    %1951 = vmatpush.xpose.msra.mxu0 0.0
    %1952 = vmatpush.xpose.msra.mxu0 0.0
    %1953 = vmatpush.xpose.msra.mxu0 0.0
    %1954 = vmatpush.xpose.msra.mxu0 0.0
    %1955 = vmatpush.xpose.msra.mxu0 0.0
    %1956 = vmatpush.xpose.msra.mxu0 %v1939
    %1957 = vmatmul.f32.gmra.mxu0 %v1936
    %v1958 = vpop.f32.mrf.mxu0
    %v1959 = vadd.f32 0.0, %v1958
    %1960 = vdwg.mxu0
    %v1961 = vsel %vm170, %v1933, -inf
    %1962 = vmax.xlane.f32.xlu0 %v1961
    %v1963 = vpop.xlane.xlu0 %1962
    %v1964 = vsel %vm170, %v1959, -inf
    %1965 = vmax.xlane.f32.xlu0 %v1964
    %v1966 = vpop.xlane.xlu0 %1965
    %v1967 = vsub.f32 %v1933, %v1963
    %v1968 = vsub.f32 %v1959, %v1966
    %v1969 = vmul.f32 %v1967, 1.442695
    %v1970 = vpow.pop %v1969
    %v1971 = vmul.f32 %v1968, 1.442695
    %v1972 = vpow.pop %v1971
    %v1973 = vsel %vm170, %v1970, 0.0
    %1974 = vadd.xlane.f32.xlu0 %v1973
    %v1975 = vpop.xlane.xlu0 %1974
    %v1976 = vsel %vm170, %v1972, 0.0
    %1977 = vadd.xlane.f32.xlu0 %v1976
    %v1978 = vpop.xlane.xlu0 %1977
    %v1979 = vrcp.pop %v1975
    %v1980 = vrcp.pop %v1978
    %v1981 = vmul.f32 %v1970, %v1979
    %v1982 = vmul.f32 %v1972, %v1980
    %1984 = vrot.lane.b32.xlu0 %v1905, 96
    %v1985 = vpop.permute.xlu0 %1984
    %v1988 = vsel %vm170, %v1981, 0
    %1990 = vmatpush.msra.mxu0 0.0
    %1991 = vmatpush.msra.mxu0 0.0
    %1992 = vmatpush.msra.mxu0 0.0
    %1993 = vmatpush.msra.mxu0 0.0
    %1994 = vmatpush.msra.mxu0 0.0
    %1995 = vmatpush.msra.mxu0 0.0
    %1996 = vmatpush.msra.mxu0 0.0
    %1997 = vmatpush.msra.mxu0 0.0
    %1998 = vmatpush.msra.mxu0 0.0
    %1999 = vmatpush.msra.mxu0 0.0
    %2000 = vmatpush.msra.mxu0 0.0
    %2001 = vmatpush.msra.mxu0 0.0
    %2002 = vmatpush.msra.mxu0 0.0
    %2003 = vmatpush.msra.mxu0 0.0
    %2004 = vmatpush.msra.mxu0 0.0
    %2005 = vmatpush.msra.mxu0 %v1985
    %2006 = vmatmul.f32.gmra.mxu0 %v1988
    %v2007 = vpop.f32.mrf.mxu0
    %v2008 = vadd.f32 0.0, %v2007
    %2009 = vdwg.mxu0
    %2011 = vrot.lane.b32.xlu0 %v1906, 96
    %v2012 = vpop.permute.xlu0 %2011
    %v2015 = vsel %vm170, %v1982, 0
    %2017 = vmatpush.msra.mxu0 0.0
    %2018 = vmatpush.msra.mxu0 0.0
    %2019 = vmatpush.msra.mxu0 0.0
    %2020 = vmatpush.msra.mxu0 0.0
    %2021 = vmatpush.msra.mxu0 0.0
    %2022 = vmatpush.msra.mxu0 0.0
    %2023 = vmatpush.msra.mxu0 0.0
    %2024 = vmatpush.msra.mxu0 0.0
    %2025 = vmatpush.msra.mxu0 0.0
    %2026 = vmatpush.msra.mxu0 0.0
    %2027 = vmatpush.msra.mxu0 0.0
    %2028 = vmatpush.msra.mxu0 0.0
    %2029 = vmatpush.msra.mxu0 0.0
    %2030 = vmatpush.msra.mxu0 0.0
    %2031 = vmatpush.msra.mxu0 0.0
    %2032 = vmatpush.msra.mxu0 %v2012
    %2033 = vmatmul.f32.gmra.mxu0 %v2015
    %v2034 = vpop.f32.mrf.mxu0
    %v2035 = vadd.f32 0.0, %v2034
    %2036 = vdwg.mxu0
    %2037 = vrot.lane.b32.xlu0 %v1907, 120
    %v2038 = vpop.permute.xlu0 %2037
    %2039 = vrot.lane.b32.xlu0 %v1897, 120
    %v2040 = vpop.permute.xlu0 %2039
    %v2041 = vsel %vm170, %v2038, 0
    %v2043 = vsel %vm170, %v2040, 0
    %2045 = vmatpush.xpose.msra.mxu0 0.0
    %2046 = vmatpush.xpose.msra.mxu0 0.0
    %2047 = vmatpush.xpose.msra.mxu0 0.0
    %2048 = vmatpush.xpose.msra.mxu0 0.0
    %2049 = vmatpush.xpose.msra.mxu0 0.0
    %2050 = vmatpush.xpose.msra.mxu0 0.0
    %2051 = vmatpush.xpose.msra.mxu0 0.0
    %2052 = vmatpush.xpose.msra.mxu0 0.0
    %2053 = vmatpush.xpose.msra.mxu0 0.0
    %2054 = vmatpush.xpose.msra.mxu0 0.0
    %2055 = vmatpush.xpose.msra.mxu0 0.0
    %2056 = vmatpush.xpose.msra.mxu0 0.0
    %2057 = vmatpush.xpose.msra.mxu0 0.0
    %2058 = vmatpush.xpose.msra.mxu0 0.0
    %2059 = vmatpush.xpose.msra.mxu0 0.0
    %2060 = vmatpush.xpose.msra.mxu0 %v2043
    %2061 = vmatmul.f32.gmra.mxu0 %v2041
    %v2062 = vpop.f32.mrf.mxu0
    %v2063 = vadd.f32 0.0, %v2062
    %2064 = vdwg.mxu0
    %2065 = vrot.lane.b32.xlu0 %v1908, 120
    %v2066 = vpop.permute.xlu0 %2065
    %2067 = vrot.lane.b32.xlu0 %v1898, 120
    %v2068 = vpop.permute.xlu0 %2067
    %v2069 = vsel %vm170, %v2066, 0
    %v2071 = vsel %vm170, %v2068, 0
    %2073 = vmatpush.xpose.msra.mxu0 0.0
    %2074 = vmatpush.xpose.msra.mxu0 0.0
    %2075 = vmatpush.xpose.msra.mxu0 0.0
    %2076 = vmatpush.xpose.msra.mxu0 0.0
    %2077 = vmatpush.xpose.msra.mxu0 0.0
    %2078 = vmatpush.xpose.msra.mxu0 0.0
    %2079 = vmatpush.xpose.msra.mxu0 0.0
    %2080 = vmatpush.xpose.msra.mxu0 0.0
    %2081 = vmatpush.xpose.msra.mxu0 0.0
    %2082 = vmatpush.xpose.msra.mxu0 0.0
    %2083 = vmatpush.xpose.msra.mxu0 0.0
    %2084 = vmatpush.xpose.msra.mxu0 0.0
    %2085 = vmatpush.xpose.msra.mxu0 0.0
    %2086 = vmatpush.xpose.msra.mxu0 0.0
    %2087 = vmatpush.xpose.msra.mxu0 0.0
    %2088 = vmatpush.xpose.msra.mxu0 %v2071
    %2089 = vmatmul.f32.gmra.mxu0 %v2069
    %v2090 = vpop.f32.mrf.mxu0
    %v2091 = vadd.f32 0.0, %v2090
    %2092 = vdwg.mxu0
    %v2093 = vsel %vm170, %v2063, -inf
    %2094 = vmax.xlane.f32.xlu0 %v2093
    %v2095 = vpop.xlane.xlu0 %2094
    %v2096 = vsel %vm170, %v2091, -inf
    %2097 = vmax.xlane.f32.xlu0 %v2096
    %v2098 = vpop.xlane.xlu0 %2097
    %v2099 = vsub.f32 %v2063, %v2095
    %v2100 = vsub.f32 %v2091, %v2098
    %v2101 = vmul.f32 %v2099, 1.442695
    %v2102 = vpow.pop %v2101
    %v2103 = vmul.f32 %v2100, 1.442695
    %v2104 = vpow.pop %v2103
    %v2105 = vsel %vm170, %v2102, 0.0
    %2106 = vadd.xlane.f32.xlu0 %v2105
    %v2107 = vpop.xlane.xlu0 %2106
    %v2108 = vsel %vm170, %v2104, 0.0
    %2109 = vadd.xlane.f32.xlu0 %v2108
    %v2110 = vpop.xlane.xlu0 %2109
    %v2111 = vrcp.pop %v2107
    %v2112 = vrcp.pop %v2110
    %v2113 = vmul.f32 %v2102, %v2111
    %v2114 = vmul.f32 %v2104, %v2112
    %2115 = vrot.lane.b32.xlu0 %v1905, 88
    %v2116 = vpop.permute.xlu0 %2115
    %v2119 = vsel %vm170, %v2113, 0
    %2121 = vmatpush.msra.mxu0 0.0
    %2122 = vmatpush.msra.mxu0 0.0
    %2123 = vmatpush.msra.mxu0 0.0
    %2124 = vmatpush.msra.mxu0 0.0
    %2125 = vmatpush.msra.mxu0 0.0
    %2126 = vmatpush.msra.mxu0 0.0
    %2127 = vmatpush.msra.mxu0 0.0
    %2128 = vmatpush.msra.mxu0 0.0
    %2129 = vmatpush.msra.mxu0 0.0
    %2130 = vmatpush.msra.mxu0 0.0
    %2131 = vmatpush.msra.mxu0 0.0
    %2132 = vmatpush.msra.mxu0 0.0
    %2133 = vmatpush.msra.mxu0 0.0
    %2134 = vmatpush.msra.mxu0 0.0
    %2135 = vmatpush.msra.mxu0 0.0
    %2136 = vmatpush.msra.mxu0 %v2116
    %2137 = vmatmul.f32.gmra.mxu0 %v2119
    %v2138 = vpop.f32.mrf.mxu0
    %v2139 = vadd.f32 0.0, %v2138
    %2140 = vdwg.mxu0
    %2141 = vrot.lane.b32.xlu0 %v1906, 88
    %v2142 = vpop.permute.xlu0 %2141
    %v2145 = vsel %vm170, %v2114, 0
    %2147 = vmatpush.msra.mxu0 0.0
    %2148 = vmatpush.msra.mxu0 0.0
    %2149 = vmatpush.msra.mxu0 0.0
    %2150 = vmatpush.msra.mxu0 0.0
    %2151 = vmatpush.msra.mxu0 0.0
    %2152 = vmatpush.msra.mxu0 0.0
    %2153 = vmatpush.msra.mxu0 0.0
    %2154 = vmatpush.msra.mxu0 0.0
    %2155 = vmatpush.msra.mxu0 0.0
    %2156 = vmatpush.msra.mxu0 0.0
    %2157 = vmatpush.msra.mxu0 0.0
    %2158 = vmatpush.msra.mxu0 0.0
    %2159 = vmatpush.msra.mxu0 0.0
    %2160 = vmatpush.msra.mxu0 0.0
    %2161 = vmatpush.msra.mxu0 0.0
    %2162 = vmatpush.msra.mxu0 %v2142
    %2163 = vmatmul.f32.gmra.mxu0 %v2145
    %v2164 = vpop.f32.mrf.mxu0
    %v2165 = vadd.f32 0.0, %v2164
    %2166 = vdwg.mxu0
    %2167 = vrot.lane.b32.xlu0 %v1821, 32
    %v2168 = vpop.permute.xlu0 %2167
    %v2171 = vsel %vm170, %v2139, 0
    %v2174 = vsel %vm170, %v2165, 0
    %2176 = vmatpush.msra.mxu0 0.0
    %2177 = vmatpush.msra.mxu0 0.0
    %2178 = vmatpush.msra.mxu0 0.0
    %2179 = vmatpush.msra.mxu0 0.0
    %2180 = vmatpush.msra.mxu0 0.0
    %2181 = vmatpush.msra.mxu0 0.0
    %2182 = vmatpush.msra.mxu0 0.0
    %2183 = vmatpush.msra.mxu0 0.0
    %2184 = vmatpush.msra.mxu0 0.0
    %2185 = vmatpush.msra.mxu0 0.0
    %2186 = vmatpush.msra.mxu0 0.0
    %2187 = vmatpush.msra.mxu0 0.0
    %2188 = vmatpush.msra.mxu0 0.0
    %2189 = vmatpush.msra.mxu0 0.0
    %2190 = vmatpush.msra.mxu0 0.0
    %2191 = vmatpush.msra.mxu0 %v2168
    %2192 = vmatmul.f32.gmra.mxu0 %v2171
    %v2193 = vpop.f32.mrf.mxu0
    %v2194 = vadd.f32 0.0, %v2193
    %2195 = vmatmul.f32.gmra.mxu0 %v2174
    %v2196 = vpop.f32.mrf.mxu0
    %v2197 = vadd.f32 0.0, %v2196
    %2198 = vdwg.mxu0
    %2199 = vrot.lane.b32.xlu0 %v1820, 32
    %v2200 = vpop.permute.xlu0 %2199
    %v2203 = vsel %vm170, %v2008, 0
    %v2206 = vsel %vm170, %v2035, 0
    %2208 = vmatpush.msra.mxu0 0.0
    %2209 = vmatpush.msra.mxu0 0.0
    %2210 = vmatpush.msra.mxu0 0.0
    %2211 = vmatpush.msra.mxu0 0.0
    %2212 = vmatpush.msra.mxu0 0.0
    %2213 = vmatpush.msra.mxu0 0.0
    %2214 = vmatpush.msra.mxu0 0.0
    %2215 = vmatpush.msra.mxu0 0.0
    %2216 = vmatpush.msra.mxu0 0.0
    %2217 = vmatpush.msra.mxu0 0.0
    %2218 = vmatpush.msra.mxu0 0.0
    %2219 = vmatpush.msra.mxu0 0.0
    %2220 = vmatpush.msra.mxu0 0.0
    %2221 = vmatpush.msra.mxu0 0.0
    %2222 = vmatpush.msra.mxu0 0.0
    %2223 = vmatpush.msra.mxu0 %v2200
    %2224 = vmatmul.f32.gmra.mxu0 %v2203
    %v2225 = vpop.f32.mrf.mxu0
    %v2226 = vadd.f32 %v2194, %v2225
    %2227 = vmatmul.f32.gmra.mxu0 %v2206
    %v2228 = vpop.f32.mrf.mxu0
    %v2229 = vadd.f32 %v2197, %v2228
    %2230 = vdwg.mxu0
    %2231 = vrot.lane.b32.xlu0 %v1907, 112
    %v2232 = vpop.permute.xlu0 %2231
    %2233 = vrot.lane.b32.xlu0 %v1897, 112
    %v2234 = vpop.permute.xlu0 %2233
    %v2235 = vsel %vm170, %v2232, 0
    %v2237 = vsel %vm170, %v2234, 0
    %2239 = vmatpush.xpose.msra.mxu0 0.0
    %2240 = vmatpush.xpose.msra.mxu0 0.0
    %2241 = vmatpush.xpose.msra.mxu0 0.0
    %2242 = vmatpush.xpose.msra.mxu0 0.0
    %2243 = vmatpush.xpose.msra.mxu0 0.0
    %2244 = vmatpush.xpose.msra.mxu0 0.0
    %2245 = vmatpush.xpose.msra.mxu0 0.0
    %2246 = vmatpush.xpose.msra.mxu0 0.0
    %2247 = vmatpush.xpose.msra.mxu0 0.0
    %2248 = vmatpush.xpose.msra.mxu0 0.0
    %2249 = vmatpush.xpose.msra.mxu0 0.0
    %2250 = vmatpush.xpose.msra.mxu0 0.0
    %2251 = vmatpush.xpose.msra.mxu0 0.0
    %2252 = vmatpush.xpose.msra.mxu0 0.0
    %2253 = vmatpush.xpose.msra.mxu0 0.0
    %2254 = vmatpush.xpose.msra.mxu0 %v2237
    %2255 = vmatmul.f32.gmra.mxu0 %v2235
    %v2256 = vpop.f32.mrf.mxu0
    %v2257 = vadd.f32 0.0, %v2256
    %2258 = vdwg.mxu0
    %2259 = vrot.lane.b32.xlu0 %v1908, 112
    %v2260 = vpop.permute.xlu0 %2259
    %2261 = vrot.lane.b32.xlu0 %v1898, 112
    %v2262 = vpop.permute.xlu0 %2261
    %v2263 = vsel %vm170, %v2260, 0
    %v2265 = vsel %vm170, %v2262, 0
    %2267 = vmatpush.xpose.msra.mxu0 0.0
    %2268 = vmatpush.xpose.msra.mxu0 0.0
    %2269 = vmatpush.xpose.msra.mxu0 0.0
    %2270 = vmatpush.xpose.msra.mxu0 0.0
    %2271 = vmatpush.xpose.msra.mxu0 0.0
    %2272 = vmatpush.xpose.msra.mxu0 0.0
    %2273 = vmatpush.xpose.msra.mxu0 0.0
    %2274 = vmatpush.xpose.msra.mxu0 0.0
    %2275 = vmatpush.xpose.msra.mxu0 0.0
    %2276 = vmatpush.xpose.msra.mxu0 0.0
    %2277 = vmatpush.xpose.msra.mxu0 0.0
    %2278 = vmatpush.xpose.msra.mxu0 0.0
    %2279 = vmatpush.xpose.msra.mxu0 0.0
    %2280 = vmatpush.xpose.msra.mxu0 0.0
    %2281 = vmatpush.xpose.msra.mxu0 0.0
    %2282 = vmatpush.xpose.msra.mxu0 %v2265
    %2283 = vmatmul.f32.gmra.mxu0 %v2263
    %v2284 = vpop.f32.mrf.mxu0
    %v2285 = vadd.f32 0.0, %v2284
    %2286 = vdwg.mxu0
    %v2287 = vsel %vm170, %v2257, -inf
    %2288 = vmax.xlane.f32.xlu0 %v2287
    %v2289 = vpop.xlane.xlu0 %2288
    %v2290 = vsel %vm170, %v2285, -inf
    %2291 = vmax.xlane.f32.xlu0 %v2290
    %v2292 = vpop.xlane.xlu0 %2291
    %v2293 = vsub.f32 %v2257, %v2289
    %v2294 = vsub.f32 %v2285, %v2292
    %v2295 = vmul.f32 %v2293, 1.442695
    %v2296 = vpow.pop %v2295
    %v2297 = vmul.f32 %v2294, 1.442695
    %v2298 = vpow.pop %v2297
    %v2299 = vsel %vm170, %v2296, 0.0
    %2300 = vadd.xlane.f32.xlu0 %v2299
    %v2301 = vpop.xlane.xlu0 %2300
    %v2302 = vsel %vm170, %v2298, 0.0
    %2303 = vadd.xlane.f32.xlu0 %v2302
    %v2304 = vpop.xlane.xlu0 %2303
    %v2305 = vrcp.pop %v2301
    %v2306 = vrcp.pop %v2304
    %v2307 = vmul.f32 %v2296, %v2305
    %v2308 = vmul.f32 %v2298, %v2306
    %2309 = vrot.lane.b32.xlu0 %v1905, 80
    %v2310 = vpop.permute.xlu0 %2309
    %v2313 = vsel %vm170, %v2307, 0
    %2315 = vmatpush.msra.mxu0 0.0
    %2316 = vmatpush.msra.mxu0 0.0
    %2317 = vmatpush.msra.mxu0 0.0
    %2318 = vmatpush.msra.mxu0 0.0
    %2319 = vmatpush.msra.mxu0 0.0
    %2320 = vmatpush.msra.mxu0 0.0
    %2321 = vmatpush.msra.mxu0 0.0
    %2322 = vmatpush.msra.mxu0 0.0
    %2323 = vmatpush.msra.mxu0 0.0
    %2324 = vmatpush.msra.mxu0 0.0
    %2325 = vmatpush.msra.mxu0 0.0
    %2326 = vmatpush.msra.mxu0 0.0
    %2327 = vmatpush.msra.mxu0 0.0
    %2328 = vmatpush.msra.mxu0 0.0
    %2329 = vmatpush.msra.mxu0 0.0
    %2330 = vmatpush.msra.mxu0 %v2310
    %2331 = vmatmul.f32.gmra.mxu0 %v2313
    %v2332 = vpop.f32.mrf.mxu0
    %v2333 = vadd.f32 0.0, %v2332
    %2334 = vdwg.mxu0
    %2335 = vrot.lane.b32.xlu0 %v1906, 80
    %v2336 = vpop.permute.xlu0 %2335
    %v2339 = vsel %vm170, %v2308, 0
    %2341 = vmatpush.msra.mxu0 0.0
    %2342 = vmatpush.msra.mxu0 0.0
    %2343 = vmatpush.msra.mxu0 0.0
    %2344 = vmatpush.msra.mxu0 0.0
    %2345 = vmatpush.msra.mxu0 0.0
    %2346 = vmatpush.msra.mxu0 0.0
    %2347 = vmatpush.msra.mxu0 0.0
    %2348 = vmatpush.msra.mxu0 0.0
    %2349 = vmatpush.msra.mxu0 0.0
    %2350 = vmatpush.msra.mxu0 0.0
    %2351 = vmatpush.msra.mxu0 0.0
    %2352 = vmatpush.msra.mxu0 0.0
    %2353 = vmatpush.msra.mxu0 0.0
    %2354 = vmatpush.msra.mxu0 0.0
    %2355 = vmatpush.msra.mxu0 0.0
    %2356 = vmatpush.msra.mxu0 %v2336
    %2357 = vmatmul.f32.gmra.mxu0 %v2339
    %v2358 = vpop.f32.mrf.mxu0
    %v2359 = vadd.f32 0.0, %v2358
    %2360 = vdwg.mxu0
    %2361 = vrot.lane.b32.xlu0 %v1822, 32
    %v2362 = vpop.permute.xlu0 %2361
    %v2365 = vsel %vm170, %v2333, 0
    %v2368 = vsel %vm170, %v2359, 0
    %2370 = vmatpush.msra.mxu0 0.0
    %2371 = vmatpush.msra.mxu0 0.0
    %2372 = vmatpush.msra.mxu0 0.0
    %2373 = vmatpush.msra.mxu0 0.0
    %2374 = vmatpush.msra.mxu0 0.0
    %2375 = vmatpush.msra.mxu0 0.0
    %2376 = vmatpush.msra.mxu0 0.0
    %2377 = vmatpush.msra.mxu0 0.0
    %2378 = vmatpush.msra.mxu0 0.0
    %2379 = vmatpush.msra.mxu0 0.0
    %2380 = vmatpush.msra.mxu0 0.0
    %2381 = vmatpush.msra.mxu0 0.0
    %2382 = vmatpush.msra.mxu0 0.0
    %2383 = vmatpush.msra.mxu0 0.0
    %2384 = vmatpush.msra.mxu0 0.0
    %2385 = vmatpush.msra.mxu0 %v2362
    %2386 = vmatmul.f32.gmra.mxu0 %v2365
    %v2387 = vpop.f32.mrf.mxu0
    %v2388 = vadd.f32 0.0, %v2387
    %2389 = vmatmul.f32.gmra.mxu0 %v2368
    %v2390 = vpop.f32.mrf.mxu0
    %v2391 = vadd.f32 0.0, %v2390
    %2392 = vdwg.mxu0
    %v2393 = vadd.f32 %v2226, %v2388
    %v2394 = vadd.f32 %v2229, %v2391
    %2395 = vrot.lane.b32.xlu0 %v1907, 104
    %v2396 = vpop.permute.xlu0 %2395
    %2397 = vrot.lane.b32.xlu0 %v1897, 104
    %v2398 = vpop.permute.xlu0 %2397
    %v2399 = vsel %vm170, %v2396, 0
    %v2401 = vsel %vm170, %v2398, 0
    %2403 = vmatpush.xpose.msra.mxu0 0.0
    %2404 = vmatpush.xpose.msra.mxu0 0.0
    %2405 = vmatpush.xpose.msra.mxu0 0.0
    %2406 = vmatpush.xpose.msra.mxu0 0.0
    %2407 = vmatpush.xpose.msra.mxu0 0.0
    %2408 = vmatpush.xpose.msra.mxu0 0.0
    %2409 = vmatpush.xpose.msra.mxu0 0.0
    %2410 = vmatpush.xpose.msra.mxu0 0.0
    %2411 = vmatpush.xpose.msra.mxu0 0.0
    %2412 = vmatpush.xpose.msra.mxu0 0.0
    %2413 = vmatpush.xpose.msra.mxu0 0.0
    %2414 = vmatpush.xpose.msra.mxu0 0.0
    %2415 = vmatpush.xpose.msra.mxu0 0.0
    %2416 = vmatpush.xpose.msra.mxu0 0.0
    %2417 = vmatpush.xpose.msra.mxu0 0.0
    %2418 = vmatpush.xpose.msra.mxu0 %v2401
    %2419 = vmatmul.f32.gmra.mxu0 %v2399
    %v2420 = vpop.f32.mrf.mxu0
    %v2421 = vadd.f32 0.0, %v2420
    %2422 = vdwg.mxu0
    %2423 = vrot.lane.b32.xlu0 %v1908, 104
    %v2424 = vpop.permute.xlu0 %2423
    %2425 = vrot.lane.b32.xlu0 %v1898, 104
    %v2426 = vpop.permute.xlu0 %2425
    %v2427 = vsel %vm170, %v2424, 0
    %v2429 = vsel %vm170, %v2426, 0
    %2431 = vmatpush.xpose.msra.mxu0 0.0
    %2432 = vmatpush.xpose.msra.mxu0 0.0
    %2433 = vmatpush.xpose.msra.mxu0 0.0
    %2434 = vmatpush.xpose.msra.mxu0 0.0
    %2435 = vmatpush.xpose.msra.mxu0 0.0
    %2436 = vmatpush.xpose.msra.mxu0 0.0
    %2437 = vmatpush.xpose.msra.mxu0 0.0
    %2438 = vmatpush.xpose.msra.mxu0 0.0
    %2439 = vmatpush.xpose.msra.mxu0 0.0
    %2440 = vmatpush.xpose.msra.mxu0 0.0
    %2441 = vmatpush.xpose.msra.mxu0 0.0
    %2442 = vmatpush.xpose.msra.mxu0 0.0
    %2443 = vmatpush.xpose.msra.mxu0 0.0
    %2444 = vmatpush.xpose.msra.mxu0 0.0
    %2445 = vmatpush.xpose.msra.mxu0 0.0
    %2446 = vmatpush.xpose.msra.mxu0 %v2429
    %2447 = vmatmul.f32.gmra.mxu0 %v2427
    %v2448 = vpop.f32.mrf.mxu0
    %v2449 = vadd.f32 0.0, %v2448
    %2450 = vdwg.mxu0
    %v2451 = vsel %vm170, %v2421, -inf
    %2452 = vmax.xlane.f32.xlu0 %v2451
    %v2453 = vpop.xlane.xlu0 %2452
    %v2454 = vsel %vm170, %v2449, -inf
    %2455 = vmax.xlane.f32.xlu0 %v2454
    %v2456 = vpop.xlane.xlu0 %2455
    %v2457 = vsub.f32 %v2421, %v2453
    %v2458 = vsub.f32 %v2449, %v2456
    %v2459 = vmul.f32 %v2457, 1.442695
    %v2460 = vpow.pop %v2459
    %v2461 = vmul.f32 %v2458, 1.442695
    %v2462 = vpow.pop %v2461
    %v2463 = vsel %vm170, %v2460, 0.0
    %2464 = vadd.xlane.f32.xlu0 %v2463
    %v2465 = vpop.xlane.xlu0 %2464
    %v2466 = vsel %vm170, %v2462, 0.0
    %2467 = vadd.xlane.f32.xlu0 %v2466
    %v2468 = vpop.xlane.xlu0 %2467
    %v2469 = vrcp.pop %v2465
    %v2470 = vrcp.pop %v2468
    %v2471 = vmul.f32 %v2460, %v2469
    %v2472 = vmul.f32 %v2462, %v2470
    %2473 = vrot.lane.b32.xlu0 %v1905, 72
    %v2474 = vpop.permute.xlu0 %2473
    %v2477 = vsel %vm170, %v2471, 0
    %2479 = vmatpush.msra.mxu0 0.0
    %2480 = vmatpush.msra.mxu0 0.0
    %2481 = vmatpush.msra.mxu0 0.0
    %2482 = vmatpush.msra.mxu0 0.0
    %2483 = vmatpush.msra.mxu0 0.0
    %2484 = vmatpush.msra.mxu0 0.0
    %2485 = vmatpush.msra.mxu0 0.0
    %2486 = vmatpush.msra.mxu0 0.0
    %2487 = vmatpush.msra.mxu0 0.0
    %2488 = vmatpush.msra.mxu0 0.0
    %2489 = vmatpush.msra.mxu0 0.0
    %2490 = vmatpush.msra.mxu0 0.0
    %2491 = vmatpush.msra.mxu0 0.0
    %2492 = vmatpush.msra.mxu0 0.0
    %2493 = vmatpush.msra.mxu0 0.0
    %2494 = vmatpush.msra.mxu0 %v2474
    %2495 = vmatmul.f32.gmra.mxu0 %v2477
    %v2496 = vpop.f32.mrf.mxu0
    %v2497 = vadd.f32 0.0, %v2496
    %2498 = vdwg.mxu0
    %2499 = vrot.lane.b32.xlu0 %v1906, 72
    %v2500 = vpop.permute.xlu0 %2499
    %v2503 = vsel %vm170, %v2472, 0
    %2505 = vmatpush.msra.mxu0 0.0
    %2506 = vmatpush.msra.mxu0 0.0
    %2507 = vmatpush.msra.mxu0 0.0
    %2508 = vmatpush.msra.mxu0 0.0
    %2509 = vmatpush.msra.mxu0 0.0
    %2510 = vmatpush.msra.mxu0 0.0
    %2511 = vmatpush.msra.mxu0 0.0
    %2512 = vmatpush.msra.mxu0 0.0
    %2513 = vmatpush.msra.mxu0 0.0
    %2514 = vmatpush.msra.mxu0 0.0
    %2515 = vmatpush.msra.mxu0 0.0
    %2516 = vmatpush.msra.mxu0 0.0
    %2517 = vmatpush.msra.mxu0 0.0
    %2518 = vmatpush.msra.mxu0 0.0
    %2519 = vmatpush.msra.mxu0 0.0
    %2520 = vmatpush.msra.mxu0 %v2500
    %2521 = vmatmul.f32.gmra.mxu0 %v2503
    %v2522 = vpop.f32.mrf.mxu0
    %v2523 = vadd.f32 0.0, %v2522
    %2524 = vdwg.mxu0
    %2525 = vrot.lane.b32.xlu0 %v1823, 32
    %v2526 = vpop.permute.xlu0 %2525
    %v2529 = vsel %vm170, %v2497, 0
    %v2532 = vsel %vm170, %v2523, 0
    %2534 = vmatpush.msra.mxu0 0.0
    %2535 = vmatpush.msra.mxu0 0.0
    %2536 = vmatpush.msra.mxu0 0.0
    %2537 = vmatpush.msra.mxu0 0.0
    %2538 = vmatpush.msra.mxu0 0.0
    %2539 = vmatpush.msra.mxu0 0.0
    %2540 = vmatpush.msra.mxu0 0.0
    %2541 = vmatpush.msra.mxu0 0.0
    %2542 = vmatpush.msra.mxu0 0.0
    %2543 = vmatpush.msra.mxu0 0.0
    %2544 = vmatpush.msra.mxu0 0.0
    %2545 = vmatpush.msra.mxu0 0.0
    %2546 = vmatpush.msra.mxu0 0.0
    %2547 = vmatpush.msra.mxu0 0.0
    %2548 = vmatpush.msra.mxu0 0.0
    %2549 = vmatpush.msra.mxu0 %v2526
    %2550 = vmatmul.f32.gmra.mxu0 %v2529
    %v2551 = vpop.f32.mrf.mxu0
    %v2552 = vadd.f32 0.0, %v2551
    %2553 = vmatmul.f32.gmra.mxu0 %v2532
    %v2554 = vpop.f32.mrf.mxu0
    %v2555 = vadd.f32 0.0, %v2554
    %2556 = vdwg.mxu0
    %v2557 = vadd.f32 %v2393, %v2552
    %v2558 = vadd.f32 %v2394, %v2555
    %v2559 = vld [vmem:[%s1824 + $0x3] sm:$0x1]
    %v2560 = vperm.slane %v2559, 0
    %v2561 = vadd.f32 %v2557, %v2560
    %v2562 = vadd.f32 %v2558, %v2560
    %v2563 = vadd.f32 %v2561, %v1817
    %v2564 = vadd.f32 %v2562, %v1818
    %v2565 = vsel %vm81, %v2563, 0.0
    %2566 = vadd.xlane.f32.xlu0 %v2565
    %v2567 = vpop.xlane.xlu0 %2566
    %v2568 = vsel %vm81, %v2564, 0.0
    %2569 = vadd.xlane.f32.xlu0 %v2568
    %v2570 = vpop.xlane.xlu0 %2569
    %v2571 = vmul.f32 %v2567, %v839
    %v2572 = vmul.f32 %v2570, %v839
    %v2573 = vsub.f32 %v2563, %v2571
    %v2574 = vsub.f32 %v2564, %v2572
    %v2575 = vmul.f32 %v2573, %v2573
    %v2576 = vmul.f32 %v2574, %v2574
    %v2577 = vsel %vm81, %v2575, 0.0
    %2578 = vadd.xlane.f32.xlu0 %v2577
    %v2579 = vpop.xlane.xlu0 %2578
    %v2580 = vsel %vm81, %v2576, 0.0
    %2581 = vadd.xlane.f32.xlu0 %v2580
    %v2582 = vpop.xlane.xlu0 %2581
    %v2583 = vmul.f32 %v2579, %v839
    %v2584 = vmul.f32 %v2582, %v839
    %v2585 = vadd.f32 %v2583, 1e-05
    %v2586 = vadd.f32 %v2584, 1e-05
    %v2587 = vrsqrt.pop %v2585
    %v2588 = vmul.f32 %v2587, %v2585
    %v2589 = vmul.f32 %v2588, %v2587
    %v2590 = vmul.f32 0.5, %v2589
    %v2591 = vsub.f32 1.5, %v2590
    %v2592 = vmul.f32 %v2587, %v2591
    %vm2593 = vweird.f32 %v2585
    %vm2594 = vweird.f32 %v2587
    %vm2595 = vmor %vm2593, %vm2594
    %v2596 = vsel %vm2595, %v2587, %v2592
    %v2597 = vrsqrt.pop %v2586
    %v2598 = vmul.f32 %v2597, %v2586
    %v2599 = vmul.f32 %v2598, %v2597
    %v2600 = vmul.f32 0.5, %v2599
    %v2601 = vsub.f32 1.5, %v2600
    %v2602 = vmul.f32 %v2597, %v2601
    %vm2603 = vweird.f32 %v2586
    %vm2604 = vweird.f32 %v2597
    %vm2605 = vmor %vm2603, %vm2604
    %v2606 = vsel %vm2605, %v2597, %v2602
    %v2607 = vmul.f32 %v2573, %v2596
    %v2608 = vmul.f32 %v2574, %v2606
    %v2609 = vld [vmem:[%s1824 + $0x9] sm:$0x1]
    %v2610 = vperm.slane %v2609, 0
    %v2611 = vmul.f32 %v2607, %v2610
    %v2612 = vmul.f32 %v2608, %v2610
    %v2613 = vld [vmem:[%s1824 + $0xa] sm:$0x1]
    %v2614 = vperm.slane %v2613, 0
    %v2615 = vadd.f32 %v2611, %v2614
    %v2616 = vadd.f32 %v2612, %v2614
    %s2617 = scalar_lea.vmem %s2, 96
    %v2618 = vld [vmem:[%s2617] sm:$0xff]
    %v2619 = vld [vmem:[%s2617 + $0x8] sm:$0xff]
    %v2620 = vld [vmem:[%s2617 + $0x10] sm:$0xff]
    %v2621 = vld [vmem:[%s2617 + $0x18] sm:$0xff]
    %v2622 = vld [vmem:[%s1824 + $0x4] sm:$0x1]
    %v2623 = vperm.slane %v2622, 0
    %v2625 = vsel %vm81, %v2615, 0
    %v2628 = vsel %vm81, %v2616, 0
    %2630 = vmatpush.msra.mxu0 0.0
    %2631 = vmatpush.msra.mxu0 0.0
    %2632 = vmatpush.msra.mxu0 0.0
    %2633 = vmatpush.msra.mxu0 0.0
    %2634 = vmatpush.msra.mxu0 0.0
    %2635 = vmatpush.msra.mxu0 0.0
    %2636 = vmatpush.msra.mxu0 0.0
    %2637 = vmatpush.msra.mxu0 0.0
    %2638 = vmatpush.msra.mxu0 0.0
    %2639 = vmatpush.msra.mxu0 0.0
    %2640 = vmatpush.msra.mxu0 0.0
    %2641 = vmatpush.msra.mxu0 0.0
    %2642 = vmatpush.msra.mxu0 %v2621
    %2643 = vmatpush.msra.mxu0 %v2620
    %2644 = vmatpush.msra.mxu0 %v2619
    %2645 = vmatpush.msra.mxu0 %v2618
    %2646 = vmatmul.f32.gmra.mxu0 %v2625
    %v2647 = vpop.f32.mrf.mxu0
    %v2648 = vadd.f32 %v2623, %v2647
    %2649 = vmatmul.f32.gmra.mxu0 %v2628
    %v2650 = vpop.f32.mrf.mxu0
    %v2651 = vadd.f32 %v2623, %v2650
    %2652 = vdwg.mxu0
    %2657 = vrot.lane.b32.xlu0 %v2618, 96
    %v2658 = vpop.permute.xlu0 %2657
    %2659 = vrot.lane.b32.xlu0 %v2619, 96
    %v2660 = vpop.permute.xlu0 %2659
    %2661 = vrot.lane.b32.xlu0 %v2620, 96
    %v2662 = vpop.permute.xlu0 %2661
    %2663 = vrot.lane.b32.xlu0 %v2621, 96
    %v2664 = vpop.permute.xlu0 %2663
    %v2670 = vsel %vm81, %v1812, 0
    %v2673 = vsel %vm81, %v1813, 0
    %2675 = vmatpush.msra.mxu0 0.0
    %2676 = vmatpush.msra.mxu0 0.0
    %2677 = vmatpush.msra.mxu0 0.0
    %2678 = vmatpush.msra.mxu0 0.0
    %2679 = vmatpush.msra.mxu0 0.0
    %2680 = vmatpush.msra.mxu0 0.0
    %2681 = vmatpush.msra.mxu0 0.0
    %2682 = vmatpush.msra.mxu0 0.0
    %2683 = vmatpush.msra.mxu0 0.0
    %2684 = vmatpush.msra.mxu0 0.0
    %2685 = vmatpush.msra.mxu0 0.0
    %2686 = vmatpush.msra.mxu0 0.0
    %2687 = vmatpush.msra.mxu0 %v2664
    %2688 = vmatpush.msra.mxu0 %v2662
    %2689 = vmatpush.msra.mxu0 %v2660
    %2690 = vmatpush.msra.mxu0 %v2658
    %2691 = vmatmul.f32.gmra.mxu0 %v2670
    %v2692 = vpop.f32.mrf.mxu0
    %v2693 = vadd.f32 0.0, %v2692
    %2694 = vmatmul.f32.gmra.mxu0 %v2673
    %v2695 = vpop.f32.mrf.mxu0
    %v2696 = vadd.f32 0.0, %v2695
    %2697 = vdwg.mxu0
    %v2698 = vld [vmem:[%s1824 + $0x5] sm:$0x1]
    %v2699 = vperm.slane %v2698, 0
    %v2700 = vadd.f32 %v2693, %v2699
    %v2701 = vadd.f32 %v2696, %v2699
    %v2702 = vld [vmem:[%s1824 + $0x6] sm:$0x1]
    %v2703 = vperm.slane %v2702, 0
    %2705 = vrot.lane.b32.xlu0 %v2703, 32
    %v2706 = vpop.permute.xlu0 %2705
    %v2708 = vadd.f32 %v2693, %v2706
    %v2709 = vadd.f32 %v2696, %v2706
    %v2710 = vmul.f32 %v2648, 0.35355338
    %v2711 = vmul.f32 %v2651, 0.35355338
    %v2713 = vsel %vm170, %v2710, 0
    %v2716 = vsel %vm170, %v2700, 0
    %2718 = vmatpush.xpose.msra.mxu0 0.0
    %2719 = vmatpush.xpose.msra.mxu0 0.0
    %2720 = vmatpush.xpose.msra.mxu0 0.0
    %2721 = vmatpush.xpose.msra.mxu0 0.0
    %2722 = vmatpush.xpose.msra.mxu0 0.0
    %2723 = vmatpush.xpose.msra.mxu0 0.0
    %2724 = vmatpush.xpose.msra.mxu0 0.0
    %2725 = vmatpush.xpose.msra.mxu0 0.0
    %2726 = vmatpush.xpose.msra.mxu0 0.0
    %2727 = vmatpush.xpose.msra.mxu0 0.0
    %2728 = vmatpush.xpose.msra.mxu0 0.0
    %2729 = vmatpush.xpose.msra.mxu0 0.0
    %2730 = vmatpush.xpose.msra.mxu0 0.0
    %2731 = vmatpush.xpose.msra.mxu0 0.0
    %2732 = vmatpush.xpose.msra.mxu0 0.0
    %2733 = vmatpush.xpose.msra.mxu0 %v2716
    %2734 = vmatmul.f32.gmra.mxu0 %v2713
    %v2735 = vpop.f32.mrf.mxu0
    %v2736 = vadd.f32 0.0, %v2735
    %2737 = vdwg.mxu0
    %v2739 = vsel %vm170, %v2711, 0
    %v2742 = vsel %vm170, %v2701, 0
    %2744 = vmatpush.xpose.msra.mxu0 0.0
    %2745 = vmatpush.xpose.msra.mxu0 0.0
    %2746 = vmatpush.xpose.msra.mxu0 0.0
    %2747 = vmatpush.xpose.msra.mxu0 0.0
    %2748 = vmatpush.xpose.msra.mxu0 0.0
    %2749 = vmatpush.xpose.msra.mxu0 0.0
    %2750 = vmatpush.xpose.msra.mxu0 0.0
    %2751 = vmatpush.xpose.msra.mxu0 0.0
    %2752 = vmatpush.xpose.msra.mxu0 0.0
    %2753 = vmatpush.xpose.msra.mxu0 0.0
    %2754 = vmatpush.xpose.msra.mxu0 0.0
    %2755 = vmatpush.xpose.msra.mxu0 0.0
    %2756 = vmatpush.xpose.msra.mxu0 0.0
    %2757 = vmatpush.xpose.msra.mxu0 0.0
    %2758 = vmatpush.xpose.msra.mxu0 0.0
    %2759 = vmatpush.xpose.msra.mxu0 %v2742
    %2760 = vmatmul.f32.gmra.mxu0 %v2739
    %v2761 = vpop.f32.mrf.mxu0
    %v2762 = vadd.f32 0.0, %v2761
    %2763 = vdwg.mxu0
    %v2764 = vsel %vm170, %v2736, -inf
    %2765 = vmax.xlane.f32.xlu0 %v2764
    %v2766 = vpop.xlane.xlu0 %2765
    %v2767 = vsel %vm170, %v2762, -inf
    %2768 = vmax.xlane.f32.xlu0 %v2767
    %v2769 = vpop.xlane.xlu0 %2768
    %v2770 = vsub.f32 %v2736, %v2766
    %v2771 = vsub.f32 %v2762, %v2769
    %v2772 = vmul.f32 %v2770, 1.442695
    %v2773 = vpow.pop %v2772
    %v2774 = vmul.f32 %v2771, 1.442695
    %v2775 = vpow.pop %v2774
    %v2776 = vsel %vm170, %v2773, 0.0
    %2777 = vadd.xlane.f32.xlu0 %v2776
    %v2778 = vpop.xlane.xlu0 %2777
    %v2779 = vsel %vm170, %v2775, 0.0
    %2780 = vadd.xlane.f32.xlu0 %v2779
    %v2781 = vpop.xlane.xlu0 %2780
    %v2782 = vrcp.pop %v2778
    %v2783 = vrcp.pop %v2781
    %v2784 = vmul.f32 %v2773, %v2782
    %v2785 = vmul.f32 %v2775, %v2783
    %2787 = vrot.lane.b32.xlu0 %v2708, 96
    %v2788 = vpop.permute.xlu0 %2787
    %v2791 = vsel %vm170, %v2784, 0
    %2793 = vmatpush.msra.mxu0 0.0
    %2794 = vmatpush.msra.mxu0 0.0
    %2795 = vmatpush.msra.mxu0 0.0
    %2796 = vmatpush.msra.mxu0 0.0
    %2797 = vmatpush.msra.mxu0 0.0
    %2798 = vmatpush.msra.mxu0 0.0
    %2799 = vmatpush.msra.mxu0 0.0
    %2800 = vmatpush.msra.mxu0 0.0
    %2801 = vmatpush.msra.mxu0 0.0
    %2802 = vmatpush.msra.mxu0 0.0
    %2803 = vmatpush.msra.mxu0 0.0
    %2804 = vmatpush.msra.mxu0 0.0
    %2805 = vmatpush.msra.mxu0 0.0
    %2806 = vmatpush.msra.mxu0 0.0
    %2807 = vmatpush.msra.mxu0 0.0
    %2808 = vmatpush.msra.mxu0 %v2788
    %2809 = vmatmul.f32.gmra.mxu0 %v2791
    %v2810 = vpop.f32.mrf.mxu0
    %v2811 = vadd.f32 0.0, %v2810
    %2812 = vdwg.mxu0
    %2814 = vrot.lane.b32.xlu0 %v2709, 96
    %v2815 = vpop.permute.xlu0 %2814
    %v2818 = vsel %vm170, %v2785, 0
    %2820 = vmatpush.msra.mxu0 0.0
    %2821 = vmatpush.msra.mxu0 0.0
    %2822 = vmatpush.msra.mxu0 0.0
    %2823 = vmatpush.msra.mxu0 0.0
    %2824 = vmatpush.msra.mxu0 0.0
    %2825 = vmatpush.msra.mxu0 0.0
    %2826 = vmatpush.msra.mxu0 0.0
    %2827 = vmatpush.msra.mxu0 0.0
    %2828 = vmatpush.msra.mxu0 0.0
    %2829 = vmatpush.msra.mxu0 0.0
    %2830 = vmatpush.msra.mxu0 0.0
    %2831 = vmatpush.msra.mxu0 0.0
    %2832 = vmatpush.msra.mxu0 0.0
    %2833 = vmatpush.msra.mxu0 0.0
    %2834 = vmatpush.msra.mxu0 0.0
    %2835 = vmatpush.msra.mxu0 %v2815
    %2836 = vmatmul.f32.gmra.mxu0 %v2818
    %v2837 = vpop.f32.mrf.mxu0
    %v2838 = vadd.f32 0.0, %v2837
    %2839 = vdwg.mxu0
    %2840 = vrot.lane.b32.xlu0 %v2710, 120
    %v2841 = vpop.permute.xlu0 %2840
    %2842 = vrot.lane.b32.xlu0 %v2700, 120
    %v2843 = vpop.permute.xlu0 %2842
    %v2844 = vsel %vm170, %v2841, 0
    %v2846 = vsel %vm170, %v2843, 0
    %2848 = vmatpush.xpose.msra.mxu0 0.0
    %2849 = vmatpush.xpose.msra.mxu0 0.0
    %2850 = vmatpush.xpose.msra.mxu0 0.0
    %2851 = vmatpush.xpose.msra.mxu0 0.0
    %2852 = vmatpush.xpose.msra.mxu0 0.0
    %2853 = vmatpush.xpose.msra.mxu0 0.0
    %2854 = vmatpush.xpose.msra.mxu0 0.0
    %2855 = vmatpush.xpose.msra.mxu0 0.0
    %2856 = vmatpush.xpose.msra.mxu0 0.0
    %2857 = vmatpush.xpose.msra.mxu0 0.0
    %2858 = vmatpush.xpose.msra.mxu0 0.0
    %2859 = vmatpush.xpose.msra.mxu0 0.0
    %2860 = vmatpush.xpose.msra.mxu0 0.0
    %2861 = vmatpush.xpose.msra.mxu0 0.0
    %2862 = vmatpush.xpose.msra.mxu0 0.0
    %2863 = vmatpush.xpose.msra.mxu0 %v2846
    %2864 = vmatmul.f32.gmra.mxu0 %v2844
    %v2865 = vpop.f32.mrf.mxu0
    %v2866 = vadd.f32 0.0, %v2865
    %2867 = vdwg.mxu0
    %2868 = vrot.lane.b32.xlu0 %v2711, 120
    %v2869 = vpop.permute.xlu0 %2868
    %2870 = vrot.lane.b32.xlu0 %v2701, 120
    %v2871 = vpop.permute.xlu0 %2870
    %v2872 = vsel %vm170, %v2869, 0
    %v2874 = vsel %vm170, %v2871, 0
    %2876 = vmatpush.xpose.msra.mxu0 0.0
    %2877 = vmatpush.xpose.msra.mxu0 0.0
    %2878 = vmatpush.xpose.msra.mxu0 0.0
    %2879 = vmatpush.xpose.msra.mxu0 0.0
    %2880 = vmatpush.xpose.msra.mxu0 0.0
    %2881 = vmatpush.xpose.msra.mxu0 0.0
    %2882 = vmatpush.xpose.msra.mxu0 0.0
    %2883 = vmatpush.xpose.msra.mxu0 0.0
    %2884 = vmatpush.xpose.msra.mxu0 0.0
    %2885 = vmatpush.xpose.msra.mxu0 0.0
    %2886 = vmatpush.xpose.msra.mxu0 0.0
    %2887 = vmatpush.xpose.msra.mxu0 0.0
    %2888 = vmatpush.xpose.msra.mxu0 0.0
    %2889 = vmatpush.xpose.msra.mxu0 0.0
    %2890 = vmatpush.xpose.msra.mxu0 0.0
    %2891 = vmatpush.xpose.msra.mxu0 %v2874
    %2892 = vmatmul.f32.gmra.mxu0 %v2872
    %v2893 = vpop.f32.mrf.mxu0
    %v2894 = vadd.f32 0.0, %v2893
    %2895 = vdwg.mxu0
    %v2896 = vsel %vm170, %v2866, -inf
    %2897 = vmax.xlane.f32.xlu0 %v2896
    %v2898 = vpop.xlane.xlu0 %2897
    %v2899 = vsel %vm170, %v2894, -inf
    %2900 = vmax.xlane.f32.xlu0 %v2899
    %v2901 = vpop.xlane.xlu0 %2900
    %v2902 = vsub.f32 %v2866, %v2898
    %v2903 = vsub.f32 %v2894, %v2901
    %v2904 = vmul.f32 %v2902, 1.442695
    %v2905 = vpow.pop %v2904
    %v2906 = vmul.f32 %v2903, 1.442695
    %v2907 = vpow.pop %v2906
    %v2908 = vsel %vm170, %v2905, 0.0
    %2909 = vadd.xlane.f32.xlu0 %v2908
    %v2910 = vpop.xlane.xlu0 %2909
    %v2911 = vsel %vm170, %v2907, 0.0
    %2912 = vadd.xlane.f32.xlu0 %v2911
    %v2913 = vpop.xlane.xlu0 %2912
    %v2914 = vrcp.pop %v2910
    %v2915 = vrcp.pop %v2913
    %v2916 = vmul.f32 %v2905, %v2914
    %v2917 = vmul.f32 %v2907, %v2915
    %2918 = vrot.lane.b32.xlu0 %v2708, 88
    %v2919 = vpop.permute.xlu0 %2918
    %v2922 = vsel %vm170, %v2916, 0
    %2924 = vmatpush.msra.mxu0 0.0
    %2925 = vmatpush.msra.mxu0 0.0
    %2926 = vmatpush.msra.mxu0 0.0
    %2927 = vmatpush.msra.mxu0 0.0
    %2928 = vmatpush.msra.mxu0 0.0
    %2929 = vmatpush.msra.mxu0 0.0
    %2930 = vmatpush.msra.mxu0 0.0
    %2931 = vmatpush.msra.mxu0 0.0
    %2932 = vmatpush.msra.mxu0 0.0
    %2933 = vmatpush.msra.mxu0 0.0
    %2934 = vmatpush.msra.mxu0 0.0
    %2935 = vmatpush.msra.mxu0 0.0
    %2936 = vmatpush.msra.mxu0 0.0
    %2937 = vmatpush.msra.mxu0 0.0
    %2938 = vmatpush.msra.mxu0 0.0
    %2939 = vmatpush.msra.mxu0 %v2919
    %2940 = vmatmul.f32.gmra.mxu0 %v2922
    %v2941 = vpop.f32.mrf.mxu0
    %v2942 = vadd.f32 0.0, %v2941
    %2943 = vdwg.mxu0
    %2944 = vrot.lane.b32.xlu0 %v2709, 88
    %v2945 = vpop.permute.xlu0 %2944
    %v2948 = vsel %vm170, %v2917, 0
    %2950 = vmatpush.msra.mxu0 0.0
    %2951 = vmatpush.msra.mxu0 0.0
    %2952 = vmatpush.msra.mxu0 0.0
    %2953 = vmatpush.msra.mxu0 0.0
    %2954 = vmatpush.msra.mxu0 0.0
    %2955 = vmatpush.msra.mxu0 0.0
    %2956 = vmatpush.msra.mxu0 0.0
    %2957 = vmatpush.msra.mxu0 0.0
    %2958 = vmatpush.msra.mxu0 0.0
    %2959 = vmatpush.msra.mxu0 0.0
    %2960 = vmatpush.msra.mxu0 0.0
    %2961 = vmatpush.msra.mxu0 0.0
    %2962 = vmatpush.msra.mxu0 0.0
    %2963 = vmatpush.msra.mxu0 0.0
    %2964 = vmatpush.msra.mxu0 0.0
    %2965 = vmatpush.msra.mxu0 %v2945
    %2966 = vmatmul.f32.gmra.mxu0 %v2948
    %v2967 = vpop.f32.mrf.mxu0
    %v2968 = vadd.f32 0.0, %v2967
    %2969 = vdwg.mxu0
    %2970 = vrot.lane.b32.xlu0 %v2619, 32
    %v2971 = vpop.permute.xlu0 %2970
    %v2974 = vsel %vm170, %v2942, 0
    %v2977 = vsel %vm170, %v2968, 0
    %2979 = vmatpush.msra.mxu0 0.0
    %2980 = vmatpush.msra.mxu0 0.0
    %2981 = vmatpush.msra.mxu0 0.0
    %2982 = vmatpush.msra.mxu0 0.0
    %2983 = vmatpush.msra.mxu0 0.0
    %2984 = vmatpush.msra.mxu0 0.0
    %2985 = vmatpush.msra.mxu0 0.0
    %2986 = vmatpush.msra.mxu0 0.0
    %2987 = vmatpush.msra.mxu0 0.0
    %2988 = vmatpush.msra.mxu0 0.0
    %2989 = vmatpush.msra.mxu0 0.0
    %2990 = vmatpush.msra.mxu0 0.0
    %2991 = vmatpush.msra.mxu0 0.0
    %2992 = vmatpush.msra.mxu0 0.0
    %2993 = vmatpush.msra.mxu0 0.0
    %2994 = vmatpush.msra.mxu0 %v2971
    %2995 = vmatmul.f32.gmra.mxu0 %v2974
    %v2996 = vpop.f32.mrf.mxu0
    %v2997 = vadd.f32 0.0, %v2996
    %2998 = vmatmul.f32.gmra.mxu0 %v2977
    %v2999 = vpop.f32.mrf.mxu0
    %v3000 = vadd.f32 0.0, %v2999
    %3001 = vdwg.mxu0
    %3002 = vrot.lane.b32.xlu0 %v2618, 32
    %v3003 = vpop.permute.xlu0 %3002
    %v3006 = vsel %vm170, %v2811, 0
    %v3009 = vsel %vm170, %v2838, 0
    %3011 = vmatpush.msra.mxu0 0.0
    %3012 = vmatpush.msra.mxu0 0.0
    %3013 = vmatpush.msra.mxu0 0.0
    %3014 = vmatpush.msra.mxu0 0.0
    %3015 = vmatpush.msra.mxu0 0.0
    %3016 = vmatpush.msra.mxu0 0.0
    %3017 = vmatpush.msra.mxu0 0.0
    %3018 = vmatpush.msra.mxu0 0.0
    %3019 = vmatpush.msra.mxu0 0.0
    %3020 = vmatpush.msra.mxu0 0.0
    %3021 = vmatpush.msra.mxu0 0.0
    %3022 = vmatpush.msra.mxu0 0.0
    %3023 = vmatpush.msra.mxu0 0.0
    %3024 = vmatpush.msra.mxu0 0.0
    %3025 = vmatpush.msra.mxu0 0.0
    %3026 = vmatpush.msra.mxu0 %v3003
    %3027 = vmatmul.f32.gmra.mxu0 %v3006
    %v3028 = vpop.f32.mrf.mxu0
    %v3029 = vadd.f32 %v2997, %v3028
    %3030 = vmatmul.f32.gmra.mxu0 %v3009
    %v3031 = vpop.f32.mrf.mxu0
    %v3032 = vadd.f32 %v3000, %v3031
    %3033 = vdwg.mxu0
    %3034 = vrot.lane.b32.xlu0 %v2710, 112
    %v3035 = vpop.permute.xlu0 %3034
    %3036 = vrot.lane.b32.xlu0 %v2700, 112
    %v3037 = vpop.permute.xlu0 %3036
    %v3038 = vsel %vm170, %v3035, 0
    %v3040 = vsel %vm170, %v3037, 0
    %3042 = vmatpush.xpose.msra.mxu0 0.0
    %3043 = vmatpush.xpose.msra.mxu0 0.0
    %3044 = vmatpush.xpose.msra.mxu0 0.0
    %3045 = vmatpush.xpose.msra.mxu0 0.0
    %3046 = vmatpush.xpose.msra.mxu0 0.0
    %3047 = vmatpush.xpose.msra.mxu0 0.0
    %3048 = vmatpush.xpose.msra.mxu0 0.0
    %3049 = vmatpush.xpose.msra.mxu0 0.0
    %3050 = vmatpush.xpose.msra.mxu0 0.0
    %3051 = vmatpush.xpose.msra.mxu0 0.0
    %3052 = vmatpush.xpose.msra.mxu0 0.0
    %3053 = vmatpush.xpose.msra.mxu0 0.0
    %3054 = vmatpush.xpose.msra.mxu0 0.0
    %3055 = vmatpush.xpose.msra.mxu0 0.0
    %3056 = vmatpush.xpose.msra.mxu0 0.0
    %3057 = vmatpush.xpose.msra.mxu0 %v3040
    %3058 = vmatmul.f32.gmra.mxu0 %v3038
    %v3059 = vpop.f32.mrf.mxu0
    %v3060 = vadd.f32 0.0, %v3059
    %3061 = vdwg.mxu0
    %3062 = vrot.lane.b32.xlu0 %v2711, 112
    %v3063 = vpop.permute.xlu0 %3062
    %3064 = vrot.lane.b32.xlu0 %v2701, 112
    %v3065 = vpop.permute.xlu0 %3064
    %v3066 = vsel %vm170, %v3063, 0
    %v3068 = vsel %vm170, %v3065, 0
    %3070 = vmatpush.xpose.msra.mxu0 0.0
    %3071 = vmatpush.xpose.msra.mxu0 0.0
    %3072 = vmatpush.xpose.msra.mxu0 0.0
    %3073 = vmatpush.xpose.msra.mxu0 0.0
    %3074 = vmatpush.xpose.msra.mxu0 0.0
    %3075 = vmatpush.xpose.msra.mxu0 0.0
    %3076 = vmatpush.xpose.msra.mxu0 0.0
    %3077 = vmatpush.xpose.msra.mxu0 0.0
    %3078 = vmatpush.xpose.msra.mxu0 0.0
    %3079 = vmatpush.xpose.msra.mxu0 0.0
    %3080 = vmatpush.xpose.msra.mxu0 0.0
    %3081 = vmatpush.xpose.msra.mxu0 0.0
    %3082 = vmatpush.xpose.msra.mxu0 0.0
    %3083 = vmatpush.xpose.msra.mxu0 0.0
    %3084 = vmatpush.xpose.msra.mxu0 0.0
    %3085 = vmatpush.xpose.msra.mxu0 %v3068
    %3086 = vmatmul.f32.gmra.mxu0 %v3066
    %v3087 = vpop.f32.mrf.mxu0
    %v3088 = vadd.f32 0.0, %v3087
    %3089 = vdwg.mxu0
    %v3090 = vsel %vm170, %v3060, -inf
    %3091 = vmax.xlane.f32.xlu0 %v3090
    %v3092 = vpop.xlane.xlu0 %3091
    %v3093 = vsel %vm170, %v3088, -inf
    %3094 = vmax.xlane.f32.xlu0 %v3093
    %v3095 = vpop.xlane.xlu0 %3094
    %v3096 = vsub.f32 %v3060, %v3092
    %v3097 = vsub.f32 %v3088, %v3095
    %v3098 = vmul.f32 %v3096, 1.442695
    %v3099 = vpow.pop %v3098
    %v3100 = vmul.f32 %v3097, 1.442695
    %v3101 = vpow.pop %v3100
    %v3102 = vsel %vm170, %v3099, 0.0
    %3103 = vadd.xlane.f32.xlu0 %v3102
    %v3104 = vpop.xlane.xlu0 %3103
    %v3105 = vsel %vm170, %v3101, 0.0
    %3106 = vadd.xlane.f32.xlu0 %v3105
    %v3107 = vpop.xlane.xlu0 %3106
    %v3108 = vrcp.pop %v3104
    %v3109 = vrcp.pop %v3107
    %v3110 = vmul.f32 %v3099, %v3108
    %v3111 = vmul.f32 %v3101, %v3109
    %3112 = vrot.lane.b32.xlu0 %v2708, 80
    %v3113 = vpop.permute.xlu0 %3112
    %v3116 = vsel %vm170, %v3110, 0
    %3118 = vmatpush.msra.mxu0 0.0
    %3119 = vmatpush.msra.mxu0 0.0
    %3120 = vmatpush.msra.mxu0 0.0
    %3121 = vmatpush.msra.mxu0 0.0
    %3122 = vmatpush.msra.mxu0 0.0
    %3123 = vmatpush.msra.mxu0 0.0
    %3124 = vmatpush.msra.mxu0 0.0
    %3125 = vmatpush.msra.mxu0 0.0
    %3126 = vmatpush.msra.mxu0 0.0
    %3127 = vmatpush.msra.mxu0 0.0
    %3128 = vmatpush.msra.mxu0 0.0
    %3129 = vmatpush.msra.mxu0 0.0
    %3130 = vmatpush.msra.mxu0 0.0
    %3131 = vmatpush.msra.mxu0 0.0
    %3132 = vmatpush.msra.mxu0 0.0
    %3133 = vmatpush.msra.mxu0 %v3113
    %3134 = vmatmul.f32.gmra.mxu0 %v3116
    %v3135 = vpop.f32.mrf.mxu0
    %v3136 = vadd.f32 0.0, %v3135
    %3137 = vdwg.mxu0
    %3138 = vrot.lane.b32.xlu0 %v2709, 80
    %v3139 = vpop.permute.xlu0 %3138
    %v3142 = vsel %vm170, %v3111, 0
    %3144 = vmatpush.msra.mxu0 0.0
    %3145 = vmatpush.msra.mxu0 0.0
    %3146 = vmatpush.msra.mxu0 0.0
    %3147 = vmatpush.msra.mxu0 0.0
    %3148 = vmatpush.msra.mxu0 0.0
    %3149 = vmatpush.msra.mxu0 0.0
    %3150 = vmatpush.msra.mxu0 0.0
    %3151 = vmatpush.msra.mxu0 0.0
    %3152 = vmatpush.msra.mxu0 0.0
    %3153 = vmatpush.msra.mxu0 0.0
    %3154 = vmatpush.msra.mxu0 0.0
    %3155 = vmatpush.msra.mxu0 0.0
    %3156 = vmatpush.msra.mxu0 0.0
    %3157 = vmatpush.msra.mxu0 0.0
    %3158 = vmatpush.msra.mxu0 0.0
    %3159 = vmatpush.msra.mxu0 %v3139
    %3160 = vmatmul.f32.gmra.mxu0 %v3142
    %v3161 = vpop.f32.mrf.mxu0
    %v3162 = vadd.f32 0.0, %v3161
    %3163 = vdwg.mxu0
    %3164 = vrot.lane.b32.xlu0 %v2620, 32
    %v3165 = vpop.permute.xlu0 %3164
    %v3168 = vsel %vm170, %v3136, 0
    %v3171 = vsel %vm170, %v3162, 0
    %3173 = vmatpush.msra.mxu0 0.0
    %3174 = vmatpush.msra.mxu0 0.0
    %3175 = vmatpush.msra.mxu0 0.0
    %3176 = vmatpush.msra.mxu0 0.0
    %3177 = vmatpush.msra.mxu0 0.0
    %3178 = vmatpush.msra.mxu0 0.0
    %3179 = vmatpush.msra.mxu0 0.0
    %3180 = vmatpush.msra.mxu0 0.0
    %3181 = vmatpush.msra.mxu0 0.0
    %3182 = vmatpush.msra.mxu0 0.0
    %3183 = vmatpush.msra.mxu0 0.0
    %3184 = vmatpush.msra.mxu0 0.0
    %3185 = vmatpush.msra.mxu0 0.0
    %3186 = vmatpush.msra.mxu0 0.0
    %3187 = vmatpush.msra.mxu0 0.0
    %3188 = vmatpush.msra.mxu0 %v3165
    %3189 = vmatmul.f32.gmra.mxu0 %v3168
    %v3190 = vpop.f32.mrf.mxu0
    %v3191 = vadd.f32 0.0, %v3190
    %3192 = vmatmul.f32.gmra.mxu0 %v3171
    %v3193 = vpop.f32.mrf.mxu0
    %v3194 = vadd.f32 0.0, %v3193
    %3195 = vdwg.mxu0
    %v3196 = vadd.f32 %v3029, %v3191
    %v3197 = vadd.f32 %v3032, %v3194
    %3198 = vrot.lane.b32.xlu0 %v2710, 104
    %v3199 = vpop.permute.xlu0 %3198
    %3200 = vrot.lane.b32.xlu0 %v2700, 104
    %v3201 = vpop.permute.xlu0 %3200
    %v3202 = vsel %vm170, %v3199, 0
    %v3204 = vsel %vm170, %v3201, 0
    %3206 = vmatpush.xpose.msra.mxu0 0.0
    %3207 = vmatpush.xpose.msra.mxu0 0.0
    %3208 = vmatpush.xpose.msra.mxu0 0.0
    %3209 = vmatpush.xpose.msra.mxu0 0.0
    %3210 = vmatpush.xpose.msra.mxu0 0.0
    %3211 = vmatpush.xpose.msra.mxu0 0.0
    %3212 = vmatpush.xpose.msra.mxu0 0.0
    %3213 = vmatpush.xpose.msra.mxu0 0.0
    %3214 = vmatpush.xpose.msra.mxu0 0.0
    %3215 = vmatpush.xpose.msra.mxu0 0.0
    %3216 = vmatpush.xpose.msra.mxu0 0.0
    %3217 = vmatpush.xpose.msra.mxu0 0.0
    %3218 = vmatpush.xpose.msra.mxu0 0.0
    %3219 = vmatpush.xpose.msra.mxu0 0.0
    %3220 = vmatpush.xpose.msra.mxu0 0.0
    %3221 = vmatpush.xpose.msra.mxu0 %v3204
    %3222 = vmatmul.f32.gmra.mxu0 %v3202
    %v3223 = vpop.f32.mrf.mxu0
    %v3224 = vadd.f32 0.0, %v3223
    %3225 = vdwg.mxu0
    %3226 = vrot.lane.b32.xlu0 %v2711, 104
    %v3227 = vpop.permute.xlu0 %3226
    %3228 = vrot.lane.b32.xlu0 %v2701, 104
    %v3229 = vpop.permute.xlu0 %3228
    %v3230 = vsel %vm170, %v3227, 0
    %v3232 = vsel %vm170, %v3229, 0
    %3234 = vmatpush.xpose.msra.mxu0 0.0
    %3235 = vmatpush.xpose.msra.mxu0 0.0
    %3236 = vmatpush.xpose.msra.mxu0 0.0
    %3237 = vmatpush.xpose.msra.mxu0 0.0
    %3238 = vmatpush.xpose.msra.mxu0 0.0
    %3239 = vmatpush.xpose.msra.mxu0 0.0
    %3240 = vmatpush.xpose.msra.mxu0 0.0
    %3241 = vmatpush.xpose.msra.mxu0 0.0
    %3242 = vmatpush.xpose.msra.mxu0 0.0
    %3243 = vmatpush.xpose.msra.mxu0 0.0
    %3244 = vmatpush.xpose.msra.mxu0 0.0
    %3245 = vmatpush.xpose.msra.mxu0 0.0
    %3246 = vmatpush.xpose.msra.mxu0 0.0
    %3247 = vmatpush.xpose.msra.mxu0 0.0
    %3248 = vmatpush.xpose.msra.mxu0 0.0
    %3249 = vmatpush.xpose.msra.mxu0 %v3232
    %3250 = vmatmul.f32.gmra.mxu0 %v3230
    %v3251 = vpop.f32.mrf.mxu0
    %v3252 = vadd.f32 0.0, %v3251
    %3253 = vdwg.mxu0
    %v3254 = vsel %vm170, %v3224, -inf
    %3255 = vmax.xlane.f32.xlu0 %v3254
    %v3256 = vpop.xlane.xlu0 %3255
    %v3257 = vsel %vm170, %v3252, -inf
    %3258 = vmax.xlane.f32.xlu0 %v3257
    %v3259 = vpop.xlane.xlu0 %3258
    %v3260 = vsub.f32 %v3224, %v3256
    %v3261 = vsub.f32 %v3252, %v3259
    %v3262 = vmul.f32 %v3260, 1.442695
    %v3263 = vpow.pop %v3262
    %v3264 = vmul.f32 %v3261, 1.442695
    %v3265 = vpow.pop %v3264
    %v3266 = vsel %vm170, %v3263, 0.0
    %3267 = vadd.xlane.f32.xlu0 %v3266
    %v3268 = vpop.xlane.xlu0 %3267
    %v3269 = vsel %vm170, %v3265, 0.0
    %3270 = vadd.xlane.f32.xlu0 %v3269
    %v3271 = vpop.xlane.xlu0 %3270
    %v3272 = vrcp.pop %v3268
    %v3273 = vrcp.pop %v3271
    %v3274 = vmul.f32 %v3263, %v3272
    %v3275 = vmul.f32 %v3265, %v3273
    %3276 = vrot.lane.b32.xlu0 %v2708, 72
    %v3277 = vpop.permute.xlu0 %3276
    %v3280 = vsel %vm170, %v3274, 0
    %3282 = vmatpush.msra.mxu0 0.0
    %3283 = vmatpush.msra.mxu0 0.0
    %3284 = vmatpush.msra.mxu0 0.0
    %3285 = vmatpush.msra.mxu0 0.0
    %3286 = vmatpush.msra.mxu0 0.0
    %3287 = vmatpush.msra.mxu0 0.0
    %3288 = vmatpush.msra.mxu0 0.0
    %3289 = vmatpush.msra.mxu0 0.0
    %3290 = vmatpush.msra.mxu0 0.0
    %3291 = vmatpush.msra.mxu0 0.0
    %3292 = vmatpush.msra.mxu0 0.0
    %3293 = vmatpush.msra.mxu0 0.0
    %3294 = vmatpush.msra.mxu0 0.0
    %3295 = vmatpush.msra.mxu0 0.0
    %3296 = vmatpush.msra.mxu0 0.0
    %3297 = vmatpush.msra.mxu0 %v3277
    %3298 = vmatmul.f32.gmra.mxu0 %v3280
    %v3299 = vpop.f32.mrf.mxu0
    %v3300 = vadd.f32 0.0, %v3299
    %3301 = vdwg.mxu0
    %3302 = vrot.lane.b32.xlu0 %v2709, 72
    %v3303 = vpop.permute.xlu0 %3302
    %v3306 = vsel %vm170, %v3275, 0
    %3308 = vmatpush.msra.mxu0 0.0
    %3309 = vmatpush.msra.mxu0 0.0
    %3310 = vmatpush.msra.mxu0 0.0
    %3311 = vmatpush.msra.mxu0 0.0
    %3312 = vmatpush.msra.mxu0 0.0
    %3313 = vmatpush.msra.mxu0 0.0
    %3314 = vmatpush.msra.mxu0 0.0
    %3315 = vmatpush.msra.mxu0 0.0
    %3316 = vmatpush.msra.mxu0 0.0
    %3317 = vmatpush.msra.mxu0 0.0
    %3318 = vmatpush.msra.mxu0 0.0
    %3319 = vmatpush.msra.mxu0 0.0
    %3320 = vmatpush.msra.mxu0 0.0
    %3321 = vmatpush.msra.mxu0 0.0
    %3322 = vmatpush.msra.mxu0 0.0
    %3323 = vmatpush.msra.mxu0 %v3303
    %3324 = vmatmul.f32.gmra.mxu0 %v3306
    %v3325 = vpop.f32.mrf.mxu0
    %v3326 = vadd.f32 0.0, %v3325
    %3327 = vdwg.mxu0
    %3328 = vrot.lane.b32.xlu0 %v2621, 32
    %v3329 = vpop.permute.xlu0 %3328
    %v3332 = vsel %vm170, %v3300, 0
    %v3335 = vsel %vm170, %v3326, 0
    %3337 = vmatpush.msra.mxu0 0.0
    %3338 = vmatpush.msra.mxu0 0.0
    %3339 = vmatpush.msra.mxu0 0.0
    %3340 = vmatpush.msra.mxu0 0.0
    %3341 = vmatpush.msra.mxu0 0.0
    %3342 = vmatpush.msra.mxu0 0.0
    %3343 = vmatpush.msra.mxu0 0.0
    %3344 = vmatpush.msra.mxu0 0.0
    %3345 = vmatpush.msra.mxu0 0.0
    %3346 = vmatpush.msra.mxu0 0.0
    %3347 = vmatpush.msra.mxu0 0.0
    %3348 = vmatpush.msra.mxu0 0.0
    %3349 = vmatpush.msra.mxu0 0.0
    %3350 = vmatpush.msra.mxu0 0.0
    %3351 = vmatpush.msra.mxu0 0.0
    %3352 = vmatpush.msra.mxu0 %v3329
    %3353 = vmatmul.f32.gmra.mxu0 %v3332
    %v3354 = vpop.f32.mrf.mxu0
    %v3355 = vadd.f32 0.0, %v3354
    %3356 = vmatmul.f32.gmra.mxu0 %v3335
    %v3357 = vpop.f32.mrf.mxu0
    %v3358 = vadd.f32 0.0, %v3357
    %3359 = vdwg.mxu0
    %v3360 = vadd.f32 %v3196, %v3355
    %v3361 = vadd.f32 %v3197, %v3358
    %v3362 = vld [vmem:[%s1824 + $0x7] sm:$0x1]
    %v3363 = vperm.slane %v3362, 0
    %v3364 = vadd.f32 %v3360, %v3363
    %v3365 = vadd.f32 %v3361, %v3363
    %v3366 = vadd.f32 %v3364, %v2615
    %v3367 = vadd.f32 %v3365, %v2616
    %v3368 = vsel %vm81, %v3366, 0.0
    %3369 = vadd.xlane.f32.xlu0 %v3368
    %v3370 = vpop.xlane.xlu0 %3369
    %v3371 = vsel %vm81, %v3367, 0.0
    %3372 = vadd.xlane.f32.xlu0 %v3371
    %v3373 = vpop.xlane.xlu0 %3372
    %v3374 = vmul.f32 %v3370, %v839
    %v3375 = vmul.f32 %v3373, %v839
    %v3376 = vsub.f32 %v3366, %v3374
    %v3377 = vsub.f32 %v3367, %v3375
    %v3378 = vmul.f32 %v3376, %v3376
    %v3379 = vmul.f32 %v3377, %v3377
    %v3380 = vsel %vm81, %v3378, 0.0
    %3381 = vadd.xlane.f32.xlu0 %v3380
    %v3382 = vpop.xlane.xlu0 %3381
    %v3383 = vsel %vm81, %v3379, 0.0
    %3384 = vadd.xlane.f32.xlu0 %v3383
    %v3385 = vpop.xlane.xlu0 %3384
    %v3386 = vmul.f32 %v3382, %v839
    %v3387 = vmul.f32 %v3385, %v839
    %v3388 = vadd.f32 %v3386, 1e-05
    %v3389 = vadd.f32 %v3387, 1e-05
    %v3390 = vrsqrt.pop %v3388
    %v3391 = vmul.f32 %v3390, %v3388
    %v3392 = vmul.f32 %v3391, %v3390
    %v3393 = vmul.f32 0.5, %v3392
    %v3394 = vsub.f32 1.5, %v3393
    %v3395 = vmul.f32 %v3390, %v3394
    %vm3396 = vweird.f32 %v3388
    %vm3397 = vweird.f32 %v3390
    %vm3398 = vmor %vm3396, %vm3397
    %v3399 = vsel %vm3398, %v3390, %v3395
    %v3400 = vrsqrt.pop %v3389
    %v3401 = vmul.f32 %v3400, %v3389
    %v3402 = vmul.f32 %v3401, %v3400
    %v3403 = vmul.f32 0.5, %v3402
    %v3404 = vsub.f32 1.5, %v3403
    %v3405 = vmul.f32 %v3400, %v3404
    %vm3406 = vweird.f32 %v3389
    %vm3407 = vweird.f32 %v3400
    %vm3408 = vmor %vm3406, %vm3407
    %v3409 = vsel %vm3408, %v3400, %v3405
    %v3410 = vmul.f32 %v3376, %v3399
    %v3411 = vmul.f32 %v3377, %v3409
    %v3412 = vld [vmem:[%s1824 + $0xb] sm:$0x1]
    %v3413 = vperm.slane %v3412, 0
    %v3414 = vmul.f32 %v3410, %v3413
    %v3415 = vmul.f32 %v3411, %v3413
    %v3416 = vld [vmem:[%s1824 + $0xc] sm:$0x1]
    %v3417 = vperm.slane %v3416, 0
    %v3418 = vadd.f32 %v3414, %v3417
    %v3419 = vadd.f32 %v3415, %v3417
    %s3420 = scalar_lea.vmem %s3, 32
    %v3421 = vld [vmem:[%s3420] sm:$0xff]
    %v3422 = vld [vmem:[%s3420 + $0x8] sm:$0xff]
    %v3423 = vld [vmem:[%s3420 + $0x10] sm:$0xff]
    %v3424 = vld [vmem:[%s3420 + $0x18] sm:$0xff]
    %v3425 = vld [vmem:[%s1824 + $0xf] sm:$0x1]
    %v3426 = vperm.slane %v3425, 0
    %v3428 = vsel %vm81, %v3418, 0
    %v3431 = vsel %vm81, %v3419, 0
    %3433 = vmatpush.msra.mxu0 0.0
    %3434 = vmatpush.msra.mxu0 0.0
    %3435 = vmatpush.msra.mxu0 0.0
    %3436 = vmatpush.msra.mxu0 0.0
    %3437 = vmatpush.msra.mxu0 0.0
    %3438 = vmatpush.msra.mxu0 0.0
    %3439 = vmatpush.msra.mxu0 0.0
    %3440 = vmatpush.msra.mxu0 0.0
    %3441 = vmatpush.msra.mxu0 0.0
    %3442 = vmatpush.msra.mxu0 0.0
    %3443 = vmatpush.msra.mxu0 0.0
    %3444 = vmatpush.msra.mxu0 0.0
    %3445 = vmatpush.msra.mxu0 %v3424
    %3446 = vmatpush.msra.mxu0 %v3423
    %3447 = vmatpush.msra.mxu0 %v3422
    %3448 = vmatpush.msra.mxu0 %v3421
    %3449 = vmatmul.f32.gmra.mxu0 %v3428
    %v3450 = vpop.f32.mrf.mxu0
    %v3451 = vadd.f32 %v3426, %v3450
    %3452 = vmatmul.f32.gmra.mxu0 %v3431
    %v3453 = vpop.f32.mrf.mxu0
    %v3454 = vadd.f32 %v3426, %v3453
    %3455 = vdwg.mxu0
    %v3456 = vmax.f32 %v3451, 0.0
    %v3457 = vmax.f32 %v3454, 0.0
    %s3458 = scalar_lea.vmem %s4, 64
    %v3459 = vld [vmem:[%s3458] sm:$0xff]
    %v3460 = vld [vmem:[%s3458 + $0x8] sm:$0xff]
    %v3461 = vld [vmem:[%s3458 + $0x10] sm:$0xff]
    %v3462 = vld [vmem:[%s3458 + $0x18] sm:$0xff]
    %v3463 = vld [vmem:[%s3458 + $0x20] sm:$0xff]
    %v3464 = vld [vmem:[%s3458 + $0x28] sm:$0xff]
    %v3465 = vld [vmem:[%s3458 + $0x30] sm:$0xff]
    %v3466 = vld [vmem:[%s3458 + $0x38] sm:$0xff]
    %v3467 = vld [vmem:[%s1824 + $0x8] sm:$0x1]
    %v3468 = vperm.slane %v3467, 0
    %v3470 = vsel %vm1730, %v3456, 0
    %v3473 = vsel %vm1730, %v3457, 0
    %3475 = vmatpush.msra.mxu0 0.0
    %3476 = vmatpush.msra.mxu0 0.0
    %3477 = vmatpush.msra.mxu0 0.0
    %3478 = vmatpush.msra.mxu0 0.0
    %3479 = vmatpush.msra.mxu0 0.0
    %3480 = vmatpush.msra.mxu0 0.0
    %3481 = vmatpush.msra.mxu0 0.0
    %3482 = vmatpush.msra.mxu0 0.0
    %3483 = vmatpush.msra.mxu0 %v3466
    %3484 = vmatpush.msra.mxu0 %v3465
    %3485 = vmatpush.msra.mxu0 %v3464
    %3486 = vmatpush.msra.mxu0 %v3463
    %3487 = vmatpush.msra.mxu0 %v3462
    %3488 = vmatpush.msra.mxu0 %v3461
    %3489 = vmatpush.msra.mxu0 %v3460
    %3490 = vmatpush.msra.mxu0 %v3459
    %3491 = vmatmul.f32.gmra.mxu0 %v3470
    %v3492 = vpop.f32.mrf.mxu0
    %v3493 = vadd.f32 %v3468, %v3492
    %3494 = vmatmul.f32.gmra.mxu0 %v3473
    %v3495 = vpop.f32.mrf.mxu0
    %v3496 = vadd.f32 %v3468, %v3495
    %3497 = vdwg.mxu0
    %v3498 = vadd.f32 %v3493, %v3418
    %v3499 = vadd.f32 %v3496, %v3419
    %v3500 = vsel %vm81, %v3498, 0.0
    %3501 = vadd.xlane.f32.xlu0 %v3500
    %v3502 = vpop.xlane.xlu0 %3501
    %v3503 = vsel %vm81, %v3499, 0.0
    %3504 = vadd.xlane.f32.xlu0 %v3503
    %v3505 = vpop.xlane.xlu0 %3504
    %v3506 = vmul.f32 %v3502, %v839
    %v3507 = vmul.f32 %v3505, %v839
    %v3508 = vsub.f32 %v3498, %v3506
    %v3509 = vsub.f32 %v3499, %v3507
    %v3510 = vmul.f32 %v3508, %v3508
    %v3511 = vmul.f32 %v3509, %v3509
    %v3512 = vsel %vm81, %v3510, 0.0
    %3513 = vadd.xlane.f32.xlu0 %v3512
    %v3514 = vpop.xlane.xlu0 %3513
    %v3515 = vsel %vm81, %v3511, 0.0
    %3516 = vadd.xlane.f32.xlu0 %v3515
    %v3517 = vpop.xlane.xlu0 %3516
    %v3518 = vmul.f32 %v3514, %v839
    %v3519 = vmul.f32 %v3517, %v839
    %v3520 = vadd.f32 %v3518, 1e-05
    %v3521 = vadd.f32 %v3519, 1e-05
    %v3522 = vrsqrt.pop %v3520
    %v3523 = vmul.f32 %v3522, %v3520
    %v3524 = vmul.f32 %v3523, %v3522
    %v3525 = vmul.f32 0.5, %v3524
    %v3526 = vsub.f32 1.5, %v3525
    %v3527 = vmul.f32 %v3522, %v3526
    %vm3528 = vweird.f32 %v3520
    %vm3529 = vweird.f32 %v3522
    %vm3530 = vmor %vm3528, %vm3529
    %v3531 = vsel %vm3530, %v3522, %v3527
    %v3532 = vrsqrt.pop %v3521
    %v3533 = vmul.f32 %v3532, %v3521
    %v3534 = vmul.f32 %v3533, %v3532
    %v3535 = vmul.f32 0.5, %v3534
    %v3536 = vsub.f32 1.5, %v3535
    %v3537 = vmul.f32 %v3532, %v3536
    %vm3538 = vweird.f32 %v3521
    %vm3539 = vweird.f32 %v3532
    %vm3540 = vmor %vm3538, %vm3539
    %v3541 = vsel %vm3540, %v3532, %v3537
    %v3542 = vmul.f32 %v3508, %v3531
    %v3543 = vmul.f32 %v3509, %v3541
    %v3544 = vld [vmem:[%s1824 + $0xd] sm:$0x1]
    %v3545 = vperm.slane %v3544, 0
    %v3546 = vmul.f32 %v3542, %v3545
    %v3547 = vmul.f32 %v3543, %v3545
    %v3548 = vld [vmem:[%s1824 + $0xe] sm:$0x1]
    %v3549 = vperm.slane %v3548, 0
    %v3550 = vadd.f32 %v3546, %v3549
    %v3551 = vadd.f32 %v3547, %v3549
    %s3552 = scalar_lea.vmem [#allocation8], 16
    %3553 = vst.msk [vmem:[%s3552] sm:$0xff] %vm81, %v3550
    %3554 = vst.msk [vmem:[%s3552 + $0x8] sm:$0xff] %vm81, %v3551
    // Predicated region
    $region38: #{transformer_decoder.1} parent=1 // pred_check
      _
    $region39: #{transformer_decoder.1} parent=1 // pred_check_branch
      %3556 = sbr.rel (0) target = $region41
    $region40: #{transformer_decoder.1} parent=1 // pred_region
      %3558 = vsyncadd [#allocation4], 0
      %s3559 = sshll.u32 [#allocation8], 4
      %s3560 = int_to_ptr.vmem [resolvable:$true] %s3559
      %s3561 = sshll.u32 %s6, 4
      %s3562 = int_to_ptr.hbm [resolvable:$true] %s3561
      %3567 = dma.vmem_to_hbm [thread:$0]  %s3560, 512, %s3562, [#allocation4], 128, 128, 8
    $region41: #{transformer_decoder.1} parent=1 // pred_fallthru
      _
    // Predicated region
    $region42: #{transformer_decoder.1} parent=1 // pred_check
      _
    $region43: #{transformer_decoder.1} parent=1 // pred_check_branch
      %3569 = sbr.rel (0) target = $region45
    $region44: #{transformer_decoder.1} parent=1 // pred_region
      %3571 = dma.done [#allocation4], 512
    $region45: #{transformer_decoder.1} parent=1 // pred_fallthru
      _
    %3572 = vsyncpa [#allocation3], 1
    %3573 = vsyncpa [#allocation6], 1
    %3574 = vsyncpa [#allocation4], 1

</llo_original>
